<compile_context>
chip_gen: v7x
topology: tpu7x:2x2x1
jax: 0.10.0
libtpu: 0.0.40
codegen_flags: <defaults>
</compile_context>

<pallas_src>
import jax
import jax.numpy as jnp
from jax.experimental import pallas as pl
from jax.experimental.pallas import tpu as pltpu

# Original (PyTorch) feature dimensions and their lane-aligned padded versions.
DIMS     = [3 * 18 * 6, 800, 800, 320, 1]      # [324, 800, 800, 320, 1]
DIMS_PAD = [384,        896, 896, 384, 128]
MAX_TB = 512                                    # max batch tile (sweep 256/384/512)


def _round_up(n, m):
    return ((n + m - 1) // m) * m


def _mlp_kernel(x_ref,
                w0_ref, b0_ref,
                w1_ref, b1_ref,
                w2_ref, b2_ref,
                w3_ref, b3_ref,
                o_ref):
    x = x_ref[...]                                                     # (tb, 384) bf16

    # Linear_input + ReLU   (Dropout_input == identity in eval mode)
    h = jnp.dot(x, w0_ref[...], preferred_element_type=jnp.float32)
    h = jnp.maximum(h + b0_ref[...], 0.0).astype(jnp.bfloat16)         # (tb, 896)

    # Linear0 + ReLU
    h = jnp.dot(h, w1_ref[...], preferred_element_type=jnp.float32)
    h = jnp.maximum(h + b1_ref[...], 0.0).astype(jnp.bfloat16)         # (tb, 896)

    # Linear1 + ReLU
    h = jnp.dot(h, w2_ref[...], preferred_element_type=jnp.float32)
    h = jnp.maximum(h + b2_ref[...], 0.0).astype(jnp.bfloat16)         # (tb, 384)

    # Linear_output + ReLU ('Activation_ouput' in the PyTorch model)
    out = jnp.dot(h, w3_ref[...], preferred_element_type=jnp.float32)
    o_ref[...] = jnp.maximum(out + b3_ref[...], 0.0)                   # (tb, 128) f32


def _resident_spec(shape):
    """Weight/bias spec: constant index_map keeps the block VMEM-resident.

    Since the block is fetched exactly once, request single buffering (saves
    ~3 MB VMEM vs the default double buffer). Falls back to the default spec
    if pipeline_mode / Buffered is unavailable in this JAX version.
    """
    try:
        return pl.BlockSpec(shape, lambda i: (0, 0),
                            pipeline_mode=pl.Buffered(1))
    except (TypeError, AttributeError):
        return pl.BlockSpec(shape, lambda i: (0, 0))


def rubiks_forward(x_int, padded_params, max_tb=MAX_TB):
    """x_int: int32 cube-state indices, shape (B, 3, 18), values in [0, 6)."""
    B = x_int.shape[0]

    # Adaptive batch tile: multiple of 16 (bf16 sublane packing), capped at
    # max_tb, and never larger than needed for tiny batches.
    tb = min(max_tb, _round_up(max(B, 1), 16))
    b_pad = _round_up(B, tb)

    x_flat = x_int.reshape(B, 54)

    # One-hot encoding: feats[b, 6*i + c] = (x_flat[b, i] == c)  (matches
    # torch: ident[x].view(-1, 324)).  Exact in bf16 (values are 0/1).
    onehot = (x_flat[:, :, None] == jnp.arange(6, dtype=x_flat.dtype))
    onehot = onehot.astype(jnp.bfloat16).reshape(B, DIMS[0])

    # Single pad op for both the batch tail and the 324->384 feature pad.
    feats = jnp.pad(onehot, ((0, b_pad - B), (0, DIMS_PAD[0] - DIMS[0])))

    flat = []
    for W, b in padded_params:
        flat += [W, b]

    # Batch-tiled x / out; weights & biases are VMEM-resident (and
    # single-buffered) across grid iterations — no re-DMA.
    in_specs = [pl.BlockSpec((tb, DIMS_PAD[0]), lambda i: (i, 0))]
    in_specs += [_resident_spec(p.shape) for p in flat]

    out = pl.pallas_call(
        _mlp_kernel,
        out_shape=jax.ShapeDtypeStruct((b_pad, DIMS_PAD[-1]), jnp.float32),
        grid=(b_pad // tb,),
        in_specs=in_specs,
        out_specs=pl.BlockSpec((tb, DIMS_PAD[-1]), lambda i: (i, 0)),
        compiler_params=pltpu.CompilerParams(
            dimension_semantics=("parallel",),
        ),
    )(feats, *flat)

    return out[:B, :1]


def init_params(key):
    """PyTorch-style uniform(-1/sqrt(fan_in), 1/sqrt(fan_in)) init (f32, unpadded)."""
    params = []
    for fan_in, fan_out in zip(DIMS[:-1], DIMS[1:]):
        key, kw, kb = jax.random.split(key, 3)
        bound = 1.0 / (fan_in ** 0.5)
        W = jax.random.uniform(kw, (fan_in, fan_out), jnp.float32, -bound, bound)
        b = jax.random.uniform(kb, (1, fan_out), jnp.float32, -bound, bound)
        params.append((W, b))
    return params


def pad_params(params):
    """Zero-pad weights/biases to lane-aligned shapes; weights in bf16, biases f32."""
    padded = []
    for li, (W, b) in enumerate(params):
        ip, op = DIMS_PAD[li], DIMS_PAD[li + 1]
        Wp = jnp.zeros((ip, op), jnp.bfloat16).at[:W.shape[0], :W.shape[1]].set(
            W.astype(jnp.bfloat16))
        bp = jnp.zeros((1, op), jnp.float32).at[:, :b.shape[1]].set(b)
        padded.append((Wp, bp))
    return padded


def ref_forward(x_int, params):
    """Pure-JAX reference mirroring the kernel's precision (bf16 MXU, f32 accum)."""
    B = x_int.shape[0]
    x_flat = x_int.reshape(B, 54)
    feats = (x_flat[:, :, None] == jnp.arange(6, dtype=x_flat.dtype)).reshape(B, DIMS[0])
    h = feats.astype(jnp.bfloat16)
    n = len(params)
    for li, (W, b) in enumerate(params):
        z = jnp.dot(h, W.astype(jnp.bfloat16), preferred_element_type=jnp.float32) + b
        a = jnp.maximum(z, 0.0)
        h = a if li == n - 1 else a.astype(jnp.bfloat16)
    return h


if __name__ == "__main__":
    key = jax.random.PRNGKey(0)
    key, k_params, k_x = jax.random.split(key, 3)

    params = init_params(k_params)
    padded = pad_params(params)

    fwd = jax.jit(rubiks_forward, static_argnames="max_tb")

    # Small example: batch=8 cube states, each (3, 18) sticker indices in [0, 6).
    # Adaptive tiling gives tb=16, grid=(1,).
    B = 8
    x = jax.random.randint(k_x, (B, 3, 18), minval=0, maxval=6, dtype=jnp.int32)
    y = fwd(x, padded)
    jax.block_until_ready(y)
    y_ref = ref_forward(x, params)
    assert y.shape == (B, 1)
    assert jnp.allclose(y, y_ref, atol=2e-3, rtol=2e-3), float(jnp.max(jnp.abs(y - y_ref)))

    # Exercise the multi-tile path (grid > 1, padded batch tail) with a small
    # tile override: B=100, tb=64 -> b_pad=128, grid=(2,).
    key, k_x2 = jax.random.split(key)
    B2 = 100
    x2 = jax.random.randint(k_x2, (B2, 3, 18), minval=0, maxval=6, dtype=jnp.int32)
    y2 = fwd(x2, padded, max_tb=64)
    jax.block_until_ready(y2)
    y2_ref = ref_forward(x2, params)
    assert y2.shape == (B2, 1)
    assert jnp.allclose(y2, y2_ref, atol=2e-3, rtol=2e-3), float(jnp.max(jnp.abs(y2 - y2_ref)))

    print("KERNEL_OK")
</pallas_src>

<mosaic_0001>
module attributes {stable_mosaic.version = 11 : i64} {
  func.func @_mlp_kernel(%arg0: i32, %arg1: memref<16x384xbf16, #tpu.memory_space<vmem>>, %arg2: memref<384x896xbf16, #tpu.memory_space<vmem>>, %arg3: memref<1x896xf32, #tpu.memory_space<vmem>>, %arg4: memref<896x896xbf16, #tpu.memory_space<vmem>>, %arg5: memref<1x896xf32, #tpu.memory_space<vmem>>, %arg6: memref<896x384xbf16, #tpu.memory_space<vmem>>, %arg7: memref<1x384xf32, #tpu.memory_space<vmem>>, %arg8: memref<384x128xbf16, #tpu.memory_space<vmem>>, %arg9: memref<1x128xf32, #tpu.memory_space<vmem>>, %arg10: memref<16x128xf32, #tpu.memory_space<vmem>>) attributes {dimension_semantics = [#tpu.dimension_semantics<parallel>], iteration_bounds = array<i64: 1>, scalar_prefetch = 0 : i64, scratch_operands = 0 : i64, tpu.core_type = #tpu.core_type<tc>, window_params = [{transform_indices = @transform_0, window_bounds = array<i64: 16, 384>}, {pipeline_mode = #tpu.pipeline_mode<synchronous>, transform_indices = @transform_1, window_bounds = array<i64: 384, 896>}, {pipeline_mode = #tpu.pipeline_mode<synchronous>, transform_indices = @transform_2, window_bounds = array<i64: 1, 896>}, {pipeline_mode = #tpu.pipeline_mode<synchronous>, transform_indices = @transform_3, window_bounds = array<i64: 896, 896>}, {pipeline_mode = #tpu.pipeline_mode<synchronous>, transform_indices = @transform_4, window_bounds = array<i64: 1, 896>}, {pipeline_mode = #tpu.pipeline_mode<synchronous>, transform_indices = @transform_5, window_bounds = array<i64: 896, 384>}, {pipeline_mode = #tpu.pipeline_mode<synchronous>, transform_indices = @transform_6, window_bounds = array<i64: 1, 384>}, {pipeline_mode = #tpu.pipeline_mode<synchronous>, transform_indices = @transform_7, window_bounds = array<i64: 384, 128>}, {pipeline_mode = #tpu.pipeline_mode<synchronous>, transform_indices = @transform_8, window_bounds = array<i64: 1, 128>}, {transform_indices = @transform_9, window_bounds = array<i64: 16, 128>}]} {
    %c0 = arith.constant 0 : index
    %c0_0 = arith.constant 0 : index
    %0 = vector.load %arg1[%c0, %c0_0] : memref<16x384xbf16, #tpu.memory_space<vmem>>, vector<16x384xbf16>
    %c0_1 = arith.constant 0 : index
    %c0_2 = arith.constant 0 : index
    %1 = vector.load %arg2[%c0_1, %c0_2] : memref<384x896xbf16, #tpu.memory_space<vmem>>, vector<384x896xbf16>
    %cst = arith.constant dense<0.000000e+00> : vector<16x896xf32>
    %2 = tpu.matmul %0, %1, %cst {dimension_numbers = #tpu.dot_dimension_numbers<[1], [0], [0], [1], [0, 0, 1, 1], [], []>} : vector<16x384xbf16>, vector<384x896xbf16>, vector<16x896xf32> -> vector<16x896xf32>
    %c0_3 = arith.constant 0 : index
    %c0_4 = arith.constant 0 : index
    %3 = vector.load %arg3[%c0_3, %c0_4] : memref<1x896xf32, #tpu.memory_space<vmem>>, vector<1x896xf32>
    %4 = vector.broadcast %3 : vector<1x896xf32> to vector<16x896xf32>
    %5 = arith.addf %2, %4 : vector<16x896xf32>
    %cst_5 = arith.constant 0.000000e+00 : f32
    %6 = vector.broadcast %cst_5 : f32 to vector<16x896xf32>
    %7 = arith.maximumf %5, %6 : vector<16x896xf32>
    %8 = arith.truncf %7 : vector<16x896xf32> to vector<16x896xbf16>
    %c0_6 = arith.constant 0 : index
    %c0_7 = arith.constant 0 : index
    %9 = vector.load %arg4[%c0_6, %c0_7] : memref<896x896xbf16, #tpu.memory_space<vmem>>, vector<896x896xbf16>
    %cst_8 = arith.constant dense<0.000000e+00> : vector<16x896xf32>
    %10 = tpu.matmul %8, %9, %cst_8 {dimension_numbers = #tpu.dot_dimension_numbers<[1], [0], [0], [1], [0, 0, 1, 1], [], []>} : vector<16x896xbf16>, vector<896x896xbf16>, vector<16x896xf32> -> vector<16x896xf32>
    %c0_9 = arith.constant 0 : index
    %c0_10 = arith.constant 0 : index
    %11 = vector.load %arg5[%c0_9, %c0_10] : memref<1x896xf32, #tpu.memory_space<vmem>>, vector<1x896xf32>
    %12 = vector.broadcast %11 : vector<1x896xf32> to vector<16x896xf32>
    %13 = arith.addf %10, %12 : vector<16x896xf32>
    %cst_11 = arith.constant 0.000000e+00 : f32
    %14 = vector.broadcast %cst_11 : f32 to vector<16x896xf32>
    %15 = arith.maximumf %13, %14 : vector<16x896xf32>
    %16 = arith.truncf %15 : vector<16x896xf32> to vector<16x896xbf16>
    %c0_12 = arith.constant 0 : index
    %c0_13 = arith.constant 0 : index
    %17 = vector.load %arg6[%c0_12, %c0_13] : memref<896x384xbf16, #tpu.memory_space<vmem>>, vector<896x384xbf16>
    %cst_14 = arith.constant dense<0.000000e+00> : vector<16x384xf32>
    %18 = tpu.matmul %16, %17, %cst_14 {dimension_numbers = #tpu.dot_dimension_numbers<[1], [0], [0], [1], [0, 0, 1, 1], [], []>} : vector<16x896xbf16>, vector<896x384xbf16>, vector<16x384xf32> -> vector<16x384xf32>
    %c0_15 = arith.constant 0 : index
    %c0_16 = arith.constant 0 : index
    %19 = vector.load %arg7[%c0_15, %c0_16] : memref<1x384xf32, #tpu.memory_space<vmem>>, vector<1x384xf32>
    %20 = vector.broadcast %19 : vector<1x384xf32> to vector<16x384xf32>
    %21 = arith.addf %18, %20 : vector<16x384xf32>
    %cst_17 = arith.constant 0.000000e+00 : f32
    %22 = vector.broadcast %cst_17 : f32 to vector<16x384xf32>
    %23 = arith.maximumf %21, %22 : vector<16x384xf32>
    %24 = arith.truncf %23 : vector<16x384xf32> to vector<16x384xbf16>
    %c0_18 = arith.constant 0 : index
    %c0_19 = arith.constant 0 : index
    %25 = vector.load %arg8[%c0_18, %c0_19] : memref<384x128xbf16, #tpu.memory_space<vmem>>, vector<384x128xbf16>
    %cst_20 = arith.constant dense<0.000000e+00> : vector<16x128xf32>
    %26 = tpu.matmul %24, %25, %cst_20 {dimension_numbers = #tpu.dot_dimension_numbers<[1], [0], [0], [1], [0, 0, 1, 1], [], []>} : vector<16x384xbf16>, vector<384x128xbf16>, vector<16x128xf32> -> vector<16x128xf32>
    %c0_21 = arith.constant 0 : index
    %c0_22 = arith.constant 0 : index
    %27 = vector.load %arg9[%c0_21, %c0_22] : memref<1x128xf32, #tpu.memory_space<vmem>>, vector<1x128xf32>
    %28 = vector.broadcast %27 : vector<1x128xf32> to vector<16x128xf32>
    %29 = arith.addf %26, %28 : vector<16x128xf32>
    %cst_23 = arith.constant 0.000000e+00 : f32
    %30 = vector.broadcast %cst_23 : f32 to vector<16x128xf32>
    %31 = arith.maximumf %29, %30 : vector<16x128xf32>
    %c0_24 = arith.constant 0 : index
    %c0_25 = arith.constant 0 : index
    %32 = vector.load %arg10[%c0_24, %c0_25] : memref<16x128xf32, #tpu.memory_space<vmem>>, vector<16x128xf32>
    tpu.vector_store %arg10[%c0_24, %c0_25], %31 {strides = array<i32>} : memref<16x128xf32, #tpu.memory_space<vmem>>, vector<16x128xf32>,
    return
  }
  func.func @transform_0(%arg0: i32) -> (i32, i32) {
    %c0_i32 = arith.constant 0 : i32
    %c0_i32_0 = arith.constant 0 : i32
    return %arg0, %c0_i32 : i32, i32
  }
  func.func @transform_1(%arg0: i32) -> (i32, i32) {
    %c0_i32 = arith.constant 0 : i32
    %c0_i32_0 = arith.constant 0 : i32
    %c0_i32_1 = arith.constant 0 : i32
    return %c0_i32, %c0_i32_0 : i32, i32
  }
  func.func @transform_2(%arg0: i32) -> (i32, i32) {
    %c0_i32 = arith.constant 0 : i32
    %c0_i32_0 = arith.constant 0 : i32
    %c0_i32_1 = arith.constant 0 : i32
    return %c0_i32, %c0_i32_0 : i32, i32
  }
  func.func @transform_3(%arg0: i32) -> (i32, i32) {
    %c0_i32 = arith.constant 0 : i32
    %c0_i32_0 = arith.constant 0 : i32
    %c0_i32_1 = arith.constant 0 : i32
    return %c0_i32, %c0_i32_0 : i32, i32
  }
  func.func @transform_4(%arg0: i32) -> (i32, i32) {
    %c0_i32 = arith.constant 0 : i32
    %c0_i32_0 = arith.constant 0 : i32
    %c0_i32_1 = arith.constant 0 : i32
    return %c0_i32, %c0_i32_0 : i32, i32
  }
  func.func @transform_5(%arg0: i32) -> (i32, i32) {
    %c0_i32 = arith.constant 0 : i32
    %c0_i32_0 = arith.constant 0 : i32
    %c0_i32_1 = arith.constant 0 : i32
    return %c0_i32, %c0_i32_0 : i32, i32
  }
  func.func @transform_6(%arg0: i32) -> (i32, i32) {
    %c0_i32 = arith.constant 0 : i32
    %c0_i32_0 = arith.constant 0 : i32
    %c0_i32_1 = arith.constant 0 : i32
    return %c0_i32, %c0_i32_0 : i32, i32
  }
  func.func @transform_7(%arg0: i32) -> (i32, i32) {
    %c0_i32 = arith.constant 0 : i32
    %c0_i32_0 = arith.constant 0 : i32
    %c0_i32_1 = arith.constant 0 : i32
    return %c0_i32, %c0_i32_0 : i32, i32
  }
  func.func @transform_8(%arg0: i32) -> (i32, i32) {
    %c0_i32 = arith.constant 0 : i32
    %c0_i32_0 = arith.constant 0 : i32
    %c0_i32_1 = arith.constant 0 : i32
    return %c0_i32, %c0_i32_0 : i32, i32
  }
  func.func @transform_9(%arg0: i32) -> (i32, i32) {
    %c0_i32 = arith.constant 0 : i32
    %c0_i32_0 = arith.constant 0 : i32
    return %arg0, %c0_i32 : i32, i32
  }
}

</mosaic_0001>

<llo_original>
// kernel: eq.8
$region0: #{eq.8}
  %s0 = inlined_call_operand.vmem [shape: s32[8,3,18], index: 0, kind: input, shape index: {}]
  %s1 = inlined_call_operand.vmem [shape: s32[8,54], index: 1, kind: output, shape index: {}]
  $region1: #{eq.8} parent=0
    #allocation0 [shape = 'u8[32768]{0}', space=vmem, size = 0x8000, scoped, tag = 'scoped mem for input reshape']
    %s3 = sshllo.u32 0, 4
    %s4 = smul.addr 4, 7
    %s5 = scalar_lea.vmem %s0, %s4
    %v6 = vld [vmem:[%s5] sm:%s3]
    %s7 = scalar_lea.vmem [#allocation0], 56
    %8 = vst [vmem:[%s7] sm:%s3] %v6
    %s9 = smul.addr 4, 6
    %s10 = scalar_lea.vmem %s0, %s9
    %v11 = vld [vmem:[%s10] sm:%s3]
    %s12 = scalar_lea.vmem [#allocation0], 48
    %13 = vst [vmem:[%s12] sm:%s3] %v11
    %s14 = smul.addr 4, 5
    %s15 = scalar_lea.vmem %s0, %s14
    %v16 = vld [vmem:[%s15] sm:%s3]
    %s17 = scalar_lea.vmem [#allocation0], 40
    %18 = vst [vmem:[%s17] sm:%s3] %v16
    %s19 = smul.addr 4, 4
    %s20 = scalar_lea.vmem %s0, %s19
    %v21 = vld [vmem:[%s20] sm:%s3]
    %s22 = scalar_lea.vmem [#allocation0], 32
    %23 = vst [vmem:[%s22] sm:%s3] %v21
    %s24 = smul.addr 4, 3
    %s25 = scalar_lea.vmem %s0, %s24
    %v26 = vld [vmem:[%s25] sm:%s3]
    %s27 = scalar_lea.vmem [#allocation0], 24
    %28 = vst [vmem:[%s27] sm:%s3] %v26
    %s29 = smul.addr 4, 2
    %s30 = scalar_lea.vmem %s0, %s29
    %v31 = vld [vmem:[%s30] sm:%s3]
    %s32 = scalar_lea.vmem [#allocation0], 16
    %33 = vst [vmem:[%s32] sm:%s3] %v31
    %s34 = scalar_lea.vmem %s0, 4
    %v35 = vld [vmem:[%s34] sm:%s3]
    %s36 = scalar_lea.vmem [#allocation0], 8
    %37 = vst [vmem:[%s36] sm:%s3] %v35
    %v38 = vld [vmem:[%s0] sm:%s3]
    %39 = vst [vmem:[#allocation0] sm:%s3] %v38
    %v40 = vld [vmem:[#allocation0] ss:$8 sm:$0xf]
    %v41 = vld [vmem:[#allocation0] ss:$8 sm:$0xf0]
    %vm42 = vcmask 1047556
    %v43 = vsel %vm42, %v41, %v40
    %vm44 = vcmask 146432
    %45 = vst.msk [vmem:[%s1] sm:$0xff] %vm44, %v43
    %s46 = scalar_lea.vmem [#allocation0], 2
    %v47 = vld [vmem:[%s46] ss:$8 sm:$0xf]
    %s48 = scalar_lea.vmem [#allocation0], 2
    %v49 = vld [vmem:[%s48] ss:$8 sm:$0xf0]
    %vm50 = vcmask 1047556
    %v51 = vsel %vm50, %v49, %v47
    %52 = vrot.lane.b32.xlu0 %v51, 36
    %v53 = vpop.permute.xlu0 %52
    %vm54 = vcmask 441632
    %55 = vst.msk [vmem:[%s1] sm:$0xff] %vm54, %v53
    %s56 = scalar_lea.vmem [#allocation0], 1
    %v57 = vld [vmem:[%s56] ss:$8 sm:$0xf]
    %s58 = scalar_lea.vmem [#allocation0], 1
    %v59 = vld [vmem:[%s58] ss:$8 sm:$0xf0]
    %vm60 = vcmask 1047556
    %v61 = vsel %vm60, %v59, %v57
    %62 = vrot.lane.b32.xlu0 %v61, 18
    %v63 = vpop.permute.xlu0 %62
    %vm64 = vcmask 294032
    %65 = vst.msk [vmem:[%s1] sm:$0xff] %vm64, %v63

// kernel: rubiks_forward.1
$region0: #{rubiks_forward.1}
  #allocation0 [shape = 'u32[]', space=smem, size = 0x4, offset = 0x4, fixed_abs, tag = 'smem constant byte address 0x4 - core index']
  #allocation1 [shape = 'u32[144,128]{1,0:T(1,128)}', space=vmem, size = 0x12000, scoped, tag = 'internal scratch']
  %s0 = inlined_call_operand.vmem [shape: bf16[16,384], index: 0, kind: input, shape index: {}]
  %s1 = inlined_call_operand.hbm [shape: bf16[384,896], index: 1, kind: input, shape index: {}]
  %s2 = inlined_call_operand.hbm [shape: f32[1,896], index: 2, kind: input, shape index: {}]
  %s3 = inlined_call_operand.hbm [shape: bf16[896,896], index: 3, kind: input, shape index: {}]
  %s4 = inlined_call_operand.hbm [shape: f32[1,896], index: 4, kind: input, shape index: {}]
  %s5 = inlined_call_operand.hbm [shape: bf16[896,384], index: 5, kind: input, shape index: {}]
  %s6 = inlined_call_operand.hbm [shape: f32[1,384], index: 6, kind: input, shape index: {}]
  %s7 = inlined_call_operand.hbm [shape: bf16[384,128], index: 7, kind: input, shape index: {}]
  %s8 = inlined_call_operand.hbm [shape: f32[1,128], index: 8, kind: input, shape index: {}]
  %s9 = inlined_call_operand.vmem [shape: f32[16,128], index: 9, kind: output, shape index: {}]
  %s10 = sld [smem:[#allocation0]]
  $region78: #{rubiks_forward.1} parent=0
    _
  %s12 = ssub.s32 1, %s10
  %s13 = scalar_select 0, %s12, %s10
  $region1: #{rubiks_forward.1} parent=0
    #allocation2 [shape = 'u8[688128]{0}', space=vmem, size = 0xa8000, scoped, tag = 'input window, operand 1, single buffered']
    #allocation3 [shape = 's32[1]{0}', space=sflag, size = 0x4, scoped, tag = 'scoped memory for rubiks_forward.1']
    #allocation4 [shape = 'u8[3584]{0}', space=vmem, size = 0x1000, scoped, tag = 'input window, operand 2, single buffered']
    #allocation5 [shape = 's32[1]{0}', space=sflag, size = 0x4, scoped, tag = 'scoped memory for rubiks_forward.1']
    #allocation6 [shape = 'u8[1605632]{0}', space=vmem, size = 0x188000, scoped, tag = 'input window, operand 3, single buffered']
    #allocation7 [shape = 'u8[3584]{0}', space=vmem, size = 0x1000, scoped, tag = 'input window, operand 4, single buffered']
    #allocation8 [shape = 's32[1]{0}', space=sflag, size = 0x4, scoped, tag = 'scoped memory for rubiks_forward.1']
    #allocation9 [shape = 'u8[688128]{0}', space=vmem, size = 0xa8000, scoped, tag = 'input window, operand 5, single buffered']
    #allocation10 [shape = 'u8[1536]{0}', space=vmem, size = 0x800, scoped, tag = 'input window, operand 6, single buffered']
    #allocation11 [shape = 's32[1]{0}', space=sflag, size = 0x4, scoped, tag = 'scoped memory for rubiks_forward.1']
    #allocation12 [shape = 'u8[98304]{0}', space=vmem, size = 0x18000, scoped, tag = 'input window, operand 7, single buffered']
    #allocation13 [shape = 'u8[512]{0}', space=vmem, size = 0x400, scoped, tag = 'input window, operand 8, single buffered']
    #allocation14 [shape = 's32[1]{0}', space=sflag, size = 0x4, scoped, tag = 'scoped memory for rubiks_forward.1']
    %14 = vsyncpa [#allocation3], 0
    %15 = vsyncpa [#allocation5], 0
    %16 = vsyncpa [#allocation8], 0
    %17 = vsyncpa [#allocation11], 0
    %18 = vsyncpa [#allocation14], 0
    // Predicated region
    $region2: #{rubiks_forward.1} parent=1 // pred_check
      _
    $region3: #{rubiks_forward.1} parent=1 // pred_check_branch
      %20 = sbr.rel (0) target = $region5
    $region4: #{rubiks_forward.1} parent=1 // pred_region
      _
    $region5: #{rubiks_forward.1} parent=1 // pred_fallthru
      _
    // Predicated region
    $region6: #{rubiks_forward.1} parent=1 // pred_check
      _
    $region7: #{rubiks_forward.1} parent=1 // pred_check_branch
      %22 = sbr.rel (0) target = $region9
    $region8: #{rubiks_forward.1} parent=1 // pred_region
      %s24 = ssub.s32 21504, 21504
      %25 = vsyncadd [#allocation3], %s24
      %s26 = sshll.u32 [#allocation2], 4
      %s27 = int_to_ptr.vmem [resolvable:$true] %s26
      %32 = dma.hbm_to_vmem [thread:$0]  %s1, 21504, %s27, [#allocation3], 448, 448, 28
    $region9: #{rubiks_forward.1} parent=1 // pred_fallthru
      _
    // Predicated region
    $region10: #{rubiks_forward.1} parent=1 // pred_check
      _
    $region11: #{rubiks_forward.1} parent=1 // pred_check_branch
      %34 = sbr.rel (0) target = $region13
    $region12: #{rubiks_forward.1} parent=1 // pred_region
      %s36 = ssub.s32 112, 112
      %37 = vsyncadd [#allocation5], %s36
      %s39 = sshll.u32 [#allocation4], 4
      %s40 = int_to_ptr.vmem [resolvable:$true] %s39
      %42 = dma.hbm_to_vmem [thread:$0]  %s2, 112, %s40, [#allocation5]
    $region13: #{rubiks_forward.1} parent=1 // pred_fallthru
      _
    // Predicated region
    $region14: #{rubiks_forward.1} parent=1 // pred_check
      _
    $region15: #{rubiks_forward.1} parent=1 // pred_check_branch
      %44 = sbr.rel (0) target = $region17
    $region16: #{rubiks_forward.1} parent=1 // pred_region
      %s46 = ssub.s32 50176, 50176
      %47 = vsyncadd [#allocation5], %s46
      %s48 = sshll.u32 [#allocation6], 4
      %s49 = int_to_ptr.vmem [resolvable:$true] %s48
      %54 = dma.hbm_to_vmem [thread:$0]  %s3, 50176, %s49, [#allocation5], 448, 448, 28
    $region17: #{rubiks_forward.1} parent=1 // pred_fallthru
      _
    // Predicated region
    $region18: #{rubiks_forward.1} parent=1 // pred_check
      _
    $region19: #{rubiks_forward.1} parent=1 // pred_check_branch
      %56 = sbr.rel (0) target = $region21
    $region20: #{rubiks_forward.1} parent=1 // pred_region
      %s58 = ssub.s32 112, 112
      %59 = vsyncadd [#allocation8], %s58
      %s61 = sshll.u32 [#allocation7], 4
      %s62 = int_to_ptr.vmem [resolvable:$true] %s61
      %64 = dma.hbm_to_vmem [thread:$0]  %s4, 112, %s62, [#allocation8]
    $region21: #{rubiks_forward.1} parent=1 // pred_fallthru
      _
    // Predicated region
    $region22: #{rubiks_forward.1} parent=1 // pred_check
      _
    $region23: #{rubiks_forward.1} parent=1 // pred_check_branch
      %66 = sbr.rel (0) target = $region25
    $region24: #{rubiks_forward.1} parent=1 // pred_region
      %s68 = ssub.s32 21504, 21504
      %69 = vsyncadd [#allocation8], %s68
      %s70 = sshll.u32 [#allocation9], 4
      %s71 = int_to_ptr.vmem [resolvable:$true] %s70
      %76 = dma.hbm_to_vmem [thread:$0]  %s5, 21504, %s71, [#allocation8], 192, 192, 12
    $region25: #{rubiks_forward.1} parent=1 // pred_fallthru
      _
    // Predicated region
    $region26: #{rubiks_forward.1} parent=1 // pred_check
      _
    $region27: #{rubiks_forward.1} parent=1 // pred_check_branch
      %78 = sbr.rel (0) target = $region29
    $region28: #{rubiks_forward.1} parent=1 // pred_region
      %s80 = ssub.s32 48, 48
      %81 = vsyncadd [#allocation11], %s80
      %s83 = sshll.u32 [#allocation10], 4
      %s84 = int_to_ptr.vmem [resolvable:$true] %s83
      %86 = dma.hbm_to_vmem [thread:$0]  %s6, 48, %s84, [#allocation11]
    $region29: #{rubiks_forward.1} parent=1 // pred_fallthru
      _
    // Predicated region
    $region30: #{rubiks_forward.1} parent=1 // pred_check
      _
    $region31: #{rubiks_forward.1} parent=1 // pred_check_branch
      %88 = sbr.rel (0) target = $region33
    $region32: #{rubiks_forward.1} parent=1 // pred_region
      %s90 = ssub.s32 3072, 3072
      %91 = vsyncadd [#allocation11], %s90
      %s92 = sshll.u32 [#allocation12], 4
      %s93 = int_to_ptr.vmem [resolvable:$true] %s92
      %98 = dma.hbm_to_vmem [thread:$0]  %s7, 3072, %s93, [#allocation11], 64, 64, 4
    $region33: #{rubiks_forward.1} parent=1 // pred_fallthru
      _
    // Predicated region
    $region34: #{rubiks_forward.1} parent=1 // pred_check
      _
    $region35: #{rubiks_forward.1} parent=1 // pred_check_branch
      %100 = sbr.rel (0) target = $region37
    $region36: #{rubiks_forward.1} parent=1 // pred_region
      %s102 = ssub.s32 16, 16
      %103 = vsyncadd [#allocation14], %s102
      %s105 = sshll.u32 [#allocation13], 4
      %s106 = int_to_ptr.vmem [resolvable:$true] %s105
      %108 = dma.hbm_to_vmem [thread:$0]  %s8, 16, %s106, [#allocation14]
    $region37: #{rubiks_forward.1} parent=1 // pred_fallthru
      _
    // Predicated region
    $region38: #{rubiks_forward.1} parent=1 // pred_check
      _
    $region39: #{rubiks_forward.1} parent=1 // pred_check_branch
      %110 = sbr.rel (0) target = $region41
    $region40: #{rubiks_forward.1} parent=1 // pred_region
      %111 = dma.done [#allocation3], 21504
    $region41: #{rubiks_forward.1} parent=1 // pred_fallthru
      _
    // Predicated region
    $region42: #{rubiks_forward.1} parent=1 // pred_check
      _
    $region43: #{rubiks_forward.1} parent=1 // pred_check_branch
      %113 = sbr.rel (0) target = $region45
    $region44: #{rubiks_forward.1} parent=1 // pred_region
      %114 = dma.done [#allocation5], 112
    $region45: #{rubiks_forward.1} parent=1 // pred_fallthru
      _
    // Predicated region
    $region46: #{rubiks_forward.1} parent=1 // pred_check
      _
    $region47: #{rubiks_forward.1} parent=1 // pred_check_branch
      %116 = sbr.rel (0) target = $region49
    $region48: #{rubiks_forward.1} parent=1 // pred_region
      %117 = dma.done [#allocation5], 50176
    $region49: #{rubiks_forward.1} parent=1 // pred_fallthru
      _
    // Predicated region
    $region50: #{rubiks_forward.1} parent=1 // pred_check
      _
    $region51: #{rubiks_forward.1} parent=1 // pred_check_branch
      %119 = sbr.rel (0) target = $region53
    $region52: #{rubiks_forward.1} parent=1 // pred_region
      %120 = dma.done [#allocation8], 112
    $region53: #{rubiks_forward.1} parent=1 // pred_fallthru
      _
    // Predicated region
    $region54: #{rubiks_forward.1} parent=1 // pred_check
      _
    $region55: #{rubiks_forward.1} parent=1 // pred_check_branch
      %122 = sbr.rel (0) target = $region57
    $region56: #{rubiks_forward.1} parent=1 // pred_region
      %123 = dma.done [#allocation8], 21504
    $region57: #{rubiks_forward.1} parent=1 // pred_fallthru
      _
    // Predicated region
    $region58: #{rubiks_forward.1} parent=1 // pred_check
      _
    $region59: #{rubiks_forward.1} parent=1 // pred_check_branch
      %125 = sbr.rel (0) target = $region61
    $region60: #{rubiks_forward.1} parent=1 // pred_region
      %126 = dma.done [#allocation11], 48
    $region61: #{rubiks_forward.1} parent=1 // pred_fallthru
      _
    // Predicated region
    $region62: #{rubiks_forward.1} parent=1 // pred_check
      _
    $region63: #{rubiks_forward.1} parent=1 // pred_check_branch
      %128 = sbr.rel (0) target = $region65
    $region64: #{rubiks_forward.1} parent=1 // pred_region
      %129 = dma.done [#allocation11], 3072
    $region65: #{rubiks_forward.1} parent=1 // pred_fallthru
      _
    // Predicated region
    $region66: #{rubiks_forward.1} parent=1 // pred_check
      _
    $region67: #{rubiks_forward.1} parent=1 // pred_check_branch
      %131 = sbr.rel (0) target = $region69
    $region68: #{rubiks_forward.1} parent=1 // pred_region
      %132 = dma.done [#allocation14], 16
    $region69: #{rubiks_forward.1} parent=1 // pred_fallthru
      _
    %v134 = vld [vmem:[%s0] sm:$0xff]
    %v135 = vld [vmem:[%s0 + $0x8] sm:$0xf]
    %v136 = vld [vmem:[%s0 + $0xc] sm:$0xff]
    %v137 = vld [vmem:[%s0 + $0x14] sm:$0xf]
    %v138 = vld [vmem:[#allocation2] sm:$0xff]
    %v139 = vld [vmem:[#allocation2 + $0x8] sm:$0xff]
    %v140 = vld [vmem:[#allocation2 + $0x10] sm:$0xff]
    %v141 = vld [vmem:[#allocation2 + $0x18] sm:$0xf]
    %v142 = vld [vmem:[#allocation2 + $0x1c] sm:$0xff]
    %v143 = vld [vmem:[#allocation2 + $0x24] sm:$0xff]
    %v144 = vld [vmem:[#allocation2 + $0x2c] sm:$0xff]
    %v145 = vld [vmem:[#allocation2 + $0x34] sm:$0xf]
    %v146 = vld [vmem:[#allocation2 + $0x38] sm:$0xff]
    %v147 = vld [vmem:[#allocation2 + $0x40] sm:$0xff]
    %v148 = vld [vmem:[#allocation2 + $0x48] sm:$0xff]
    %v149 = vld [vmem:[#allocation2 + $0x50] sm:$0xf]
    %v150 = vld [vmem:[#allocation2 + $0x54] sm:$0xff]
    %v151 = vld [vmem:[#allocation2 + $0x5c] sm:$0xff]
    %v152 = vld [vmem:[#allocation2 + $0x64] sm:$0xff]
    %v153 = vld [vmem:[#allocation2 + $0x6c] sm:$0xf]
    %v154 = vld [vmem:[#allocation2 + $0x70] sm:$0xff]
    %v155 = vld [vmem:[#allocation2 + $0x78] sm:$0xff]
    %v156 = vld [vmem:[#allocation2 + $0x80] sm:$0xff]
    %v157 = vld [vmem:[#allocation2 + $0x88] sm:$0xf]
    %v158 = vld [vmem:[#allocation2 + $0x8c] sm:$0xff]
    %v159 = vld [vmem:[#allocation2 + $0x94] sm:$0xff]
    %v160 = vld [vmem:[#allocation2 + $0x9c] sm:$0xff]
    %v161 = vld [vmem:[#allocation2 + $0xa4] sm:$0xf]
    %v162 = vld [vmem:[#allocation2 + $0xa8] sm:$0xff]
    %v163 = vld [vmem:[#allocation2 + $0xb0] sm:$0xff]
    %v164 = vld [vmem:[#allocation2 + $0xb8] sm:$0xff]
    %v165 = vld [vmem:[#allocation2 + $0xc0] sm:$0xf]
    %v166 = vld [vmem:[#allocation2 + $0xc4] sm:$0xff]
    %v167 = vld [vmem:[#allocation2 + $0xcc] sm:$0xff]
    %v168 = vld [vmem:[#allocation2 + $0xd4] sm:$0xff]
    %v169 = vld [vmem:[#allocation2 + $0xdc] sm:$0xf]
    %v170 = vld [vmem:[#allocation2 + $0xe0] sm:$0xff]
    %v171 = vld [vmem:[#allocation2 + $0xe8] sm:$0xff]
    %v172 = vld [vmem:[#allocation2 + $0xf0] sm:$0xff]
    %v173 = vld [vmem:[#allocation2 + $0xf8] sm:$0xf]
    %v174 = vld [vmem:[#allocation2 + $0xfc] sm:$0xff]
    %v175 = vld [vmem:[#allocation2 + $0x104] sm:$0xff]
    %v176 = vld [vmem:[#allocation2 + $0x10c] sm:$0xff]
    %v177 = vld [vmem:[#allocation2 + $0x114] sm:$0xf]
    %v178 = vld [vmem:[#allocation2 + $0x118] sm:$0xff]
    %v179 = vld [vmem:[#allocation2 + $0x120] sm:$0xff]
    %v180 = vld [vmem:[#allocation2 + $0x128] sm:$0xff]
    %v181 = vld [vmem:[#allocation2 + $0x130] sm:$0xf]
    %v182 = vld [vmem:[#allocation2 + $0x134] sm:$0xff]
    %v183 = vld [vmem:[#allocation2 + $0x13c] sm:$0xff]
    %v184 = vld [vmem:[#allocation2 + $0x144] sm:$0xff]
    %v185 = vld [vmem:[#allocation2 + $0x14c] sm:$0xf]
    %v186 = vld [vmem:[#allocation2 + $0x150] sm:$0xff]
    %v187 = vld [vmem:[#allocation2 + $0x158] sm:$0xff]
    %v188 = vld [vmem:[#allocation2 + $0x160] sm:$0xff]
    %v189 = vld [vmem:[#allocation2 + $0x168] sm:$0xf]
    %v190 = vld [vmem:[#allocation2 + $0x16c] sm:$0xff]
    %v191 = vld [vmem:[#allocation2 + $0x174] sm:$0xff]
    %v192 = vld [vmem:[#allocation2 + $0x17c] sm:$0xff]
    %v193 = vld [vmem:[#allocation2 + $0x184] sm:$0xf]
    %v194 = vld [vmem:[#allocation2 + $0x188] sm:$0xff]
    %v195 = vld [vmem:[#allocation2 + $0x190] sm:$0xff]
    %v196 = vld [vmem:[#allocation2 + $0x198] sm:$0xff]
    %v197 = vld [vmem:[#allocation2 + $0x1a0] sm:$0xf]
    %v198 = vld [vmem:[#allocation2 + $0x1a4] sm:$0xff]
    %v199 = vld [vmem:[#allocation2 + $0x1ac] sm:$0xff]
    %v200 = vld [vmem:[#allocation2 + $0x1b4] sm:$0xff]
    %v201 = vld [vmem:[#allocation2 + $0x1bc] sm:$0xf]
    %v202 = vld [vmem:[#allocation2 + $0x1c0] sm:$0xff]
    %v203 = vld [vmem:[#allocation2 + $0x1c8] sm:$0xff]
    %v204 = vld [vmem:[#allocation2 + $0x1d0] sm:$0xff]
    %v205 = vld [vmem:[#allocation2 + $0x1d8] sm:$0xf]
    %v206 = vld [vmem:[#allocation2 + $0x1dc] sm:$0xff]
    %v207 = vld [vmem:[#allocation2 + $0x1e4] sm:$0xff]
    %v208 = vld [vmem:[#allocation2 + $0x1ec] sm:$0xff]
    %v209 = vld [vmem:[#allocation2 + $0x1f4] sm:$0xf]
    %v210 = vld [vmem:[#allocation2 + $0x1f8] sm:$0xff]
    %v211 = vld [vmem:[#allocation2 + $0x200] sm:$0xff]
    %v212 = vld [vmem:[#allocation2 + $0x208] sm:$0xff]
    %v213 = vld [vmem:[#allocation2 + $0x210] sm:$0xf]
    %v214 = vld [vmem:[#allocation2 + $0x214] sm:$0xff]
    %v215 = vld [vmem:[#allocation2 + $0x21c] sm:$0xff]
    %v216 = vld [vmem:[#allocation2 + $0x224] sm:$0xff]
    %v217 = vld [vmem:[#allocation2 + $0x22c] sm:$0xf]
    %v218 = vld [vmem:[#allocation2 + $0x230] sm:$0xff]
    %v219 = vld [vmem:[#allocation2 + $0x238] sm:$0xff]
    %v220 = vld [vmem:[#allocation2 + $0x240] sm:$0xff]
    %v221 = vld [vmem:[#allocation2 + $0x248] sm:$0xf]
    %v222 = vld [vmem:[#allocation2 + $0x24c] sm:$0xff]
    %v223 = vld [vmem:[#allocation2 + $0x254] sm:$0xff]
    %v224 = vld [vmem:[#allocation2 + $0x25c] sm:$0xff]
    %v225 = vld [vmem:[#allocation2 + $0x264] sm:$0xf]
    %v226 = vld [vmem:[#allocation2 + $0x268] sm:$0xff]
    %v227 = vld [vmem:[#allocation2 + $0x270] sm:$0xff]
    %v228 = vld [vmem:[#allocation2 + $0x278] sm:$0xff]
    %v229 = vld [vmem:[#allocation2 + $0x280] sm:$0xf]
    %v230 = vld [vmem:[#allocation2 + $0x284] sm:$0xff]
    %v231 = vld [vmem:[#allocation2 + $0x28c] sm:$0xff]
    %v232 = vld [vmem:[#allocation2 + $0x294] sm:$0xff]
    %v233 = vld [vmem:[#allocation2 + $0x29c] sm:$0xf]
    %v234 = vld [vmem:[#allocation2 + $0x2a0] sm:$0xff]
    %v235 = vld [vmem:[#allocation2 + $0x2a8] sm:$0xff]
    %v236 = vld [vmem:[#allocation2 + $0x2b0] sm:$0xff]
    %v237 = vld [vmem:[#allocation2 + $0x2b8] sm:$0xf]
    %v238 = vld [vmem:[#allocation2 + $0x2bc] sm:$0xff]
    %v239 = vld [vmem:[#allocation2 + $0x2c4] sm:$0xff]
    %v240 = vld [vmem:[#allocation2 + $0x2cc] sm:$0xff]
    %v241 = vld [vmem:[#allocation2 + $0x2d4] sm:$0xf]
    %v242 = vld [vmem:[#allocation2 + $0x2d8] sm:$0xff]
    %v243 = vld [vmem:[#allocation2 + $0x2e0] sm:$0xff]
    %v244 = vld [vmem:[#allocation2 + $0x2e8] sm:$0xff]
    %v245 = vld [vmem:[#allocation2 + $0x2f0] sm:$0xf]
    %v246 = vld [vmem:[#allocation2 + $0x2f4] sm:$0xff]
    %v247 = vld [vmem:[#allocation2 + $0x2fc] sm:$0xff]
    %v248 = vld [vmem:[#allocation2 + $0x304] sm:$0xff]
    %v249 = vld [vmem:[#allocation2 + $0x30c] sm:$0xf]
    %v250 = vld [vmem:[#allocation2 + $0x310] sm:$0xff]
    %v251 = vld [vmem:[#allocation2 + $0x318] sm:$0xff]
    %v252 = vld [vmem:[#allocation2 + $0x320] sm:$0xff]
    %v253 = vld [vmem:[#allocation2 + $0x328] sm:$0xf]
    %v254 = vld [vmem:[#allocation2 + $0x32c] sm:$0xff]
    %v255 = vld [vmem:[#allocation2 + $0x334] sm:$0xff]
    %v256 = vld [vmem:[#allocation2 + $0x33c] sm:$0xff]
    %v257 = vld [vmem:[#allocation2 + $0x344] sm:$0xf]
    %v258 = vld [vmem:[#allocation2 + $0x348] sm:$0xff]
    %v259 = vld [vmem:[#allocation2 + $0x350] sm:$0xff]
    %v260 = vld [vmem:[#allocation2 + $0x358] sm:$0xff]
    %v261 = vld [vmem:[#allocation2 + $0x360] sm:$0xf]
    %v262 = vld [vmem:[#allocation2 + $0x364] sm:$0xff]
    %v263 = vld [vmem:[#allocation2 + $0x36c] sm:$0xff]
    %v264 = vld [vmem:[#allocation2 + $0x374] sm:$0xff]
    %v265 = vld [vmem:[#allocation2 + $0x37c] sm:$0xf]
    %v266 = vld [vmem:[#allocation2 + $0x380] sm:$0xff]
    %v267 = vld [vmem:[#allocation2 + $0x388] sm:$0xff]
    %v268 = vld [vmem:[#allocation2 + $0x390] sm:$0xff]
    %v269 = vld [vmem:[#allocation2 + $0x398] sm:$0xf]
    %v270 = vld [vmem:[#allocation2 + $0x39c] sm:$0xff]
    %v271 = vld [vmem:[#allocation2 + $0x3a4] sm:$0xff]
    %v272 = vld [vmem:[#allocation2 + $0x3ac] sm:$0xff]
    %v273 = vld [vmem:[#allocation2 + $0x3b4] sm:$0xf]
    %v274 = vld [vmem:[#allocation2 + $0x3b8] sm:$0xff]
    %v275 = vld [vmem:[#allocation2 + $0x3c0] sm:$0xff]
    %v276 = vld [vmem:[#allocation2 + $0x3c8] sm:$0xff]
    %v277 = vld [vmem:[#allocation2 + $0x3d0] sm:$0xf]
    %v278 = vld [vmem:[#allocation2 + $0x3d4] sm:$0xff]
    %v279 = vld [vmem:[#allocation2 + $0x3dc] sm:$0xff]
    %v280 = vld [vmem:[#allocation2 + $0x3e4] sm:$0xff]
    %v281 = vld [vmem:[#allocation2 + $0x3ec] sm:$0xf]
    %v282 = vld [vmem:[#allocation2 + $0x3f0] sm:$0xff]
    %v283 = vld [vmem:[#allocation2 + $0x3f8] sm:$0xff]
    %v284 = vld [vmem:[#allocation2 + $0x400] sm:$0xff]
    %v285 = vld [vmem:[#allocation2 + $0x408] sm:$0xf]
    %v286 = vld [vmem:[#allocation2 + $0x40c] sm:$0xff]
    %v287 = vld [vmem:[#allocation2 + $0x414] sm:$0xff]
    %v288 = vld [vmem:[#allocation2 + $0x41c] sm:$0xff]
    %v289 = vld [vmem:[#allocation2 + $0x424] sm:$0xf]
    %v290 = vld [vmem:[#allocation2 + $0x428] sm:$0xff]
    %v291 = vld [vmem:[#allocation2 + $0x430] sm:$0xff]
    %v292 = vld [vmem:[#allocation2 + $0x438] sm:$0xff]
    %v293 = vld [vmem:[#allocation2 + $0x440] sm:$0xf]
    %v294 = vld [vmem:[#allocation2 + $0x444] sm:$0xff]
    %v295 = vld [vmem:[#allocation2 + $0x44c] sm:$0xff]
    %v296 = vld [vmem:[#allocation2 + $0x454] sm:$0xff]
    %v297 = vld [vmem:[#allocation2 + $0x45c] sm:$0xf]
    %v298 = vld [vmem:[#allocation2 + $0x460] sm:$0xff]
    %v299 = vld [vmem:[#allocation2 + $0x468] sm:$0xff]
    %v300 = vld [vmem:[#allocation2 + $0x470] sm:$0xff]
    %v301 = vld [vmem:[#allocation2 + $0x478] sm:$0xf]
    %v302 = vld [vmem:[#allocation2 + $0x47c] sm:$0xff]
    %v303 = vld [vmem:[#allocation2 + $0x484] sm:$0xff]
    %v304 = vld [vmem:[#allocation2 + $0x48c] sm:$0xff]
    %v305 = vld [vmem:[#allocation2 + $0x494] sm:$0xf]
    %v306 = vld [vmem:[#allocation2 + $0x498] sm:$0xff]
    %v307 = vld [vmem:[#allocation2 + $0x4a0] sm:$0xff]
    %v308 = vld [vmem:[#allocation2 + $0x4a8] sm:$0xff]
    %v309 = vld [vmem:[#allocation2 + $0x4b0] sm:$0xf]
    %v310 = vld [vmem:[#allocation2 + $0x4b4] sm:$0xff]
    %v311 = vld [vmem:[#allocation2 + $0x4bc] sm:$0xff]
    %v312 = vld [vmem:[#allocation2 + $0x4c4] sm:$0xff]
    %v313 = vld [vmem:[#allocation2 + $0x4cc] sm:$0xf]
    %v314 = vld [vmem:[#allocation2 + $0x4d0] sm:$0xff]
    %v315 = vld [vmem:[#allocation2 + $0x4d8] sm:$0xff]
    %v316 = vld [vmem:[#allocation2 + $0x4e0] sm:$0xff]
    %v317 = vld [vmem:[#allocation2 + $0x4e8] sm:$0xf]
    %v318 = vld [vmem:[#allocation2 + $0x4ec] sm:$0xff]
    %v319 = vld [vmem:[#allocation2 + $0x4f4] sm:$0xff]
    %v320 = vld [vmem:[#allocation2 + $0x4fc] sm:$0xff]
    %v321 = vld [vmem:[#allocation2 + $0x504] sm:$0xf]
    %v322 = vld [vmem:[#allocation2 + $0x508] sm:$0xff]
    %v323 = vld [vmem:[#allocation2 + $0x510] sm:$0xff]
    %v324 = vld [vmem:[#allocation2 + $0x518] sm:$0xff]
    %v325 = vld [vmem:[#allocation2 + $0x520] sm:$0xf]
    %v326 = vld [vmem:[#allocation2 + $0x524] sm:$0xff]
    %v327 = vld [vmem:[#allocation2 + $0x52c] sm:$0xff]
    %v328 = vld [vmem:[#allocation2 + $0x534] sm:$0xff]
    %v329 = vld [vmem:[#allocation2 + $0x53c] sm:$0xf]
    %v330 = vld [vmem:[#allocation4] sm:$0xff]
    %v332 = vlaneseq
    %v333 = vshrl.u32 %v332, 7
    %v334 = vsub.s32 0, %v333
    %v335 = vrot.slane %v330, %v334
    %v336 = vlaneseq
    %v337 = vshrl.u32 %v336, 7
    %v338 = vsub.s32 1, %v337
    %v339 = vrot.slane %v330, %v338
    %v340 = vlaneseq
    %v341 = vshrl.u32 %v340, 7
    %v342 = vsub.s32 2, %v341
    %v343 = vrot.slane %v330, %v342
    %v344 = vlaneseq
    %v345 = vshrl.u32 %v344, 7
    %v346 = vsub.s32 3, %v345
    %v347 = vrot.slane %v330, %v346
    %v348 = vlaneseq
    %v349 = vshrl.u32 %v348, 7
    %v350 = vsub.s32 4, %v349
    %v351 = vrot.slane %v330, %v350
    %v352 = vlaneseq
    %v353 = vshrl.u32 %v352, 7
    %v354 = vsub.s32 5, %v353
    %v355 = vrot.slane %v330, %v354
    %v356 = vlaneseq
    %v357 = vshrl.u32 %v356, 7
    %v358 = vsub.s32 6, %v357
    %v359 = vrot.slane %v330, %v358
    %v371 = vunpack.c.l.b16 %v134
    %v372 = vunpack.c.h.b16 %v134
    %v373 = vunpack.c.l.b16 %v135
    %v374 = vunpack.c.l.b16 %v136
    %v375 = vunpack.c.h.b16 %v136
    %v376 = vunpack.c.l.b16 %v137
    %v377 = vpack.c.b16 %v374, %v371
    %v378 = vpack.c.b16 %v375, %v372
    %v379 = vpack.c.b16 %v376, %v373
    %v575 = vunpack.c.l.b16 %v138
    %v576 = vunpack.c.h.b16 %v138
    %v577 = vunpack.c.l.b16 %v139
    %v578 = vunpack.c.h.b16 %v139
    %v579 = vunpack.c.l.b16 %v140
    %v580 = vunpack.c.h.b16 %v140
    %v581 = vunpack.c.l.b16 %v141
    %v582 = vunpack.c.l.b16 %v142
    %v583 = vunpack.c.h.b16 %v142
    %v584 = vunpack.c.l.b16 %v143
    %v585 = vunpack.c.h.b16 %v143
    %v586 = vunpack.c.l.b16 %v144
    %v587 = vunpack.c.h.b16 %v144
    %v588 = vunpack.c.l.b16 %v145
    %v589 = vunpack.c.l.b16 %v146
    %v590 = vunpack.c.h.b16 %v146
    %v591 = vunpack.c.l.b16 %v147
    %v592 = vunpack.c.h.b16 %v147
    %v593 = vunpack.c.l.b16 %v148
    %v594 = vunpack.c.h.b16 %v148
    %v595 = vunpack.c.l.b16 %v149
    %v596 = vunpack.c.l.b16 %v150
    %v597 = vunpack.c.h.b16 %v150
    %v598 = vunpack.c.l.b16 %v151
    %v599 = vunpack.c.h.b16 %v151
    %v600 = vunpack.c.l.b16 %v152
    %v601 = vunpack.c.h.b16 %v152
    %v602 = vunpack.c.l.b16 %v153
    %v603 = vunpack.c.l.b16 %v154
    %v604 = vunpack.c.h.b16 %v154
    %v605 = vunpack.c.l.b16 %v155
    %v606 = vunpack.c.h.b16 %v155
    %v607 = vunpack.c.l.b16 %v156
    %v608 = vunpack.c.h.b16 %v156
    %v609 = vunpack.c.l.b16 %v157
    %v610 = vunpack.c.l.b16 %v158
    %v611 = vunpack.c.h.b16 %v158
    %v612 = vunpack.c.l.b16 %v159
    %v613 = vunpack.c.h.b16 %v159
    %v614 = vunpack.c.l.b16 %v160
    %v615 = vunpack.c.h.b16 %v160
    %v616 = vunpack.c.l.b16 %v161
    %v617 = vunpack.c.l.b16 %v162
    %v618 = vunpack.c.h.b16 %v162
    %v619 = vunpack.c.l.b16 %v163
    %v620 = vunpack.c.h.b16 %v163
    %v621 = vunpack.c.l.b16 %v164
    %v622 = vunpack.c.h.b16 %v164
    %v623 = vunpack.c.l.b16 %v165
    %v624 = vunpack.c.l.b16 %v166
    %v625 = vunpack.c.h.b16 %v166
    %v626 = vunpack.c.l.b16 %v167
    %v627 = vunpack.c.h.b16 %v167
    %v628 = vunpack.c.l.b16 %v168
    %v629 = vunpack.c.h.b16 %v168
    %v630 = vunpack.c.l.b16 %v169
    %v631 = vunpack.c.l.b16 %v170
    %v632 = vunpack.c.h.b16 %v170
    %v633 = vunpack.c.l.b16 %v171
    %v634 = vunpack.c.h.b16 %v171
    %v635 = vunpack.c.l.b16 %v172
    %v636 = vunpack.c.h.b16 %v172
    %v637 = vunpack.c.l.b16 %v173
    %v638 = vunpack.c.l.b16 %v174
    %v639 = vunpack.c.h.b16 %v174
    %v640 = vunpack.c.l.b16 %v175
    %v641 = vunpack.c.h.b16 %v175
    %v642 = vunpack.c.l.b16 %v176
    %v643 = vunpack.c.h.b16 %v176
    %v644 = vunpack.c.l.b16 %v177
    %v645 = vunpack.c.l.b16 %v178
    %v646 = vunpack.c.h.b16 %v178
    %v647 = vunpack.c.l.b16 %v179
    %v648 = vunpack.c.h.b16 %v179
    %v649 = vunpack.c.l.b16 %v180
    %v650 = vunpack.c.h.b16 %v180
    %v651 = vunpack.c.l.b16 %v181
    %v652 = vunpack.c.l.b16 %v182
    %v653 = vunpack.c.h.b16 %v182
    %v654 = vunpack.c.l.b16 %v183
    %v655 = vunpack.c.h.b16 %v183
    %v656 = vunpack.c.l.b16 %v184
    %v657 = vunpack.c.h.b16 %v184
    %v658 = vunpack.c.l.b16 %v185
    %v659 = vunpack.c.l.b16 %v186
    %v660 = vunpack.c.h.b16 %v186
    %v661 = vunpack.c.l.b16 %v187
    %v662 = vunpack.c.h.b16 %v187
    %v663 = vunpack.c.l.b16 %v188
    %v664 = vunpack.c.h.b16 %v188
    %v665 = vunpack.c.l.b16 %v189
    %v666 = vunpack.c.l.b16 %v190
    %v667 = vunpack.c.h.b16 %v190
    %v668 = vunpack.c.l.b16 %v191
    %v669 = vunpack.c.h.b16 %v191
    %v670 = vunpack.c.l.b16 %v192
    %v671 = vunpack.c.h.b16 %v192
    %v672 = vunpack.c.l.b16 %v193
    %v673 = vunpack.c.l.b16 %v194
    %v674 = vunpack.c.h.b16 %v194
    %v675 = vunpack.c.l.b16 %v195
    %v676 = vunpack.c.h.b16 %v195
    %v677 = vunpack.c.l.b16 %v196
    %v678 = vunpack.c.h.b16 %v196
    %v679 = vunpack.c.l.b16 %v197
    %v680 = vunpack.c.l.b16 %v198
    %v681 = vunpack.c.h.b16 %v198
    %v682 = vunpack.c.l.b16 %v199
    %v683 = vunpack.c.h.b16 %v199
    %v684 = vunpack.c.l.b16 %v200
    %v685 = vunpack.c.h.b16 %v200
    %v686 = vunpack.c.l.b16 %v201
    %v687 = vunpack.c.l.b16 %v202
    %v688 = vunpack.c.h.b16 %v202
    %v689 = vunpack.c.l.b16 %v203
    %v690 = vunpack.c.h.b16 %v203
    %v691 = vunpack.c.l.b16 %v204
    %v692 = vunpack.c.h.b16 %v204
    %v693 = vunpack.c.l.b16 %v205
    %v694 = vunpack.c.l.b16 %v206
    %v695 = vunpack.c.h.b16 %v206
    %v696 = vunpack.c.l.b16 %v207
    %v697 = vunpack.c.h.b16 %v207
    %v698 = vunpack.c.l.b16 %v208
    %v699 = vunpack.c.h.b16 %v208
    %v700 = vunpack.c.l.b16 %v209
    %v701 = vunpack.c.l.b16 %v210
    %v702 = vunpack.c.h.b16 %v210
    %v703 = vunpack.c.l.b16 %v211
    %v704 = vunpack.c.h.b16 %v211
    %v705 = vunpack.c.l.b16 %v212
    %v706 = vunpack.c.h.b16 %v212
    %v707 = vunpack.c.l.b16 %v213
    %v708 = vunpack.c.l.b16 %v214
    %v709 = vunpack.c.h.b16 %v214
    %v710 = vunpack.c.l.b16 %v215
    %v711 = vunpack.c.h.b16 %v215
    %v712 = vunpack.c.l.b16 %v216
    %v713 = vunpack.c.h.b16 %v216
    %v714 = vunpack.c.l.b16 %v217
    %v715 = vunpack.c.l.b16 %v218
    %v716 = vunpack.c.h.b16 %v218
    %v717 = vunpack.c.l.b16 %v219
    %v718 = vunpack.c.h.b16 %v219
    %v719 = vunpack.c.l.b16 %v220
    %v720 = vunpack.c.h.b16 %v220
    %v721 = vunpack.c.l.b16 %v221
    %v722 = vunpack.c.l.b16 %v222
    %v723 = vunpack.c.h.b16 %v222
    %v724 = vunpack.c.l.b16 %v223
    %v725 = vunpack.c.h.b16 %v223
    %v726 = vunpack.c.l.b16 %v224
    %v727 = vunpack.c.h.b16 %v224
    %v728 = vunpack.c.l.b16 %v225
    %v729 = vunpack.c.l.b16 %v226
    %v730 = vunpack.c.h.b16 %v226
    %v731 = vunpack.c.l.b16 %v227
    %v732 = vunpack.c.h.b16 %v227
    %v733 = vunpack.c.l.b16 %v228
    %v734 = vunpack.c.h.b16 %v228
    %v735 = vunpack.c.l.b16 %v229
    %v736 = vunpack.c.l.b16 %v230
    %v737 = vunpack.c.h.b16 %v230
    %v738 = vunpack.c.l.b16 %v231
    %v739 = vunpack.c.h.b16 %v231
    %v740 = vunpack.c.l.b16 %v232
    %v741 = vunpack.c.h.b16 %v232
    %v742 = vunpack.c.l.b16 %v233
    %v743 = vunpack.c.l.b16 %v234
    %v744 = vunpack.c.h.b16 %v234
    %v745 = vunpack.c.l.b16 %v235
    %v746 = vunpack.c.h.b16 %v235
    %v747 = vunpack.c.l.b16 %v236
    %v748 = vunpack.c.h.b16 %v236
    %v749 = vunpack.c.l.b16 %v237
    %v750 = vunpack.c.l.b16 %v238
    %v751 = vunpack.c.h.b16 %v238
    %v752 = vunpack.c.l.b16 %v239
    %v753 = vunpack.c.h.b16 %v239
    %v754 = vunpack.c.l.b16 %v240
    %v755 = vunpack.c.h.b16 %v240
    %v756 = vunpack.c.l.b16 %v241
    %v757 = vunpack.c.l.b16 %v242
    %v758 = vunpack.c.h.b16 %v242
    %v759 = vunpack.c.l.b16 %v243
    %v760 = vunpack.c.h.b16 %v243
    %v761 = vunpack.c.l.b16 %v244
    %v762 = vunpack.c.h.b16 %v244
    %v763 = vunpack.c.l.b16 %v245
    %v764 = vunpack.c.l.b16 %v246
    %v765 = vunpack.c.h.b16 %v246
    %v766 = vunpack.c.l.b16 %v247
    %v767 = vunpack.c.h.b16 %v247
    %v768 = vunpack.c.l.b16 %v248
    %v769 = vunpack.c.h.b16 %v248
    %v770 = vunpack.c.l.b16 %v249
    %v771 = vunpack.c.l.b16 %v250
    %v772 = vunpack.c.h.b16 %v250
    %v773 = vunpack.c.l.b16 %v251
    %v774 = vunpack.c.h.b16 %v251
    %v775 = vunpack.c.l.b16 %v252
    %v776 = vunpack.c.h.b16 %v252
    %v777 = vunpack.c.l.b16 %v253
    %v778 = vunpack.c.l.b16 %v254
    %v779 = vunpack.c.h.b16 %v254
    %v780 = vunpack.c.l.b16 %v255
    %v781 = vunpack.c.h.b16 %v255
    %v782 = vunpack.c.l.b16 %v256
    %v783 = vunpack.c.h.b16 %v256
    %v784 = vunpack.c.l.b16 %v257
    %v785 = vunpack.c.l.b16 %v258
    %v786 = vunpack.c.h.b16 %v258
    %v787 = vunpack.c.l.b16 %v259
    %v788 = vunpack.c.h.b16 %v259
    %v789 = vunpack.c.l.b16 %v260
    %v790 = vunpack.c.h.b16 %v260
    %v791 = vunpack.c.l.b16 %v261
    %v792 = vunpack.c.l.b16 %v262
    %v793 = vunpack.c.h.b16 %v262
    %v794 = vunpack.c.l.b16 %v263
    %v795 = vunpack.c.h.b16 %v263
    %v796 = vunpack.c.l.b16 %v264
    %v797 = vunpack.c.h.b16 %v264
    %v798 = vunpack.c.l.b16 %v265
    %v799 = vunpack.c.l.b16 %v266
    %v800 = vunpack.c.h.b16 %v266
    %v801 = vunpack.c.l.b16 %v267
    %v802 = vunpack.c.h.b16 %v267
    %v803 = vunpack.c.l.b16 %v268
    %v804 = vunpack.c.h.b16 %v268
    %v805 = vunpack.c.l.b16 %v269
    %v806 = vunpack.c.l.b16 %v270
    %v807 = vunpack.c.h.b16 %v270
    %v808 = vunpack.c.l.b16 %v271
    %v809 = vunpack.c.h.b16 %v271
    %v810 = vunpack.c.l.b16 %v272
    %v811 = vunpack.c.h.b16 %v272
    %v812 = vunpack.c.l.b16 %v273
    %v813 = vunpack.c.l.b16 %v274
    %v814 = vunpack.c.h.b16 %v274
    %v815 = vunpack.c.l.b16 %v275
    %v816 = vunpack.c.h.b16 %v275
    %v817 = vunpack.c.l.b16 %v276
    %v818 = vunpack.c.h.b16 %v276
    %v819 = vunpack.c.l.b16 %v277
    %v820 = vunpack.c.l.b16 %v278
    %v821 = vunpack.c.h.b16 %v278
    %v822 = vunpack.c.l.b16 %v279
    %v823 = vunpack.c.h.b16 %v279
    %v824 = vunpack.c.l.b16 %v280
    %v825 = vunpack.c.h.b16 %v280
    %v826 = vunpack.c.l.b16 %v281
    %v827 = vunpack.c.l.b16 %v282
    %v828 = vunpack.c.h.b16 %v282
    %v829 = vunpack.c.l.b16 %v283
    %v830 = vunpack.c.h.b16 %v283
    %v831 = vunpack.c.l.b16 %v284
    %v832 = vunpack.c.h.b16 %v284
    %v833 = vunpack.c.l.b16 %v285
    %v834 = vunpack.c.l.b16 %v286
    %v835 = vunpack.c.h.b16 %v286
    %v836 = vunpack.c.l.b16 %v287
    %v837 = vunpack.c.h.b16 %v287
    %v838 = vunpack.c.l.b16 %v288
    %v839 = vunpack.c.h.b16 %v288
    %v840 = vunpack.c.l.b16 %v289
    %v841 = vunpack.c.l.b16 %v290
    %v842 = vunpack.c.h.b16 %v290
    %v843 = vunpack.c.l.b16 %v291
    %v844 = vunpack.c.h.b16 %v291
    %v845 = vunpack.c.l.b16 %v292
    %v846 = vunpack.c.h.b16 %v292
    %v847 = vunpack.c.l.b16 %v293
    %v848 = vunpack.c.l.b16 %v294
    %v849 = vunpack.c.h.b16 %v294
    %v850 = vunpack.c.l.b16 %v295
    %v851 = vunpack.c.h.b16 %v295
    %v852 = vunpack.c.l.b16 %v296
    %v853 = vunpack.c.h.b16 %v296
    %v854 = vunpack.c.l.b16 %v297
    %v855 = vunpack.c.l.b16 %v298
    %v856 = vunpack.c.h.b16 %v298
    %v857 = vunpack.c.l.b16 %v299
    %v858 = vunpack.c.h.b16 %v299
    %v859 = vunpack.c.l.b16 %v300
    %v860 = vunpack.c.h.b16 %v300
    %v861 = vunpack.c.l.b16 %v301
    %v862 = vunpack.c.l.b16 %v302
    %v863 = vunpack.c.h.b16 %v302
    %v864 = vunpack.c.l.b16 %v303
    %v865 = vunpack.c.h.b16 %v303
    %v866 = vunpack.c.l.b16 %v304
    %v867 = vunpack.c.h.b16 %v304
    %v868 = vunpack.c.l.b16 %v305
    %v869 = vunpack.c.l.b16 %v306
    %v870 = vunpack.c.h.b16 %v306
    %v871 = vunpack.c.l.b16 %v307
    %v872 = vunpack.c.h.b16 %v307
    %v873 = vunpack.c.l.b16 %v308
    %v874 = vunpack.c.h.b16 %v308
    %v875 = vunpack.c.l.b16 %v309
    %v876 = vunpack.c.l.b16 %v310
    %v877 = vunpack.c.h.b16 %v310
    %v878 = vunpack.c.l.b16 %v311
    %v879 = vunpack.c.h.b16 %v311
    %v880 = vunpack.c.l.b16 %v312
    %v881 = vunpack.c.h.b16 %v312
    %v882 = vunpack.c.l.b16 %v313
    %v883 = vunpack.c.l.b16 %v314
    %v884 = vunpack.c.h.b16 %v314
    %v885 = vunpack.c.l.b16 %v315
    %v886 = vunpack.c.h.b16 %v315
    %v887 = vunpack.c.l.b16 %v316
    %v888 = vunpack.c.h.b16 %v316
    %v889 = vunpack.c.l.b16 %v317
    %v890 = vunpack.c.l.b16 %v318
    %v891 = vunpack.c.h.b16 %v318
    %v892 = vunpack.c.l.b16 %v319
    %v893 = vunpack.c.h.b16 %v319
    %v894 = vunpack.c.l.b16 %v320
    %v895 = vunpack.c.h.b16 %v320
    %v896 = vunpack.c.l.b16 %v321
    %v897 = vunpack.c.l.b16 %v322
    %v898 = vunpack.c.h.b16 %v322
    %v899 = vunpack.c.l.b16 %v323
    %v900 = vunpack.c.h.b16 %v323
    %v901 = vunpack.c.l.b16 %v324
    %v902 = vunpack.c.h.b16 %v324
    %v903 = vunpack.c.l.b16 %v325
    %v904 = vunpack.c.l.b16 %v326
    %v905 = vunpack.c.h.b16 %v326
    %v906 = vunpack.c.l.b16 %v327
    %v907 = vunpack.c.h.b16 %v327
    %v908 = vunpack.c.l.b16 %v328
    %v909 = vunpack.c.h.b16 %v328
    %v910 = vunpack.c.l.b16 %v329
    %v911 = vpack.c.b16 %v582, %v575
    %v912 = vpack.c.b16 %v583, %v576
    %v913 = vpack.c.b16 %v584, %v577
    %v914 = vpack.c.b16 %v585, %v578
    %v915 = vpack.c.b16 %v586, %v579
    %v916 = vpack.c.b16 %v587, %v580
    %v917 = vpack.c.b16 %v588, %v581
    %v918 = vpack.c.b16 %v596, %v589
    %v919 = vpack.c.b16 %v597, %v590
    %v920 = vpack.c.b16 %v598, %v591
    %v921 = vpack.c.b16 %v599, %v592
    %v922 = vpack.c.b16 %v600, %v593
    %v923 = vpack.c.b16 %v601, %v594
    %v924 = vpack.c.b16 %v602, %v595
    %v925 = vpack.c.b16 %v610, %v603
    %v926 = vpack.c.b16 %v611, %v604
    %v927 = vpack.c.b16 %v612, %v605
    %v928 = vpack.c.b16 %v613, %v606
    %v929 = vpack.c.b16 %v614, %v607
    %v930 = vpack.c.b16 %v615, %v608
    %v931 = vpack.c.b16 %v616, %v609
    %v932 = vpack.c.b16 %v624, %v617
    %v933 = vpack.c.b16 %v625, %v618
    %v934 = vpack.c.b16 %v626, %v619
    %v935 = vpack.c.b16 %v627, %v620
    %v936 = vpack.c.b16 %v628, %v621
    %v937 = vpack.c.b16 %v629, %v622
    %v938 = vpack.c.b16 %v630, %v623
    %v939 = vpack.c.b16 %v638, %v631
    %v940 = vpack.c.b16 %v639, %v632
    %v941 = vpack.c.b16 %v640, %v633
    %v942 = vpack.c.b16 %v641, %v634
    %v943 = vpack.c.b16 %v642, %v635
    %v944 = vpack.c.b16 %v643, %v636
    %v945 = vpack.c.b16 %v644, %v637
    %v946 = vpack.c.b16 %v652, %v645
    %v947 = vpack.c.b16 %v653, %v646
    %v948 = vpack.c.b16 %v654, %v647
    %v949 = vpack.c.b16 %v655, %v648
    %v950 = vpack.c.b16 %v656, %v649
    %v951 = vpack.c.b16 %v657, %v650
    %v952 = vpack.c.b16 %v658, %v651
    %v953 = vpack.c.b16 %v666, %v659
    %v954 = vpack.c.b16 %v667, %v660
    %v955 = vpack.c.b16 %v668, %v661
    %v956 = vpack.c.b16 %v669, %v662
    %v957 = vpack.c.b16 %v670, %v663
    %v958 = vpack.c.b16 %v671, %v664
    %v959 = vpack.c.b16 %v672, %v665
    %v960 = vpack.c.b16 %v680, %v673
    %v961 = vpack.c.b16 %v681, %v674
    %v962 = vpack.c.b16 %v682, %v675
    %v963 = vpack.c.b16 %v683, %v676
    %v964 = vpack.c.b16 %v684, %v677
    %v965 = vpack.c.b16 %v685, %v678
    %v966 = vpack.c.b16 %v686, %v679
    %v967 = vpack.c.b16 %v694, %v687
    %v968 = vpack.c.b16 %v695, %v688
    %v969 = vpack.c.b16 %v696, %v689
    %v970 = vpack.c.b16 %v697, %v690
    %v971 = vpack.c.b16 %v698, %v691
    %v972 = vpack.c.b16 %v699, %v692
    %v973 = vpack.c.b16 %v700, %v693
    %v974 = vpack.c.b16 %v708, %v701
    %v975 = vpack.c.b16 %v709, %v702
    %v976 = vpack.c.b16 %v710, %v703
    %v977 = vpack.c.b16 %v711, %v704
    %v978 = vpack.c.b16 %v712, %v705
    %v979 = vpack.c.b16 %v713, %v706
    %v980 = vpack.c.b16 %v714, %v707
    %v981 = vpack.c.b16 %v722, %v715
    %v982 = vpack.c.b16 %v723, %v716
    %v983 = vpack.c.b16 %v724, %v717
    %v984 = vpack.c.b16 %v725, %v718
    %v985 = vpack.c.b16 %v726, %v719
    %v986 = vpack.c.b16 %v727, %v720
    %v987 = vpack.c.b16 %v728, %v721
    %v988 = vpack.c.b16 %v736, %v729
    %v989 = vpack.c.b16 %v737, %v730
    %v990 = vpack.c.b16 %v738, %v731
    %v991 = vpack.c.b16 %v739, %v732
    %v992 = vpack.c.b16 %v740, %v733
    %v993 = vpack.c.b16 %v741, %v734
    %v994 = vpack.c.b16 %v742, %v735
    %v995 = vpack.c.b16 %v750, %v743
    %v996 = vpack.c.b16 %v751, %v744
    %v997 = vpack.c.b16 %v752, %v745
    %v998 = vpack.c.b16 %v753, %v746
    %v999 = vpack.c.b16 %v754, %v747
    %v1000 = vpack.c.b16 %v755, %v748
    %v1001 = vpack.c.b16 %v756, %v749
    %v1002 = vpack.c.b16 %v764, %v757
    %v1003 = vpack.c.b16 %v765, %v758
    %v1004 = vpack.c.b16 %v766, %v759
    %v1005 = vpack.c.b16 %v767, %v760
    %v1006 = vpack.c.b16 %v768, %v761
    %v1007 = vpack.c.b16 %v769, %v762
    %v1008 = vpack.c.b16 %v770, %v763
    %v1009 = vpack.c.b16 %v778, %v771
    %v1010 = vpack.c.b16 %v779, %v772
    %v1011 = vpack.c.b16 %v780, %v773
    %v1012 = vpack.c.b16 %v781, %v774
    %v1013 = vpack.c.b16 %v782, %v775
    %v1014 = vpack.c.b16 %v783, %v776
    %v1015 = vpack.c.b16 %v784, %v777
    %v1016 = vpack.c.b16 %v792, %v785
    %v1017 = vpack.c.b16 %v793, %v786
    %v1018 = vpack.c.b16 %v794, %v787
    %v1019 = vpack.c.b16 %v795, %v788
    %v1020 = vpack.c.b16 %v796, %v789
    %v1021 = vpack.c.b16 %v797, %v790
    %v1022 = vpack.c.b16 %v798, %v791
    %v1023 = vpack.c.b16 %v806, %v799
    %v1024 = vpack.c.b16 %v807, %v800
    %v1025 = vpack.c.b16 %v808, %v801
    %v1026 = vpack.c.b16 %v809, %v802
    %v1027 = vpack.c.b16 %v810, %v803
    %v1028 = vpack.c.b16 %v811, %v804
    %v1029 = vpack.c.b16 %v812, %v805
    %v1030 = vpack.c.b16 %v820, %v813
    %v1031 = vpack.c.b16 %v821, %v814
    %v1032 = vpack.c.b16 %v822, %v815
    %v1033 = vpack.c.b16 %v823, %v816
    %v1034 = vpack.c.b16 %v824, %v817
    %v1035 = vpack.c.b16 %v825, %v818
    %v1036 = vpack.c.b16 %v826, %v819
    %v1037 = vpack.c.b16 %v834, %v827
    %v1038 = vpack.c.b16 %v835, %v828
    %v1039 = vpack.c.b16 %v836, %v829
    %v1040 = vpack.c.b16 %v837, %v830
    %v1041 = vpack.c.b16 %v838, %v831
    %v1042 = vpack.c.b16 %v839, %v832
    %v1043 = vpack.c.b16 %v840, %v833
    %v1044 = vpack.c.b16 %v848, %v841
    %v1045 = vpack.c.b16 %v849, %v842
    %v1046 = vpack.c.b16 %v850, %v843
    %v1047 = vpack.c.b16 %v851, %v844
    %v1048 = vpack.c.b16 %v852, %v845
    %v1049 = vpack.c.b16 %v853, %v846
    %v1050 = vpack.c.b16 %v854, %v847
    %v1051 = vpack.c.b16 %v862, %v855
    %v1052 = vpack.c.b16 %v863, %v856
    %v1053 = vpack.c.b16 %v864, %v857
    %v1054 = vpack.c.b16 %v865, %v858
    %v1055 = vpack.c.b16 %v866, %v859
    %v1056 = vpack.c.b16 %v867, %v860
    %v1057 = vpack.c.b16 %v868, %v861
    %v1058 = vpack.c.b16 %v876, %v869
    %v1059 = vpack.c.b16 %v877, %v870
    %v1060 = vpack.c.b16 %v878, %v871
    %v1061 = vpack.c.b16 %v879, %v872
    %v1062 = vpack.c.b16 %v880, %v873
    %v1063 = vpack.c.b16 %v881, %v874
    %v1064 = vpack.c.b16 %v882, %v875
    %v1065 = vpack.c.b16 %v890, %v883
    %v1066 = vpack.c.b16 %v891, %v884
    %v1067 = vpack.c.b16 %v892, %v885
    %v1068 = vpack.c.b16 %v893, %v886
    %v1069 = vpack.c.b16 %v894, %v887
    %v1070 = vpack.c.b16 %v895, %v888
    %v1071 = vpack.c.b16 %v896, %v889
    %v1072 = vpack.c.b16 %v904, %v897
    %v1073 = vpack.c.b16 %v905, %v898
    %v1074 = vpack.c.b16 %v906, %v899
    %v1075 = vpack.c.b16 %v907, %v900
    %v1076 = vpack.c.b16 %v908, %v901
    %v1077 = vpack.c.b16 %v909, %v902
    %v1078 = vpack.c.b16 %v910, %v903
    %1247 = vmatprep.subr.bf16.mxu0 %v912
    %1248 = vmatpush1.bf16.msra.mxu0 %v911
    %1249 = vmatprep.subr.bf16.mxu0 %v919
    %1250 = vmatpush1.bf16.msra.mxu0 %v918
    %1251 = vmatprep.subr.bf16.mxu0 %v926
    %1252 = vmatpush1.bf16.msra.mxu0 %v925
    %1253 = vmatprep.subr.bf16.mxu0 %v933
    %1254 = vmatpush1.bf16.msra.mxu0 %v932
    %1255 = vmatprep.subr.bf16.mxu0 %v940
    %1256 = vmatpush1.bf16.msra.mxu0 %v939
    %1257 = vmatprep.subr.bf16.mxu0 %v947
    %1258 = vmatpush1.bf16.msra.mxu0 %v946
    %1259 = vmatprep.subr.bf16.mxu0 %v954
    %1260 = vmatpush1.bf16.msra.mxu0 %v953
    %1261 = vmatprep.subr.bf16.mxu0 %v961
    %1262 = vmatpush1.bf16.msra.mxu0 %v960
    %1263 = vmatprep.subr.bf16.mxu0 %v968
    %1264 = vmatpush1.bf16.msra.mxu0 %v967
    %1265 = vmatprep.subr.bf16.mxu0 %v975
    %1266 = vmatpush1.bf16.msra.mxu0 %v974
    %1267 = vmatprep.subr.bf16.mxu0 %v982
    %1268 = vmatpush1.bf16.msra.mxu0 %v981
    %1269 = vmatprep.subr.bf16.mxu0 %v989
    %1270 = vmatpush1.bf16.msra.mxu0 %v988
    %1271 = vmatprep.subr.bf16.mxu0 %v996
    %1272 = vmatpush1.bf16.msra.mxu0 %v995
    %1273 = vmatprep.subr.bf16.mxu0 %v1003
    %1274 = vmatpush1.bf16.msra.mxu0 %v1002
    %1275 = vmatprep.subr.bf16.mxu0 %v1010
    %1276 = vmatpush1.bf16.msra.mxu0 %v1009
    %1277 = vmatprep.subr.bf16.mxu0 %v1017
    %1278 = vmatpush1.bf16.msra.mxu0 %v1016
    %1279 = vmatprep.mubr.bf16.mxu0 %v378
    %1280 = vmatmul.mubr.bf16.gmra.mrb[0].mxu0 %v377
    %v1281 = vpop.f32.mrb[0].mxu0
    %v1282 = vadd.f32 %v335, %v1281
    %v1283 = vpop.f32.mrb[0].mxu0
    %v1284 = vadd.f32 %v339, %v1283
    %v1285 = vpop.f32.mrb[0].mxu0
    %v1286 = vadd.f32 %v335, %v1285
    %v1287 = vpop.f32.mrb[0].mxu0
    %v1288 = vadd.f32 %v339, %v1287
    %1289 = vdwg.mxu0
    %1290 = vmatprep.subr.bf16.mxu0 %v1024
    %1291 = vmatpush1.bf16.msra.mxu0 %v1023
    %1292 = vmatprep.subr.bf16.mxu0 %v1031
    %1293 = vmatpush1.bf16.msra.mxu0 %v1030
    %1294 = vmatprep.subr.bf16.mxu0 %v1038
    %1295 = vmatpush1.bf16.msra.mxu0 %v1037
    %1296 = vmatprep.subr.bf16.mxu0 %v1045
    %1297 = vmatpush1.bf16.msra.mxu0 %v1044
    %1298 = vmatprep.subr.bf16.mxu0 %v1052
    %1299 = vmatpush1.bf16.msra.mxu0 %v1051
    %1300 = vmatprep.subr.bf16.mxu0 %v1059
    %1301 = vmatpush1.bf16.msra.mxu0 %v1058
    %1302 = vmatprep.subr.bf16.mxu0 %v1066
    %1303 = vmatpush1.bf16.msra.mxu0 %v1065
    %1304 = vmatprep.subr.bf16.mxu0 %v1073
    %1305 = vmatpush1.bf16.msra.mxu0 %v1072
    %1306 = vmatprep.subr.bf16.mxu0 0
    %1307 = vmatpush1.bf16.msra.mxu0 0
    %1308 = vmatprep.subr.bf16.mxu0 0
    %1309 = vmatpush1.bf16.msra.mxu0 0
    %1310 = vmatprep.subr.bf16.mxu0 0
    %1311 = vmatpush1.bf16.msra.mxu0 0
    %1312 = vmatprep.subr.bf16.mxu0 0
    %1313 = vmatpush1.bf16.msra.mxu0 0
    %1314 = vmatprep.subr.bf16.mxu0 0
    %1315 = vmatpush1.bf16.msra.mxu0 0
    %1316 = vmatprep.subr.bf16.mxu0 0
    %1317 = vmatpush1.bf16.msra.mxu0 0
    %1318 = vmatprep.subr.bf16.mxu0 0
    %1319 = vmatpush1.bf16.msra.mxu0 0
    %1320 = vmatprep.subr.bf16.mxu0 0
    %1321 = vmatpush1.bf16.msra.mxu0 0
    %1322 = vmatprep.mubr.bf16.mxu0 0
    %1323 = vmatmul.mubr.bf16.gmra.mrb[0].mxu0 %v379
    %v1324 = vpop.f32.mrb[0].mxu0
    %v1325 = vadd.f32 %v1282, %v1324
    %v1326 = vpop.f32.mrb[0].mxu0
    %v1327 = vadd.f32 %v1284, %v1326
    %v1328 = vpop.f32.mrb[0].mxu0
    %v1329 = vadd.f32 %v1286, %v1328
    %v1330 = vpop.f32.mrb[0].mxu0
    %v1331 = vadd.f32 %v1288, %v1330
    %1332 = vdwg.mxu0
    %1333 = vmatprep.subr.bf16.mxu0 %v914
    %1334 = vmatpush1.bf16.msra.mxu0 %v913
    %1335 = vmatprep.subr.bf16.mxu0 %v921
    %1336 = vmatpush1.bf16.msra.mxu0 %v920
    %1337 = vmatprep.subr.bf16.mxu0 %v928
    %1338 = vmatpush1.bf16.msra.mxu0 %v927
    %1339 = vmatprep.subr.bf16.mxu0 %v935
    %1340 = vmatpush1.bf16.msra.mxu0 %v934
    %1341 = vmatprep.subr.bf16.mxu0 %v942
    %1342 = vmatpush1.bf16.msra.mxu0 %v941
    %1343 = vmatprep.subr.bf16.mxu0 %v949
    %1344 = vmatpush1.bf16.msra.mxu0 %v948
    %1345 = vmatprep.subr.bf16.mxu0 %v956
    %1346 = vmatpush1.bf16.msra.mxu0 %v955
    %1347 = vmatprep.subr.bf16.mxu0 %v963
    %1348 = vmatpush1.bf16.msra.mxu0 %v962
    %1349 = vmatprep.subr.bf16.mxu0 %v970
    %1350 = vmatpush1.bf16.msra.mxu0 %v969
    %1351 = vmatprep.subr.bf16.mxu0 %v977
    %1352 = vmatpush1.bf16.msra.mxu0 %v976
    %1353 = vmatprep.subr.bf16.mxu0 %v984
    %1354 = vmatpush1.bf16.msra.mxu0 %v983
    %1355 = vmatprep.subr.bf16.mxu0 %v991
    %1356 = vmatpush1.bf16.msra.mxu0 %v990
    %1357 = vmatprep.subr.bf16.mxu0 %v998
    %1358 = vmatpush1.bf16.msra.mxu0 %v997
    %1359 = vmatprep.subr.bf16.mxu0 %v1005
    %1360 = vmatpush1.bf16.msra.mxu0 %v1004
    %1361 = vmatprep.subr.bf16.mxu0 %v1012
    %1362 = vmatpush1.bf16.msra.mxu0 %v1011
    %1363 = vmatprep.subr.bf16.mxu0 %v1019
    %1364 = vmatpush1.bf16.msra.mxu0 %v1018
    %1365 = vmatprep.mubr.bf16.mxu0 %v378
    %1366 = vmatmul.mubr.bf16.gmra.mrb[0].mxu0 %v377
    %v1367 = vpop.f32.mrb[0].mxu0
    %v1368 = vadd.f32 %v343, %v1367
    %v1369 = vpop.f32.mrb[0].mxu0
    %v1370 = vadd.f32 %v347, %v1369
    %v1371 = vpop.f32.mrb[0].mxu0
    %v1372 = vadd.f32 %v343, %v1371
    %v1373 = vpop.f32.mrb[0].mxu0
    %v1374 = vadd.f32 %v347, %v1373
    %1375 = vdwg.mxu0
    %1376 = vmatprep.subr.bf16.mxu0 %v1026
    %1377 = vmatpush1.bf16.msra.mxu0 %v1025
    %1378 = vmatprep.subr.bf16.mxu0 %v1033
    %1379 = vmatpush1.bf16.msra.mxu0 %v1032
    %1380 = vmatprep.subr.bf16.mxu0 %v1040
    %1381 = vmatpush1.bf16.msra.mxu0 %v1039
    %1382 = vmatprep.subr.bf16.mxu0 %v1047
    %1383 = vmatpush1.bf16.msra.mxu0 %v1046
    %1384 = vmatprep.subr.bf16.mxu0 %v1054
    %1385 = vmatpush1.bf16.msra.mxu0 %v1053
    %1386 = vmatprep.subr.bf16.mxu0 %v1061
    %1387 = vmatpush1.bf16.msra.mxu0 %v1060
    %1388 = vmatprep.subr.bf16.mxu0 %v1068
    %1389 = vmatpush1.bf16.msra.mxu0 %v1067
    %1390 = vmatprep.subr.bf16.mxu0 %v1075
    %1391 = vmatpush1.bf16.msra.mxu0 %v1074
    %1392 = vmatprep.subr.bf16.mxu0 0
    %1393 = vmatpush1.bf16.msra.mxu0 0
    %1394 = vmatprep.subr.bf16.mxu0 0
    %1395 = vmatpush1.bf16.msra.mxu0 0
    %1396 = vmatprep.subr.bf16.mxu0 0
    %1397 = vmatpush1.bf16.msra.mxu0 0
    %1398 = vmatprep.subr.bf16.mxu0 0
    %1399 = vmatpush1.bf16.msra.mxu0 0
    %1400 = vmatprep.subr.bf16.mxu0 0
    %1401 = vmatpush1.bf16.msra.mxu0 0
    %1402 = vmatprep.subr.bf16.mxu0 0
    %1403 = vmatpush1.bf16.msra.mxu0 0
    %1404 = vmatprep.subr.bf16.mxu0 0
    %1405 = vmatpush1.bf16.msra.mxu0 0
    %1406 = vmatprep.subr.bf16.mxu0 0
    %1407 = vmatpush1.bf16.msra.mxu0 0
    %1408 = vmatprep.mubr.bf16.mxu0 0
    %1409 = vmatmul.mubr.bf16.gmra.mrb[0].mxu0 %v379
    %v1410 = vpop.f32.mrb[0].mxu0
    %v1411 = vadd.f32 %v1368, %v1410
    %v1412 = vpop.f32.mrb[0].mxu0
    %v1413 = vadd.f32 %v1370, %v1412
    %v1414 = vpop.f32.mrb[0].mxu0
    %v1415 = vadd.f32 %v1372, %v1414
    %v1416 = vpop.f32.mrb[0].mxu0
    %v1417 = vadd.f32 %v1374, %v1416
    %1418 = vdwg.mxu0
    %1419 = vmatprep.subr.bf16.mxu0 %v916
    %1420 = vmatpush1.bf16.msra.mxu0 %v915
    %1421 = vmatprep.subr.bf16.mxu0 %v923
    %1422 = vmatpush1.bf16.msra.mxu0 %v922
    %1423 = vmatprep.subr.bf16.mxu0 %v930
    %1424 = vmatpush1.bf16.msra.mxu0 %v929
    %1425 = vmatprep.subr.bf16.mxu0 %v937
    %1426 = vmatpush1.bf16.msra.mxu0 %v936
    %1427 = vmatprep.subr.bf16.mxu0 %v944
    %1428 = vmatpush1.bf16.msra.mxu0 %v943
    %1429 = vmatprep.subr.bf16.mxu0 %v951
    %1430 = vmatpush1.bf16.msra.mxu0 %v950
    %1431 = vmatprep.subr.bf16.mxu0 %v958
    %1432 = vmatpush1.bf16.msra.mxu0 %v957
    %1433 = vmatprep.subr.bf16.mxu0 %v965
    %1434 = vmatpush1.bf16.msra.mxu0 %v964
    %1435 = vmatprep.subr.bf16.mxu0 %v972
    %1436 = vmatpush1.bf16.msra.mxu0 %v971
    %1437 = vmatprep.subr.bf16.mxu0 %v979
    %1438 = vmatpush1.bf16.msra.mxu0 %v978
    %1439 = vmatprep.subr.bf16.mxu0 %v986
    %1440 = vmatpush1.bf16.msra.mxu0 %v985
    %1441 = vmatprep.subr.bf16.mxu0 %v993
    %1442 = vmatpush1.bf16.msra.mxu0 %v992
    %1443 = vmatprep.subr.bf16.mxu0 %v1000
    %1444 = vmatpush1.bf16.msra.mxu0 %v999
    %1445 = vmatprep.subr.bf16.mxu0 %v1007
    %1446 = vmatpush1.bf16.msra.mxu0 %v1006
    %1447 = vmatprep.subr.bf16.mxu0 %v1014
    %1448 = vmatpush1.bf16.msra.mxu0 %v1013
    %1449 = vmatprep.subr.bf16.mxu0 %v1021
    %1450 = vmatpush1.bf16.msra.mxu0 %v1020
    %1451 = vmatprep.mubr.bf16.mxu0 %v378
    %1452 = vmatmul.mubr.bf16.gmra.mrb[0].mxu0 %v377
    %v1453 = vpop.f32.mrb[0].mxu0
    %v1454 = vadd.f32 %v351, %v1453
    %v1455 = vpop.f32.mrb[0].mxu0
    %v1456 = vadd.f32 %v355, %v1455
    %v1457 = vpop.f32.mrb[0].mxu0
    %v1458 = vadd.f32 %v351, %v1457
    %v1459 = vpop.f32.mrb[0].mxu0
    %v1460 = vadd.f32 %v355, %v1459
    %1461 = vdwg.mxu0
    %1462 = vmatprep.subr.bf16.mxu0 %v1028
    %1463 = vmatpush1.bf16.msra.mxu0 %v1027
    %1464 = vmatprep.subr.bf16.mxu0 %v1035
    %1465 = vmatpush1.bf16.msra.mxu0 %v1034
    %1466 = vmatprep.subr.bf16.mxu0 %v1042
    %1467 = vmatpush1.bf16.msra.mxu0 %v1041
    %1468 = vmatprep.subr.bf16.mxu0 %v1049
    %1469 = vmatpush1.bf16.msra.mxu0 %v1048
    %1470 = vmatprep.subr.bf16.mxu0 %v1056
    %1471 = vmatpush1.bf16.msra.mxu0 %v1055
    %1472 = vmatprep.subr.bf16.mxu0 %v1063
    %1473 = vmatpush1.bf16.msra.mxu0 %v1062
    %1474 = vmatprep.subr.bf16.mxu0 %v1070
    %1475 = vmatpush1.bf16.msra.mxu0 %v1069
    %1476 = vmatprep.subr.bf16.mxu0 %v1077
    %1477 = vmatpush1.bf16.msra.mxu0 %v1076
    %1478 = vmatprep.subr.bf16.mxu0 0
    %1479 = vmatpush1.bf16.msra.mxu0 0
    %1480 = vmatprep.subr.bf16.mxu0 0
    %1481 = vmatpush1.bf16.msra.mxu0 0
    %1482 = vmatprep.subr.bf16.mxu0 0
    %1483 = vmatpush1.bf16.msra.mxu0 0
    %1484 = vmatprep.subr.bf16.mxu0 0
    %1485 = vmatpush1.bf16.msra.mxu0 0
    %1486 = vmatprep.subr.bf16.mxu0 0
    %1487 = vmatpush1.bf16.msra.mxu0 0
    %1488 = vmatprep.subr.bf16.mxu0 0
    %1489 = vmatpush1.bf16.msra.mxu0 0
    %1490 = vmatprep.subr.bf16.mxu0 0
    %1491 = vmatpush1.bf16.msra.mxu0 0
    %1492 = vmatprep.subr.bf16.mxu0 0
    %1493 = vmatpush1.bf16.msra.mxu0 0
    %1494 = vmatprep.mubr.bf16.mxu0 0
    %1495 = vmatmul.mubr.bf16.gmra.mrb[0].mxu0 %v379
    %v1496 = vpop.f32.mrb[0].mxu0
    %v1497 = vadd.f32 %v1454, %v1496
    %v1498 = vpop.f32.mrb[0].mxu0
    %v1499 = vadd.f32 %v1456, %v1498
    %v1500 = vpop.f32.mrb[0].mxu0
    %v1501 = vadd.f32 %v1458, %v1500
    %v1502 = vpop.f32.mrb[0].mxu0
    %v1503 = vadd.f32 %v1460, %v1502
    %1504 = vdwg.mxu0
    %1505 = vmatprep.subr.bf16.mxu0 0
    %1506 = vmatpush1.bf16.msra.mxu0 %v917
    %1507 = vmatprep.subr.bf16.mxu0 0
    %1508 = vmatpush1.bf16.msra.mxu0 %v924
    %1509 = vmatprep.subr.bf16.mxu0 0
    %1510 = vmatpush1.bf16.msra.mxu0 %v931
    %1511 = vmatprep.subr.bf16.mxu0 0
    %1512 = vmatpush1.bf16.msra.mxu0 %v938
    %1513 = vmatprep.subr.bf16.mxu0 0
    %1514 = vmatpush1.bf16.msra.mxu0 %v945
    %1515 = vmatprep.subr.bf16.mxu0 0
    %1516 = vmatpush1.bf16.msra.mxu0 %v952
    %1517 = vmatprep.subr.bf16.mxu0 0
    %1518 = vmatpush1.bf16.msra.mxu0 %v959
    %1519 = vmatprep.subr.bf16.mxu0 0
    %1520 = vmatpush1.bf16.msra.mxu0 %v966
    %1521 = vmatprep.subr.bf16.mxu0 0
    %1522 = vmatpush1.bf16.msra.mxu0 %v973
    %1523 = vmatprep.subr.bf16.mxu0 0
    %1524 = vmatpush1.bf16.msra.mxu0 %v980
    %1525 = vmatprep.subr.bf16.mxu0 0
    %1526 = vmatpush1.bf16.msra.mxu0 %v987
    %1527 = vmatprep.subr.bf16.mxu0 0
    %1528 = vmatpush1.bf16.msra.mxu0 %v994
    %1529 = vmatprep.subr.bf16.mxu0 0
    %1530 = vmatpush1.bf16.msra.mxu0 %v1001
    %1531 = vmatprep.subr.bf16.mxu0 0
    %1532 = vmatpush1.bf16.msra.mxu0 %v1008
    %1533 = vmatprep.subr.bf16.mxu0 0
    %1534 = vmatpush1.bf16.msra.mxu0 %v1015
    %1535 = vmatprep.subr.bf16.mxu0 0
    %1536 = vmatpush1.bf16.msra.mxu0 %v1022
    %1537 = vmatprep.mubr.bf16.mxu0 %v378
    %1538 = vmatmul.mubr.bf16.gmra.mrb[0].mxu0 %v377
    %v1539 = vpop.f32.mrb[0].mxu0
    %v1540 = vadd.f32 %v359, %v1539
    %v1541 = vpop.f32.mrb[0].mxu0
    %v1542 = vpop.f32.mrb[0].mxu0
    %v1543 = vadd.f32 %v359, %v1542
    %v1544 = vpop.f32.mrb[0].mxu0
    %1545 = vdwg.mxu0
    %1546 = vmatprep.subr.bf16.mxu0 0
    %1547 = vmatpush1.bf16.msra.mxu0 %v1029
    %1548 = vmatprep.subr.bf16.mxu0 0
    %1549 = vmatpush1.bf16.msra.mxu0 %v1036
    %1550 = vmatprep.subr.bf16.mxu0 0
    %1551 = vmatpush1.bf16.msra.mxu0 %v1043
    %1552 = vmatprep.subr.bf16.mxu0 0
    %1553 = vmatpush1.bf16.msra.mxu0 %v1050
    %1554 = vmatprep.subr.bf16.mxu0 0
    %1555 = vmatpush1.bf16.msra.mxu0 %v1057
    %1556 = vmatprep.subr.bf16.mxu0 0
    %1557 = vmatpush1.bf16.msra.mxu0 %v1064
    %1558 = vmatprep.subr.bf16.mxu0 0
    %1559 = vmatpush1.bf16.msra.mxu0 %v1071
    %1560 = vmatprep.subr.bf16.mxu0 0
    %1561 = vmatpush1.bf16.msra.mxu0 %v1078
    %1562 = vmatprep.subr.bf16.mxu0 0
    %1563 = vmatpush1.bf16.msra.mxu0 0
    %1564 = vmatprep.subr.bf16.mxu0 0
    %1565 = vmatpush1.bf16.msra.mxu0 0
    %1566 = vmatprep.subr.bf16.mxu0 0
    %1567 = vmatpush1.bf16.msra.mxu0 0
    %1568 = vmatprep.subr.bf16.mxu0 0
    %1569 = vmatpush1.bf16.msra.mxu0 0
    %1570 = vmatprep.subr.bf16.mxu0 0
    %1571 = vmatpush1.bf16.msra.mxu0 0
    %1572 = vmatprep.subr.bf16.mxu0 0
    %1573 = vmatpush1.bf16.msra.mxu0 0
    %1574 = vmatprep.subr.bf16.mxu0 0
    %1575 = vmatpush1.bf16.msra.mxu0 0
    %1576 = vmatprep.subr.bf16.mxu0 0
    %1577 = vmatpush1.bf16.msra.mxu0 0
    %1578 = vmatprep.mubr.bf16.mxu0 0
    %1579 = vmatmul.mubr.bf16.gmra.mrb[0].mxu0 %v379
    %v1580 = vpop.f32.mrb[0].mxu0
    %v1581 = vadd.f32 %v1540, %v1580
    %v1582 = vpop.f32.mrb[0].mxu0
    %v1583 = vpop.f32.mrb[0].mxu0
    %v1584 = vadd.f32 %v1543, %v1583
    %v1585 = vpop.f32.mrb[0].mxu0
    %1586 = vdwg.mxu0
    %v1587 = vmax.f32 %v1325, 0.0
    %v1588 = vmax.f32 %v1327, 0.0
    %v1589 = vmax.f32 %v1411, 0.0
    %v1590 = vmax.f32 %v1413, 0.0
    %v1591 = vmax.f32 %v1497, 0.0
    %v1592 = vmax.f32 %v1499, 0.0
    %v1593 = vmax.f32 %v1581, 0.0
    %v1594 = vmax.f32 %v1329, 0.0
    %v1595 = vmax.f32 %v1331, 0.0
    %v1596 = vmax.f32 %v1415, 0.0
    %v1597 = vmax.f32 %v1417, 0.0
    %v1598 = vmax.f32 %v1501, 0.0
    %v1599 = vmax.f32 %v1503, 0.0
    %v1600 = vmax.f32 %v1584, 0.0
    %v1601 = vpack.c.bf16 %v1594, %v1587
    %v1602 = vpack.c.bf16 %v1595, %v1588
    %v1603 = vpack.c.bf16 %v1596, %v1589
    %v1604 = vpack.c.bf16 %v1597, %v1590
    %v1605 = vpack.c.bf16 %v1598, %v1591
    %v1606 = vpack.c.bf16 %v1599, %v1592
    %v1607 = vpack.c.bf16 %v1600, %v1593
    %v1608 = vld [vmem:[#allocation6] sm:$0xff]
    %v1609 = vld [vmem:[#allocation6 + $0x8] sm:$0xff]
    %v1610 = vld [vmem:[#allocation6 + $0x10] sm:$0xff]
    %v1611 = vld [vmem:[#allocation6 + $0x18] sm:$0xf]
    %v1612 = vld [vmem:[#allocation6 + $0x1c] sm:$0xff]
    %v1613 = vld [vmem:[#allocation6 + $0x24] sm:$0xff]
    %v1614 = vld [vmem:[#allocation6 + $0x2c] sm:$0xff]
    %v1615 = vld [vmem:[#allocation6 + $0x34] sm:$0xf]
    %v1616 = vld [vmem:[#allocation6 + $0x38] sm:$0xff]
    %v1617 = vld [vmem:[#allocation6 + $0x40] sm:$0xff]
    %v1618 = vld [vmem:[#allocation6 + $0x48] sm:$0xff]
    %v1619 = vld [vmem:[#allocation6 + $0x50] sm:$0xf]
    %v1620 = vld [vmem:[#allocation6 + $0x54] sm:$0xff]
    %v1621 = vld [vmem:[#allocation6 + $0x5c] sm:$0xff]
    %v1622 = vld [vmem:[#allocation6 + $0x64] sm:$0xff]
    %v1623 = vld [vmem:[#allocation6 + $0x6c] sm:$0xf]
    %v1624 = vld [vmem:[#allocation6 + $0x70] sm:$0xff]
    %v1625 = vld [vmem:[#allocation6 + $0x78] sm:$0xff]
    %v1626 = vld [vmem:[#allocation6 + $0x80] sm:$0xff]
    %v1627 = vld [vmem:[#allocation6 + $0x88] sm:$0xf]
    %v1628 = vld [vmem:[#allocation6 + $0x8c] sm:$0xff]
    %v1629 = vld [vmem:[#allocation6 + $0x94] sm:$0xff]
    %v1630 = vld [vmem:[#allocation6 + $0x9c] sm:$0xff]
    %v1631 = vld [vmem:[#allocation6 + $0xa4] sm:$0xf]
    %v1632 = vld [vmem:[#allocation6 + $0xa8] sm:$0xff]
    %v1633 = vld [vmem:[#allocation6 + $0xb0] sm:$0xff]
    %v1634 = vld [vmem:[#allocation6 + $0xb8] sm:$0xff]
    %v1635 = vld [vmem:[#allocation6 + $0xc0] sm:$0xf]
    %v1636 = vld [vmem:[#allocation6 + $0xc4] sm:$0xff]
    %v1637 = vld [vmem:[#allocation6 + $0xcc] sm:$0xff]
    %v1638 = vld [vmem:[#allocation6 + $0xd4] sm:$0xff]
    %v1639 = vld [vmem:[#allocation6 + $0xdc] sm:$0xf]
    %v1640 = vld [vmem:[#allocation6 + $0xe0] sm:$0xff]
    %v1641 = vld [vmem:[#allocation6 + $0xe8] sm:$0xff]
    %v1642 = vld [vmem:[#allocation6 + $0xf0] sm:$0xff]
    %v1643 = vld [vmem:[#allocation6 + $0xf8] sm:$0xf]
    %v1644 = vld [vmem:[#allocation6 + $0xfc] sm:$0xff]
    %v1645 = vld [vmem:[#allocation6 + $0x104] sm:$0xff]
    %v1646 = vld [vmem:[#allocation6 + $0x10c] sm:$0xff]
    %v1647 = vld [vmem:[#allocation6 + $0x114] sm:$0xf]
    %v1648 = vld [vmem:[#allocation6 + $0x118] sm:$0xff]
    %v1649 = vld [vmem:[#allocation6 + $0x120] sm:$0xff]
    %v1650 = vld [vmem:[#allocation6 + $0x128] sm:$0xff]
    %v1651 = vld [vmem:[#allocation6 + $0x130] sm:$0xf]
    %v1652 = vld [vmem:[#allocation6 + $0x134] sm:$0xff]
    %v1653 = vld [vmem:[#allocation6 + $0x13c] sm:$0xff]
    %v1654 = vld [vmem:[#allocation6 + $0x144] sm:$0xff]
    %v1655 = vld [vmem:[#allocation6 + $0x14c] sm:$0xf]
    %v1656 = vld [vmem:[#allocation6 + $0x150] sm:$0xff]
    %v1657 = vld [vmem:[#allocation6 + $0x158] sm:$0xff]
    %v1658 = vld [vmem:[#allocation6 + $0x160] sm:$0xff]
    %v1659 = vld [vmem:[#allocation6 + $0x168] sm:$0xf]
    %v1660 = vld [vmem:[#allocation6 + $0x16c] sm:$0xff]
    %v1661 = vld [vmem:[#allocation6 + $0x174] sm:$0xff]
    %v1662 = vld [vmem:[#allocation6 + $0x17c] sm:$0xff]
    %v1663 = vld [vmem:[#allocation6 + $0x184] sm:$0xf]
    %v1664 = vld [vmem:[#allocation6 + $0x188] sm:$0xff]
    %v1665 = vld [vmem:[#allocation6 + $0x190] sm:$0xff]
    %v1666 = vld [vmem:[#allocation6 + $0x198] sm:$0xff]
    %v1667 = vld [vmem:[#allocation6 + $0x1a0] sm:$0xf]
    %v1668 = vld [vmem:[#allocation6 + $0x1a4] sm:$0xff]
    %v1669 = vld [vmem:[#allocation6 + $0x1ac] sm:$0xff]
    %v1670 = vld [vmem:[#allocation6 + $0x1b4] sm:$0xff]
    %v1671 = vld [vmem:[#allocation6 + $0x1bc] sm:$0xf]
    %v1672 = vld [vmem:[#allocation6 + $0x1c0] sm:$0xff]
    %v1673 = vld [vmem:[#allocation6 + $0x1c8] sm:$0xff]
    %v1674 = vld [vmem:[#allocation6 + $0x1d0] sm:$0xff]
    %v1675 = vld [vmem:[#allocation6 + $0x1d8] sm:$0xf]
    %v1676 = vld [vmem:[#allocation6 + $0x1dc] sm:$0xff]
    %v1677 = vld [vmem:[#allocation6 + $0x1e4] sm:$0xff]
    %v1678 = vld [vmem:[#allocation6 + $0x1ec] sm:$0xff]
    %v1679 = vld [vmem:[#allocation6 + $0x1f4] sm:$0xf]
    %v1680 = vld [vmem:[#allocation6 + $0x1f8] sm:$0xff]
    %v1681 = vld [vmem:[#allocation6 + $0x200] sm:$0xff]
    %v1682 = vld [vmem:[#allocation6 + $0x208] sm:$0xff]
    %v1683 = vld [vmem:[#allocation6 + $0x210] sm:$0xf]
    %v1684 = vld [vmem:[#allocation6 + $0x214] sm:$0xff]
    %v1685 = vld [vmem:[#allocation6 + $0x21c] sm:$0xff]
    %v1686 = vld [vmem:[#allocation6 + $0x224] sm:$0xff]
    %v1687 = vld [vmem:[#allocation6 + $0x22c] sm:$0xf]
    %v1688 = vld [vmem:[#allocation6 + $0x230] sm:$0xff]
    %v1689 = vld [vmem:[#allocation6 + $0x238] sm:$0xff]
    %v1690 = vld [vmem:[#allocation6 + $0x240] sm:$0xff]
    %v1691 = vld [vmem:[#allocation6 + $0x248] sm:$0xf]
    %v1692 = vld [vmem:[#allocation6 + $0x24c] sm:$0xff]
    %v1693 = vld [vmem:[#allocation6 + $0x254] sm:$0xff]
    %v1694 = vld [vmem:[#allocation6 + $0x25c] sm:$0xff]
    %v1695 = vld [vmem:[#allocation6 + $0x264] sm:$0xf]
    %v1696 = vld [vmem:[#allocation6 + $0x268] sm:$0xff]
    %v1697 = vld [vmem:[#allocation6 + $0x270] sm:$0xff]
    %v1698 = vld [vmem:[#allocation6 + $0x278] sm:$0xff]
    %v1699 = vld [vmem:[#allocation6 + $0x280] sm:$0xf]
    %v1700 = vld [vmem:[#allocation6 + $0x284] sm:$0xff]
    %v1701 = vld [vmem:[#allocation6 + $0x28c] sm:$0xff]
    %v1702 = vld [vmem:[#allocation6 + $0x294] sm:$0xff]
    %v1703 = vld [vmem:[#allocation6 + $0x29c] sm:$0xf]
    %v1704 = vld [vmem:[#allocation6 + $0x2a0] sm:$0xff]
    %v1705 = vld [vmem:[#allocation6 + $0x2a8] sm:$0xff]
    %v1706 = vld [vmem:[#allocation6 + $0x2b0] sm:$0xff]
    %v1707 = vld [vmem:[#allocation6 + $0x2b8] sm:$0xf]
    %v1708 = vld [vmem:[#allocation6 + $0x2bc] sm:$0xff]
    %v1709 = vld [vmem:[#allocation6 + $0x2c4] sm:$0xff]
    %v1710 = vld [vmem:[#allocation6 + $0x2cc] sm:$0xff]
    %v1711 = vld [vmem:[#allocation6 + $0x2d4] sm:$0xf]
    %v1712 = vld [vmem:[#allocation6 + $0x2d8] sm:$0xff]
    %v1713 = vld [vmem:[#allocation6 + $0x2e0] sm:$0xff]
    %v1714 = vld [vmem:[#allocation6 + $0x2e8] sm:$0xff]
    %v1715 = vld [vmem:[#allocation6 + $0x2f0] sm:$0xf]
    %v1716 = vld [vmem:[#allocation6 + $0x2f4] sm:$0xff]
    %v1717 = vld [vmem:[#allocation6 + $0x2fc] sm:$0xff]
    %v1718 = vld [vmem:[#allocation6 + $0x304] sm:$0xff]
    %v1719 = vld [vmem:[#allocation6 + $0x30c] sm:$0xf]
    %v1720 = vld [vmem:[#allocation6 + $0x310] sm:$0xff]
    %v1721 = vld [vmem:[#allocation6 + $0x318] sm:$0xff]
    %v1722 = vld [vmem:[#allocation6 + $0x320] sm:$0xff]
    %v1723 = vld [vmem:[#allocation6 + $0x328] sm:$0xf]
    %v1724 = vld [vmem:[#allocation6 + $0x32c] sm:$0xff]
    %v1725 = vld [vmem:[#allocation6 + $0x334] sm:$0xff]
    %v1726 = vld [vmem:[#allocation6 + $0x33c] sm:$0xff]
    %v1727 = vld [vmem:[#allocation6 + $0x344] sm:$0xf]
    %v1728 = vld [vmem:[#allocation6 + $0x348] sm:$0xff]
    %v1729 = vld [vmem:[#allocation6 + $0x350] sm:$0xff]
    %v1730 = vld [vmem:[#allocation6 + $0x358] sm:$0xff]
    %v1731 = vld [vmem:[#allocation6 + $0x360] sm:$0xf]
    %v1732 = vld [vmem:[#allocation6 + $0x364] sm:$0xff]
    %v1733 = vld [vmem:[#allocation6 + $0x36c] sm:$0xff]
    %v1734 = vld [vmem:[#allocation6 + $0x374] sm:$0xff]
    %v1735 = vld [vmem:[#allocation6 + $0x37c] sm:$0xf]
    %v1736 = vld [vmem:[#allocation6 + $0x380] sm:$0xff]
    %v1737 = vld [vmem:[#allocation6 + $0x388] sm:$0xff]
    %v1738 = vld [vmem:[#allocation6 + $0x390] sm:$0xff]
    %v1739 = vld [vmem:[#allocation6 + $0x398] sm:$0xf]
    %v1740 = vld [vmem:[#allocation6 + $0x39c] sm:$0xff]
    %v1741 = vld [vmem:[#allocation6 + $0x3a4] sm:$0xff]
    %v1742 = vld [vmem:[#allocation6 + $0x3ac] sm:$0xff]
    %v1743 = vld [vmem:[#allocation6 + $0x3b4] sm:$0xf]
    %v1744 = vld [vmem:[#allocation6 + $0x3b8] sm:$0xff]
    %v1745 = vld [vmem:[#allocation6 + $0x3c0] sm:$0xff]
    %v1746 = vld [vmem:[#allocation6 + $0x3c8] sm:$0xff]
    %v1747 = vld [vmem:[#allocation6 + $0x3d0] sm:$0xf]
    %v1748 = vld [vmem:[#allocation6 + $0x3d4] sm:$0xff]
    %v1749 = vld [vmem:[#allocation6 + $0x3dc] sm:$0xff]
    %v1750 = vld [vmem:[#allocation6 + $0x3e4] sm:$0xff]
    %v1751 = vld [vmem:[#allocation6 + $0x3ec] sm:$0xf]
    %v1752 = vld [vmem:[#allocation6 + $0x3f0] sm:$0xff]
    %v1753 = vld [vmem:[#allocation6 + $0x3f8] sm:$0xff]
    %v1754 = vld [vmem:[#allocation6 + $0x400] sm:$0xff]
    %v1755 = vld [vmem:[#allocation6 + $0x408] sm:$0xf]
    %v1756 = vld [vmem:[#allocation6 + $0x40c] sm:$0xff]
    %v1757 = vld [vmem:[#allocation6 + $0x414] sm:$0xff]
    %v1758 = vld [vmem:[#allocation6 + $0x41c] sm:$0xff]
    %v1759 = vld [vmem:[#allocation6 + $0x424] sm:$0xf]
    %v1760 = vld [vmem:[#allocation6 + $0x428] sm:$0xff]
    %v1761 = vld [vmem:[#allocation6 + $0x430] sm:$0xff]
    %v1762 = vld [vmem:[#allocation6 + $0x438] sm:$0xff]
    %v1763 = vld [vmem:[#allocation6 + $0x440] sm:$0xf]
    %v1764 = vld [vmem:[#allocation6 + $0x444] sm:$0xff]
    %v1765 = vld [vmem:[#allocation6 + $0x44c] sm:$0xff]
    %v1766 = vld [vmem:[#allocation6 + $0x454] sm:$0xff]
    %v1767 = vld [vmem:[#allocation6 + $0x45c] sm:$0xf]
    %v1768 = vld [vmem:[#allocation6 + $0x460] sm:$0xff]
    %v1769 = vld [vmem:[#allocation6 + $0x468] sm:$0xff]
    %v1770 = vld [vmem:[#allocation6 + $0x470] sm:$0xff]
    %v1771 = vld [vmem:[#allocation6 + $0x478] sm:$0xf]
    %v1772 = vld [vmem:[#allocation6 + $0x47c] sm:$0xff]
    %v1773 = vld [vmem:[#allocation6 + $0x484] sm:$0xff]
    %v1774 = vld [vmem:[#allocation6 + $0x48c] sm:$0xff]
    %v1775 = vld [vmem:[#allocation6 + $0x494] sm:$0xf]
    %v1776 = vld [vmem:[#allocation6 + $0x498] sm:$0xff]
    %v1777 = vld [vmem:[#allocation6 + $0x4a0] sm:$0xff]
    %v1778 = vld [vmem:[#allocation6 + $0x4a8] sm:$0xff]
    %v1779 = vld [vmem:[#allocation6 + $0x4b0] sm:$0xf]
    %v1780 = vld [vmem:[#allocation6 + $0x4b4] sm:$0xff]
    %v1781 = vld [vmem:[#allocation6 + $0x4bc] sm:$0xff]
    %v1782 = vld [vmem:[#allocation6 + $0x4c4] sm:$0xff]
    %v1783 = vld [vmem:[#allocation6 + $0x4cc] sm:$0xf]
    %v1784 = vld [vmem:[#allocation6 + $0x4d0] sm:$0xff]
    %v1785 = vld [vmem:[#allocation6 + $0x4d8] sm:$0xff]
    %v1786 = vld [vmem:[#allocation6 + $0x4e0] sm:$0xff]
    %v1787 = vld [vmem:[#allocation6 + $0x4e8] sm:$0xf]
    %v1788 = vld [vmem:[#allocation6 + $0x4ec] sm:$0xff]
    %v1789 = vld [vmem:[#allocation6 + $0x4f4] sm:$0xff]
    %v1790 = vld [vmem:[#allocation6 + $0x4fc] sm:$0xff]
    %v1791 = vld [vmem:[#allocation6 + $0x504] sm:$0xf]
    %v1792 = vld [vmem:[#allocation6 + $0x508] sm:$0xff]
    %v1793 = vld [vmem:[#allocation6 + $0x510] sm:$0xff]
    %v1794 = vld [vmem:[#allocation6 + $0x518] sm:$0xff]
    %v1795 = vld [vmem:[#allocation6 + $0x520] sm:$0xf]
    %v1796 = vld [vmem:[#allocation6 + $0x524] sm:$0xff]
    %v1797 = vld [vmem:[#allocation6 + $0x52c] sm:$0xff]
    %v1798 = vld [vmem:[#allocation6 + $0x534] sm:$0xff]
    %v1799 = vld [vmem:[#allocation6 + $0x53c] sm:$0xf]
    %v1800 = vld [vmem:[#allocation6 + $0x540] sm:$0xff]
    %v1801 = vld [vmem:[#allocation6 + $0x548] sm:$0xff]
    %v1802 = vld [vmem:[#allocation6 + $0x550] sm:$0xff]
    %v1803 = vld [vmem:[#allocation6 + $0x558] sm:$0xf]
    %v1804 = vld [vmem:[#allocation6 + $0x55c] sm:$0xff]
    %v1805 = vld [vmem:[#allocation6 + $0x564] sm:$0xff]
    %v1806 = vld [vmem:[#allocation6 + $0x56c] sm:$0xff]
    %v1807 = vld [vmem:[#allocation6 + $0x574] sm:$0xf]
    %v1808 = vld [vmem:[#allocation6 + $0x578] sm:$0xff]
    %v1809 = vld [vmem:[#allocation6 + $0x580] sm:$0xff]
    %v1810 = vld [vmem:[#allocation6 + $0x588] sm:$0xff]
    %v1811 = vld [vmem:[#allocation6 + $0x590] sm:$0xf]
    %v1812 = vld [vmem:[#allocation6 + $0x594] sm:$0xff]
    %v1813 = vld [vmem:[#allocation6 + $0x59c] sm:$0xff]
    %v1814 = vld [vmem:[#allocation6 + $0x5a4] sm:$0xff]
    %v1815 = vld [vmem:[#allocation6 + $0x5ac] sm:$0xf]
    %v1816 = vld [vmem:[#allocation6 + $0x5b0] sm:$0xff]
    %v1817 = vld [vmem:[#allocation6 + $0x5b8] sm:$0xff]
    %v1818 = vld [vmem:[#allocation6 + $0x5c0] sm:$0xff]
    %v1819 = vld [vmem:[#allocation6 + $0x5c8] sm:$0xf]
    %v1820 = vld [vmem:[#allocation6 + $0x5cc] sm:$0xff]
    %v1821 = vld [vmem:[#allocation6 + $0x5d4] sm:$0xff]
    %v1822 = vld [vmem:[#allocation6 + $0x5dc] sm:$0xff]
    %v1823 = vld [vmem:[#allocation6 + $0x5e4] sm:$0xf]
    %v1824 = vld [vmem:[#allocation6 + $0x5e8] sm:$0xff]
    %v1825 = vld [vmem:[#allocation6 + $0x5f0] sm:$0xff]
    %v1826 = vld [vmem:[#allocation6 + $0x5f8] sm:$0xff]
    %v1827 = vld [vmem:[#allocation6 + $0x600] sm:$0xf]
    %v1828 = vld [vmem:[#allocation6 + $0x604] sm:$0xff]
    %v1829 = vld [vmem:[#allocation6 + $0x60c] sm:$0xff]
    %v1830 = vld [vmem:[#allocation6 + $0x614] sm:$0xff]
    %v1831 = vld [vmem:[#allocation6 + $0x61c] sm:$0xf]
    %v1832 = vld [vmem:[#allocation6 + $0x620] sm:$0xff]
    %v1833 = vld [vmem:[#allocation6 + $0x628] sm:$0xff]
    %v1834 = vld [vmem:[#allocation6 + $0x630] sm:$0xff]
    %v1835 = vld [vmem:[#allocation6 + $0x638] sm:$0xf]
    %v1836 = vld [vmem:[#allocation6 + $0x63c] sm:$0xff]
    %v1837 = vld [vmem:[#allocation6 + $0x644] sm:$0xff]
    %v1838 = vld [vmem:[#allocation6 + $0x64c] sm:$0xff]
    %v1839 = vld [vmem:[#allocation6 + $0x654] sm:$0xf]
    %v1840 = vld [vmem:[#allocation6 + $0x658] sm:$0xff]
    %v1841 = vld [vmem:[#allocation6 + $0x660] sm:$0xff]
    %v1842 = vld [vmem:[#allocation6 + $0x668] sm:$0xff]
    %v1843 = vld [vmem:[#allocation6 + $0x670] sm:$0xf]
    %v1844 = vld [vmem:[#allocation6 + $0x674] sm:$0xff]
    %v1845 = vld [vmem:[#allocation6 + $0x67c] sm:$0xff]
    %v1846 = vld [vmem:[#allocation6 + $0x684] sm:$0xff]
    %v1847 = vld [vmem:[#allocation6 + $0x68c] sm:$0xf]
    %v1848 = vld [vmem:[#allocation6 + $0x690] sm:$0xff]
    %v1849 = vld [vmem:[#allocation6 + $0x698] sm:$0xff]
    %v1850 = vld [vmem:[#allocation6 + $0x6a0] sm:$0xff]
    %v1851 = vld [vmem:[#allocation6 + $0x6a8] sm:$0xf]
    %v1852 = vld [vmem:[#allocation6 + $0x6ac] sm:$0xff]
    %v1853 = vld [vmem:[#allocation6 + $0x6b4] sm:$0xff]
    %v1854 = vld [vmem:[#allocation6 + $0x6bc] sm:$0xff]
    %v1855 = vld [vmem:[#allocation6 + $0x6c4] sm:$0xf]
    %v1856 = vld [vmem:[#allocation6 + $0x6c8] sm:$0xff]
    %v1857 = vld [vmem:[#allocation6 + $0x6d0] sm:$0xff]
    %v1858 = vld [vmem:[#allocation6 + $0x6d8] sm:$0xff]
    %v1859 = vld [vmem:[#allocation6 + $0x6e0] sm:$0xf]
    %v1860 = vld [vmem:[#allocation6 + $0x6e4] sm:$0xff]
    %v1861 = vld [vmem:[#allocation6 + $0x6ec] sm:$0xff]
    %v1862 = vld [vmem:[#allocation6 + $0x6f4] sm:$0xff]
    %v1863 = vld [vmem:[#allocation6 + $0x6fc] sm:$0xf]
    %v1864 = vld [vmem:[#allocation6 + $0x700] sm:$0xff]
    %v1865 = vld [vmem:[#allocation6 + $0x708] sm:$0xff]
    %v1866 = vld [vmem:[#allocation6 + $0x710] sm:$0xff]
    %v1867 = vld [vmem:[#allocation6 + $0x718] sm:$0xf]
    %v1868 = vld [vmem:[#allocation6 + $0x71c] sm:$0xff]
    %v1869 = vld [vmem:[#allocation6 + $0x724] sm:$0xff]
    %v1870 = vld [vmem:[#allocation6 + $0x72c] sm:$0xff]
    %v1871 = vld [vmem:[#allocation6 + $0x734] sm:$0xf]
    %v1872 = vld [vmem:[#allocation6 + $0x738] sm:$0xff]
    %v1873 = vld [vmem:[#allocation6 + $0x740] sm:$0xff]
    %v1874 = vld [vmem:[#allocation6 + $0x748] sm:$0xff]
    %v1875 = vld [vmem:[#allocation6 + $0x750] sm:$0xf]
    %v1876 = vld [vmem:[#allocation6 + $0x754] sm:$0xff]
    %v1877 = vld [vmem:[#allocation6 + $0x75c] sm:$0xff]
    %v1878 = vld [vmem:[#allocation6 + $0x764] sm:$0xff]
    %v1879 = vld [vmem:[#allocation6 + $0x76c] sm:$0xf]
    %v1880 = vld [vmem:[#allocation6 + $0x770] sm:$0xff]
    %v1881 = vld [vmem:[#allocation6 + $0x778] sm:$0xff]
    %v1882 = vld [vmem:[#allocation6 + $0x780] sm:$0xff]
    %v1883 = vld [vmem:[#allocation6 + $0x788] sm:$0xf]
    %v1884 = vld [vmem:[#allocation6 + $0x78c] sm:$0xff]
    %v1885 = vld [vmem:[#allocation6 + $0x794] sm:$0xff]
    %v1886 = vld [vmem:[#allocation6 + $0x79c] sm:$0xff]
    %v1887 = vld [vmem:[#allocation6 + $0x7a4] sm:$0xf]
    %v1888 = vld [vmem:[#allocation6 + $0x7a8] sm:$0xff]
    %v1889 = vld [vmem:[#allocation6 + $0x7b0] sm:$0xff]
    %v1890 = vld [vmem:[#allocation6 + $0x7b8] sm:$0xff]
    %v1891 = vld [vmem:[#allocation6 + $0x7c0] sm:$0xf]
    %v1892 = vld [vmem:[#allocation6 + $0x7c4] sm:$0xff]
    %v1893 = vld [vmem:[#allocation6 + $0x7cc] sm:$0xff]
    %v1894 = vld [vmem:[#allocation6 + $0x7d4] sm:$0xff]
    %v1895 = vld [vmem:[#allocation6 + $0x7dc] sm:$0xf]
    %v1896 = vld [vmem:[#allocation6 + $0x7e0] sm:$0xff]
    %v1897 = vld [vmem:[#allocation6 + $0x7e8] sm:$0xff]
    %v1898 = vld [vmem:[#allocation6 + $0x7f0] sm:$0xff]
    %v1899 = vld [vmem:[#allocation6 + $0x7f8] sm:$0xf]
    %v1900 = vld [vmem:[#allocation6 + $0x7fc] sm:$0xff]
    %v1901 = vld [vmem:[#allocation6 + $0x804] sm:$0xff]
    %v1902 = vld [vmem:[#allocation6 + $0x80c] sm:$0xff]
    %v1903 = vld [vmem:[#allocation6 + $0x814] sm:$0xf]
    %v1904 = vld [vmem:[#allocation6 + $0x818] sm:$0xff]
    %v1905 = vld [vmem:[#allocation6 + $0x820] sm:$0xff]
    %v1906 = vld [vmem:[#allocation6 + $0x828] sm:$0xff]
    %v1907 = vld [vmem:[#allocation6 + $0x830] sm:$0xf]
    %v1908 = vld [vmem:[#allocation6 + $0x834] sm:$0xff]
    %v1909 = vld [vmem:[#allocation6 + $0x83c] sm:$0xff]
    %v1910 = vld [vmem:[#allocation6 + $0x844] sm:$0xff]
    %v1911 = vld [vmem:[#allocation6 + $0x84c] sm:$0xf]
    %v1912 = vld [vmem:[#allocation6 + $0x850] sm:$0xff]
    %v1913 = vld [vmem:[#allocation6 + $0x858] sm:$0xff]
    %v1914 = vld [vmem:[#allocation6 + $0x860] sm:$0xff]
    %v1915 = vld [vmem:[#allocation6 + $0x868] sm:$0xf]
    %v1916 = vld [vmem:[#allocation6 + $0x86c] sm:$0xff]
    %v1917 = vld [vmem:[#allocation6 + $0x874] sm:$0xff]
    %v1918 = vld [vmem:[#allocation6 + $0x87c] sm:$0xff]
    %v1919 = vld [vmem:[#allocation6 + $0x884] sm:$0xf]
    %v1920 = vld [vmem:[#allocation6 + $0x888] sm:$0xff]
    %v1921 = vld [vmem:[#allocation6 + $0x890] sm:$0xff]
    %v1922 = vld [vmem:[#allocation6 + $0x898] sm:$0xff]
    %v1923 = vld [vmem:[#allocation6 + $0x8a0] sm:$0xf]
    %v1924 = vld [vmem:[#allocation6 + $0x8a4] sm:$0xff]
    %v1925 = vld [vmem:[#allocation6 + $0x8ac] sm:$0xff]
    %v1926 = vld [vmem:[#allocation6 + $0x8b4] sm:$0xff]
    %v1927 = vld [vmem:[#allocation6 + $0x8bc] sm:$0xf]
    %v1928 = vld [vmem:[#allocation6 + $0x8c0] sm:$0xff]
    %v1929 = vld [vmem:[#allocation6 + $0x8c8] sm:$0xff]
    %v1930 = vld [vmem:[#allocation6 + $0x8d0] sm:$0xff]
    %v1931 = vld [vmem:[#allocation6 + $0x8d8] sm:$0xf]
    %v1932 = vld [vmem:[#allocation6 + $0x8dc] sm:$0xff]
    %v1933 = vld [vmem:[#allocation6 + $0x8e4] sm:$0xff]
    %v1934 = vld [vmem:[#allocation6 + $0x8ec] sm:$0xff]
    %v1935 = vld [vmem:[#allocation6 + $0x8f4] sm:$0xf]
    %v1936 = vld [vmem:[#allocation6 + $0x8f8] sm:$0xff]
    %v1937 = vld [vmem:[#allocation6 + $0x900] sm:$0xff]
    %v1938 = vld [vmem:[#allocation6 + $0x908] sm:$0xff]
    %v1939 = vld [vmem:[#allocation6 + $0x910] sm:$0xf]
    %v1940 = vld [vmem:[#allocation6 + $0x914] sm:$0xff]
    %v1941 = vld [vmem:[#allocation6 + $0x91c] sm:$0xff]
    %v1942 = vld [vmem:[#allocation6 + $0x924] sm:$0xff]
    %v1943 = vld [vmem:[#allocation6 + $0x92c] sm:$0xf]
    %v1944 = vld [vmem:[#allocation6 + $0x930] sm:$0xff]
    %v1945 = vld [vmem:[#allocation6 + $0x938] sm:$0xff]
    %v1946 = vld [vmem:[#allocation6 + $0x940] sm:$0xff]
    %v1947 = vld [vmem:[#allocation6 + $0x948] sm:$0xf]
    %v1948 = vld [vmem:[#allocation6 + $0x94c] sm:$0xff]
    %v1949 = vld [vmem:[#allocation6 + $0x954] sm:$0xff]
    %v1950 = vld [vmem:[#allocation6 + $0x95c] sm:$0xff]
    %v1951 = vld [vmem:[#allocation6 + $0x964] sm:$0xf]
    %v1952 = vld [vmem:[#allocation6 + $0x968] sm:$0xff]
    %v1953 = vld [vmem:[#allocation6 + $0x970] sm:$0xff]
    %v1954 = vld [vmem:[#allocation6 + $0x978] sm:$0xff]
    %v1955 = vld [vmem:[#allocation6 + $0x980] sm:$0xf]
    %v1956 = vld [vmem:[#allocation6 + $0x984] sm:$0xff]
    %v1957 = vld [vmem:[#allocation6 + $0x98c] sm:$0xff]
    %v1958 = vld [vmem:[#allocation6 + $0x994] sm:$0xff]
    %v1959 = vld [vmem:[#allocation6 + $0x99c] sm:$0xf]
    %v1960 = vld [vmem:[#allocation6 + $0x9a0] sm:$0xff]
    %v1961 = vld [vmem:[#allocation6 + $0x9a8] sm:$0xff]
    %v1962 = vld [vmem:[#allocation6 + $0x9b0] sm:$0xff]
    %v1963 = vld [vmem:[#allocation6 + $0x9b8] sm:$0xf]
    %v1964 = vld [vmem:[#allocation6 + $0x9bc] sm:$0xff]
    %v1965 = vld [vmem:[#allocation6 + $0x9c4] sm:$0xff]
    %v1966 = vld [vmem:[#allocation6 + $0x9cc] sm:$0xff]
    %v1967 = vld [vmem:[#allocation6 + $0x9d4] sm:$0xf]
    %v1968 = vld [vmem:[#allocation6 + $0x9d8] sm:$0xff]
    %v1969 = vld [vmem:[#allocation6 + $0x9e0] sm:$0xff]
    %v1970 = vld [vmem:[#allocation6 + $0x9e8] sm:$0xff]
    %v1971 = vld [vmem:[#allocation6 + $0x9f0] sm:$0xf]
    %v1972 = vld [vmem:[#allocation6 + $0x9f4] sm:$0xff]
    %v1973 = vld [vmem:[#allocation6 + $0x9fc] sm:$0xff]
    %v1974 = vld [vmem:[#allocation6 + $0xa04] sm:$0xff]
    %v1975 = vld [vmem:[#allocation6 + $0xa0c] sm:$0xf]
    %v1976 = vld [vmem:[#allocation6 + $0xa10] sm:$0xff]
    %v1977 = vld [vmem:[#allocation6 + $0xa18] sm:$0xff]
    %v1978 = vld [vmem:[#allocation6 + $0xa20] sm:$0xff]
    %v1979 = vld [vmem:[#allocation6 + $0xa28] sm:$0xf]
    %v1980 = vld [vmem:[#allocation6 + $0xa2c] sm:$0xff]
    %v1981 = vld [vmem:[#allocation6 + $0xa34] sm:$0xff]
    %v1982 = vld [vmem:[#allocation6 + $0xa3c] sm:$0xff]
    %v1983 = vld [vmem:[#allocation6 + $0xa44] sm:$0xf]
    %v1984 = vld [vmem:[#allocation6 + $0xa48] sm:$0xff]
    %v1985 = vld [vmem:[#allocation6 + $0xa50] sm:$0xff]
    %v1986 = vld [vmem:[#allocation6 + $0xa58] sm:$0xff]
    %v1987 = vld [vmem:[#allocation6 + $0xa60] sm:$0xf]
    %v1988 = vld [vmem:[#allocation6 + $0xa64] sm:$0xff]
    %v1989 = vld [vmem:[#allocation6 + $0xa6c] sm:$0xff]
    %v1990 = vld [vmem:[#allocation6 + $0xa74] sm:$0xff]
    %v1991 = vld [vmem:[#allocation6 + $0xa7c] sm:$0xf]
    %v1992 = vld [vmem:[#allocation6 + $0xa80] sm:$0xff]
    %v1993 = vld [vmem:[#allocation6 + $0xa88] sm:$0xff]
    %v1994 = vld [vmem:[#allocation6 + $0xa90] sm:$0xff]
    %v1995 = vld [vmem:[#allocation6 + $0xa98] sm:$0xf]
    %v1996 = vld [vmem:[#allocation6 + $0xa9c] sm:$0xff]
    %v1997 = vld [vmem:[#allocation6 + $0xaa4] sm:$0xff]
    %v1998 = vld [vmem:[#allocation6 + $0xaac] sm:$0xff]
    %v1999 = vld [vmem:[#allocation6 + $0xab4] sm:$0xf]
    %v2000 = vld [vmem:[#allocation6 + $0xab8] sm:$0xff]
    %v2001 = vld [vmem:[#allocation6 + $0xac0] sm:$0xff]
    %v2002 = vld [vmem:[#allocation6 + $0xac8] sm:$0xff]
    %v2003 = vld [vmem:[#allocation6 + $0xad0] sm:$0xf]
    %v2004 = vld [vmem:[#allocation6 + $0xad4] sm:$0xff]
    %v2005 = vld [vmem:[#allocation6 + $0xadc] sm:$0xff]
    %v2006 = vld [vmem:[#allocation6 + $0xae4] sm:$0xff]
    %v2007 = vld [vmem:[#allocation6 + $0xaec] sm:$0xf]
    %v2008 = vld [vmem:[#allocation6 + $0xaf0] sm:$0xff]
    %v2009 = vld [vmem:[#allocation6 + $0xaf8] sm:$0xff]
    %v2010 = vld [vmem:[#allocation6 + $0xb00] sm:$0xff]
    %v2011 = vld [vmem:[#allocation6 + $0xb08] sm:$0xf]
    %v2012 = vld [vmem:[#allocation6 + $0xb0c] sm:$0xff]
    %v2013 = vld [vmem:[#allocation6 + $0xb14] sm:$0xff]
    %v2014 = vld [vmem:[#allocation6 + $0xb1c] sm:$0xff]
    %v2015 = vld [vmem:[#allocation6 + $0xb24] sm:$0xf]
    %v2016 = vld [vmem:[#allocation6 + $0xb28] sm:$0xff]
    %v2017 = vld [vmem:[#allocation6 + $0xb30] sm:$0xff]
    %v2018 = vld [vmem:[#allocation6 + $0xb38] sm:$0xff]
    %v2019 = vld [vmem:[#allocation6 + $0xb40] sm:$0xf]
    %v2020 = vld [vmem:[#allocation6 + $0xb44] sm:$0xff]
    %v2021 = vld [vmem:[#allocation6 + $0xb4c] sm:$0xff]
    %v2022 = vld [vmem:[#allocation6 + $0xb54] sm:$0xff]
    %v2023 = vld [vmem:[#allocation6 + $0xb5c] sm:$0xf]
    %v2024 = vld [vmem:[#allocation6 + $0xb60] sm:$0xff]
    %v2025 = vld [vmem:[#allocation6 + $0xb68] sm:$0xff]
    %v2026 = vld [vmem:[#allocation6 + $0xb70] sm:$0xff]
    %v2027 = vld [vmem:[#allocation6 + $0xb78] sm:$0xf]
    %v2028 = vld [vmem:[#allocation6 + $0xb7c] sm:$0xff]
    %v2029 = vld [vmem:[#allocation6 + $0xb84] sm:$0xff]
    %v2030 = vld [vmem:[#allocation6 + $0xb8c] sm:$0xff]
    %v2031 = vld [vmem:[#allocation6 + $0xb94] sm:$0xf]
    %v2032 = vld [vmem:[#allocation6 + $0xb98] sm:$0xff]
    %v2033 = vld [vmem:[#allocation6 + $0xba0] sm:$0xff]
    %v2034 = vld [vmem:[#allocation6 + $0xba8] sm:$0xff]
    %v2035 = vld [vmem:[#allocation6 + $0xbb0] sm:$0xf]
    %v2036 = vld [vmem:[#allocation6 + $0xbb4] sm:$0xff]
    %v2037 = vld [vmem:[#allocation6 + $0xbbc] sm:$0xff]
    %v2038 = vld [vmem:[#allocation6 + $0xbc4] sm:$0xff]
    %v2039 = vld [vmem:[#allocation6 + $0xbcc] sm:$0xf]
    %v2040 = vld [vmem:[#allocation6 + $0xbd0] sm:$0xff]
    %v2041 = vld [vmem:[#allocation6 + $0xbd8] sm:$0xff]
    %v2042 = vld [vmem:[#allocation6 + $0xbe0] sm:$0xff]
    %v2043 = vld [vmem:[#allocation6 + $0xbe8] sm:$0xf]
    %v2044 = vld [vmem:[#allocation6 + $0xbec] sm:$0xff]
    %v2045 = vld [vmem:[#allocation6 + $0xbf4] sm:$0xff]
    %v2046 = vld [vmem:[#allocation6 + $0xbfc] sm:$0xff]
    %v2047 = vld [vmem:[#allocation6 + $0xc04] sm:$0xf]
    %v2048 = vld [vmem:[#allocation6 + $0xc08] sm:$0xff]
    %v2049 = vld [vmem:[#allocation6 + $0xc10] sm:$0xff]
    %v2050 = vld [vmem:[#allocation6 + $0xc18] sm:$0xff]
    %v2051 = vld [vmem:[#allocation6 + $0xc20] sm:$0xf]
    %v2052 = vld [vmem:[#allocation6 + $0xc24] sm:$0xff]
    %v2053 = vld [vmem:[#allocation6 + $0xc2c] sm:$0xff]
    %v2054 = vld [vmem:[#allocation6 + $0xc34] sm:$0xff]
    %v2055 = vld [vmem:[#allocation6 + $0xc3c] sm:$0xf]
    %v2056 = vld [vmem:[#allocation7] sm:$0xff]
    %v2058 = vlaneseq
    %v2059 = vshrl.u32 %v2058, 7
    %v2060 = vsub.s32 0, %v2059
    %v2061 = vrot.slane %v2056, %v2060
    %v2062 = vlaneseq
    %v2063 = vshrl.u32 %v2062, 7
    %v2064 = vsub.s32 1, %v2063
    %v2065 = vrot.slane %v2056, %v2064
    %v2066 = vlaneseq
    %v2067 = vshrl.u32 %v2066, 7
    %v2068 = vsub.s32 2, %v2067
    %v2069 = vrot.slane %v2056, %v2068
    %v2070 = vlaneseq
    %v2071 = vshrl.u32 %v2070, 7
    %v2072 = vsub.s32 3, %v2071
    %v2073 = vrot.slane %v2056, %v2072
    %v2074 = vlaneseq
    %v2075 = vshrl.u32 %v2074, 7
    %v2076 = vsub.s32 4, %v2075
    %v2077 = vrot.slane %v2056, %v2076
    %v2078 = vlaneseq
    %v2079 = vshrl.u32 %v2078, 7
    %v2080 = vsub.s32 5, %v2079
    %v2081 = vrot.slane %v2056, %v2080
    %v2082 = vlaneseq
    %v2083 = vshrl.u32 %v2082, 7
    %v2084 = vsub.s32 6, %v2083
    %v2085 = vrot.slane %v2056, %v2084
    %v2541 = vunpack.c.l.b16 %v1608
    %v2542 = vunpack.c.h.b16 %v1608
    %v2543 = vunpack.c.l.b16 %v1609
    %v2544 = vunpack.c.h.b16 %v1609
    %v2545 = vunpack.c.l.b16 %v1610
    %v2546 = vunpack.c.h.b16 %v1610
    %v2547 = vunpack.c.l.b16 %v1611
    %v2548 = vunpack.c.l.b16 %v1612
    %v2549 = vunpack.c.h.b16 %v1612
    %v2550 = vunpack.c.l.b16 %v1613
    %v2551 = vunpack.c.h.b16 %v1613
    %v2552 = vunpack.c.l.b16 %v1614
    %v2553 = vunpack.c.h.b16 %v1614
    %v2554 = vunpack.c.l.b16 %v1615
    %v2555 = vunpack.c.l.b16 %v1616
    %v2556 = vunpack.c.h.b16 %v1616
    %v2557 = vunpack.c.l.b16 %v1617
    %v2558 = vunpack.c.h.b16 %v1617
    %v2559 = vunpack.c.l.b16 %v1618
    %v2560 = vunpack.c.h.b16 %v1618
    %v2561 = vunpack.c.l.b16 %v1619
    %v2562 = vunpack.c.l.b16 %v1620
    %v2563 = vunpack.c.h.b16 %v1620
    %v2564 = vunpack.c.l.b16 %v1621
    %v2565 = vunpack.c.h.b16 %v1621
    %v2566 = vunpack.c.l.b16 %v1622
    %v2567 = vunpack.c.h.b16 %v1622
    %v2568 = vunpack.c.l.b16 %v1623
    %v2569 = vunpack.c.l.b16 %v1624
    %v2570 = vunpack.c.h.b16 %v1624
    %v2571 = vunpack.c.l.b16 %v1625
    %v2572 = vunpack.c.h.b16 %v1625
    %v2573 = vunpack.c.l.b16 %v1626
    %v2574 = vunpack.c.h.b16 %v1626
    %v2575 = vunpack.c.l.b16 %v1627
    %v2576 = vunpack.c.l.b16 %v1628
    %v2577 = vunpack.c.h.b16 %v1628
    %v2578 = vunpack.c.l.b16 %v1629
    %v2579 = vunpack.c.h.b16 %v1629
    %v2580 = vunpack.c.l.b16 %v1630
    %v2581 = vunpack.c.h.b16 %v1630
    %v2582 = vunpack.c.l.b16 %v1631
    %v2583 = vunpack.c.l.b16 %v1632
    %v2584 = vunpack.c.h.b16 %v1632
    %v2585 = vunpack.c.l.b16 %v1633
    %v2586 = vunpack.c.h.b16 %v1633
    %v2587 = vunpack.c.l.b16 %v1634
    %v2588 = vunpack.c.h.b16 %v1634
    %v2589 = vunpack.c.l.b16 %v1635
    %v2590 = vunpack.c.l.b16 %v1636
    %v2591 = vunpack.c.h.b16 %v1636
    %v2592 = vunpack.c.l.b16 %v1637
    %v2593 = vunpack.c.h.b16 %v1637
    %v2594 = vunpack.c.l.b16 %v1638
    %v2595 = vunpack.c.h.b16 %v1638
    %v2596 = vunpack.c.l.b16 %v1639
    %v2597 = vunpack.c.l.b16 %v1640
    %v2598 = vunpack.c.h.b16 %v1640
    %v2599 = vunpack.c.l.b16 %v1641
    %v2600 = vunpack.c.h.b16 %v1641
    %v2601 = vunpack.c.l.b16 %v1642
    %v2602 = vunpack.c.h.b16 %v1642
    %v2603 = vunpack.c.l.b16 %v1643
    %v2604 = vunpack.c.l.b16 %v1644
    %v2605 = vunpack.c.h.b16 %v1644
    %v2606 = vunpack.c.l.b16 %v1645
    %v2607 = vunpack.c.h.b16 %v1645
    %v2608 = vunpack.c.l.b16 %v1646
    %v2609 = vunpack.c.h.b16 %v1646
    %v2610 = vunpack.c.l.b16 %v1647
    %v2611 = vunpack.c.l.b16 %v1648
    %v2612 = vunpack.c.h.b16 %v1648
    %v2613 = vunpack.c.l.b16 %v1649
    %v2614 = vunpack.c.h.b16 %v1649
    %v2615 = vunpack.c.l.b16 %v1650
    %v2616 = vunpack.c.h.b16 %v1650
    %v2617 = vunpack.c.l.b16 %v1651
    %v2618 = vunpack.c.l.b16 %v1652
    %v2619 = vunpack.c.h.b16 %v1652
    %v2620 = vunpack.c.l.b16 %v1653
    %v2621 = vunpack.c.h.b16 %v1653
    %v2622 = vunpack.c.l.b16 %v1654
    %v2623 = vunpack.c.h.b16 %v1654
    %v2624 = vunpack.c.l.b16 %v1655
    %v2625 = vunpack.c.l.b16 %v1656
    %v2626 = vunpack.c.h.b16 %v1656
    %v2627 = vunpack.c.l.b16 %v1657
    %v2628 = vunpack.c.h.b16 %v1657
    %v2629 = vunpack.c.l.b16 %v1658
    %v2630 = vunpack.c.h.b16 %v1658
    %v2631 = vunpack.c.l.b16 %v1659
    %v2632 = vunpack.c.l.b16 %v1660
    %v2633 = vunpack.c.h.b16 %v1660
    %v2634 = vunpack.c.l.b16 %v1661
    %v2635 = vunpack.c.h.b16 %v1661
    %v2636 = vunpack.c.l.b16 %v1662
    %v2637 = vunpack.c.h.b16 %v1662
    %v2638 = vunpack.c.l.b16 %v1663
    %v2639 = vunpack.c.l.b16 %v1664
    %v2640 = vunpack.c.h.b16 %v1664
    %v2641 = vunpack.c.l.b16 %v1665
    %v2642 = vunpack.c.h.b16 %v1665
    %v2643 = vunpack.c.l.b16 %v1666
    %v2644 = vunpack.c.h.b16 %v1666
    %v2645 = vunpack.c.l.b16 %v1667
    %v2646 = vunpack.c.l.b16 %v1668
    %v2647 = vunpack.c.h.b16 %v1668
    %v2648 = vunpack.c.l.b16 %v1669
    %v2649 = vunpack.c.h.b16 %v1669
    %v2650 = vunpack.c.l.b16 %v1670
    %v2651 = vunpack.c.h.b16 %v1670
    %v2652 = vunpack.c.l.b16 %v1671
    %v2653 = vunpack.c.l.b16 %v1672
    %v2654 = vunpack.c.h.b16 %v1672
    %v2655 = vunpack.c.l.b16 %v1673
    %v2656 = vunpack.c.h.b16 %v1673
    %v2657 = vunpack.c.l.b16 %v1674
    %v2658 = vunpack.c.h.b16 %v1674
    %v2659 = vunpack.c.l.b16 %v1675
    %v2660 = vunpack.c.l.b16 %v1676
    %v2661 = vunpack.c.h.b16 %v1676
    %v2662 = vunpack.c.l.b16 %v1677
    %v2663 = vunpack.c.h.b16 %v1677
    %v2664 = vunpack.c.l.b16 %v1678
    %v2665 = vunpack.c.h.b16 %v1678
    %v2666 = vunpack.c.l.b16 %v1679
    %v2667 = vunpack.c.l.b16 %v1680
    %v2668 = vunpack.c.h.b16 %v1680
    %v2669 = vunpack.c.l.b16 %v1681
    %v2670 = vunpack.c.h.b16 %v1681
    %v2671 = vunpack.c.l.b16 %v1682
    %v2672 = vunpack.c.h.b16 %v1682
    %v2673 = vunpack.c.l.b16 %v1683
    %v2674 = vunpack.c.l.b16 %v1684
    %v2675 = vunpack.c.h.b16 %v1684
    %v2676 = vunpack.c.l.b16 %v1685
    %v2677 = vunpack.c.h.b16 %v1685
    %v2678 = vunpack.c.l.b16 %v1686
    %v2679 = vunpack.c.h.b16 %v1686
    %v2680 = vunpack.c.l.b16 %v1687
    %v2681 = vunpack.c.l.b16 %v1688
    %v2682 = vunpack.c.h.b16 %v1688
    %v2683 = vunpack.c.l.b16 %v1689
    %v2684 = vunpack.c.h.b16 %v1689
    %v2685 = vunpack.c.l.b16 %v1690
    %v2686 = vunpack.c.h.b16 %v1690
    %v2687 = vunpack.c.l.b16 %v1691
    %v2688 = vunpack.c.l.b16 %v1692
    %v2689 = vunpack.c.h.b16 %v1692
    %v2690 = vunpack.c.l.b16 %v1693
    %v2691 = vunpack.c.h.b16 %v1693
    %v2692 = vunpack.c.l.b16 %v1694
    %v2693 = vunpack.c.h.b16 %v1694
    %v2694 = vunpack.c.l.b16 %v1695
    %v2695 = vunpack.c.l.b16 %v1696
    %v2696 = vunpack.c.h.b16 %v1696
    %v2697 = vunpack.c.l.b16 %v1697
    %v2698 = vunpack.c.h.b16 %v1697
    %v2699 = vunpack.c.l.b16 %v1698
    %v2700 = vunpack.c.h.b16 %v1698
    %v2701 = vunpack.c.l.b16 %v1699
    %v2702 = vunpack.c.l.b16 %v1700
    %v2703 = vunpack.c.h.b16 %v1700
    %v2704 = vunpack.c.l.b16 %v1701
    %v2705 = vunpack.c.h.b16 %v1701
    %v2706 = vunpack.c.l.b16 %v1702
    %v2707 = vunpack.c.h.b16 %v1702
    %v2708 = vunpack.c.l.b16 %v1703
    %v2709 = vunpack.c.l.b16 %v1704
    %v2710 = vunpack.c.h.b16 %v1704
    %v2711 = vunpack.c.l.b16 %v1705
    %v2712 = vunpack.c.h.b16 %v1705
    %v2713 = vunpack.c.l.b16 %v1706
    %v2714 = vunpack.c.h.b16 %v1706
    %v2715 = vunpack.c.l.b16 %v1707
    %v2716 = vunpack.c.l.b16 %v1708
    %v2717 = vunpack.c.h.b16 %v1708
    %v2718 = vunpack.c.l.b16 %v1709
    %v2719 = vunpack.c.h.b16 %v1709
    %v2720 = vunpack.c.l.b16 %v1710
    %v2721 = vunpack.c.h.b16 %v1710
    %v2722 = vunpack.c.l.b16 %v1711
    %v2723 = vunpack.c.l.b16 %v1712
    %v2724 = vunpack.c.h.b16 %v1712
    %v2725 = vunpack.c.l.b16 %v1713
    %v2726 = vunpack.c.h.b16 %v1713
    %v2727 = vunpack.c.l.b16 %v1714
    %v2728 = vunpack.c.h.b16 %v1714
    %v2729 = vunpack.c.l.b16 %v1715
    %v2730 = vunpack.c.l.b16 %v1716
    %v2731 = vunpack.c.h.b16 %v1716
    %v2732 = vunpack.c.l.b16 %v1717
    %v2733 = vunpack.c.h.b16 %v1717
    %v2734 = vunpack.c.l.b16 %v1718
    %v2735 = vunpack.c.h.b16 %v1718
    %v2736 = vunpack.c.l.b16 %v1719
    %v2737 = vunpack.c.l.b16 %v1720
    %v2738 = vunpack.c.h.b16 %v1720
    %v2739 = vunpack.c.l.b16 %v1721
    %v2740 = vunpack.c.h.b16 %v1721
    %v2741 = vunpack.c.l.b16 %v1722
    %v2742 = vunpack.c.h.b16 %v1722
    %v2743 = vunpack.c.l.b16 %v1723
    %v2744 = vunpack.c.l.b16 %v1724
    %v2745 = vunpack.c.h.b16 %v1724
    %v2746 = vunpack.c.l.b16 %v1725
    %v2747 = vunpack.c.h.b16 %v1725
    %v2748 = vunpack.c.l.b16 %v1726
    %v2749 = vunpack.c.h.b16 %v1726
    %v2750 = vunpack.c.l.b16 %v1727
    %v2751 = vunpack.c.l.b16 %v1728
    %v2752 = vunpack.c.h.b16 %v1728
    %v2753 = vunpack.c.l.b16 %v1729
    %v2754 = vunpack.c.h.b16 %v1729
    %v2755 = vunpack.c.l.b16 %v1730
    %v2756 = vunpack.c.h.b16 %v1730
    %v2757 = vunpack.c.l.b16 %v1731
    %v2758 = vunpack.c.l.b16 %v1732
    %v2759 = vunpack.c.h.b16 %v1732
    %v2760 = vunpack.c.l.b16 %v1733
    %v2761 = vunpack.c.h.b16 %v1733
    %v2762 = vunpack.c.l.b16 %v1734
    %v2763 = vunpack.c.h.b16 %v1734
    %v2764 = vunpack.c.l.b16 %v1735
    %v2765 = vunpack.c.l.b16 %v1736
    %v2766 = vunpack.c.h.b16 %v1736
    %v2767 = vunpack.c.l.b16 %v1737
    %v2768 = vunpack.c.h.b16 %v1737
    %v2769 = vunpack.c.l.b16 %v1738
    %v2770 = vunpack.c.h.b16 %v1738
    %v2771 = vunpack.c.l.b16 %v1739
    %v2772 = vunpack.c.l.b16 %v1740
    %v2773 = vunpack.c.h.b16 %v1740
    %v2774 = vunpack.c.l.b16 %v1741
    %v2775 = vunpack.c.h.b16 %v1741
    %v2776 = vunpack.c.l.b16 %v1742
    %v2777 = vunpack.c.h.b16 %v1742
    %v2778 = vunpack.c.l.b16 %v1743
    %v2779 = vunpack.c.l.b16 %v1744
    %v2780 = vunpack.c.h.b16 %v1744
    %v2781 = vunpack.c.l.b16 %v1745
    %v2782 = vunpack.c.h.b16 %v1745
    %v2783 = vunpack.c.l.b16 %v1746
    %v2784 = vunpack.c.h.b16 %v1746
    %v2785 = vunpack.c.l.b16 %v1747
    %v2786 = vunpack.c.l.b16 %v1748
    %v2787 = vunpack.c.h.b16 %v1748
    %v2788 = vunpack.c.l.b16 %v1749
    %v2789 = vunpack.c.h.b16 %v1749
    %v2790 = vunpack.c.l.b16 %v1750
    %v2791 = vunpack.c.h.b16 %v1750
    %v2792 = vunpack.c.l.b16 %v1751
    %v2793 = vunpack.c.l.b16 %v1752
    %v2794 = vunpack.c.h.b16 %v1752
    %v2795 = vunpack.c.l.b16 %v1753
    %v2796 = vunpack.c.h.b16 %v1753
    %v2797 = vunpack.c.l.b16 %v1754
    %v2798 = vunpack.c.h.b16 %v1754
    %v2799 = vunpack.c.l.b16 %v1755
    %v2800 = vunpack.c.l.b16 %v1756
    %v2801 = vunpack.c.h.b16 %v1756
    %v2802 = vunpack.c.l.b16 %v1757
    %v2803 = vunpack.c.h.b16 %v1757
    %v2804 = vunpack.c.l.b16 %v1758
    %v2805 = vunpack.c.h.b16 %v1758
    %v2806 = vunpack.c.l.b16 %v1759
    %v2807 = vunpack.c.l.b16 %v1760
    %v2808 = vunpack.c.h.b16 %v1760
    %v2809 = vunpack.c.l.b16 %v1761
    %v2810 = vunpack.c.h.b16 %v1761
    %v2811 = vunpack.c.l.b16 %v1762
    %v2812 = vunpack.c.h.b16 %v1762
    %v2813 = vunpack.c.l.b16 %v1763
    %v2814 = vunpack.c.l.b16 %v1764
    %v2815 = vunpack.c.h.b16 %v1764
    %v2816 = vunpack.c.l.b16 %v1765
    %v2817 = vunpack.c.h.b16 %v1765
    %v2818 = vunpack.c.l.b16 %v1766
    %v2819 = vunpack.c.h.b16 %v1766
    %v2820 = vunpack.c.l.b16 %v1767
    %v2821 = vunpack.c.l.b16 %v1768
    %v2822 = vunpack.c.h.b16 %v1768
    %v2823 = vunpack.c.l.b16 %v1769
    %v2824 = vunpack.c.h.b16 %v1769
    %v2825 = vunpack.c.l.b16 %v1770
    %v2826 = vunpack.c.h.b16 %v1770
    %v2827 = vunpack.c.l.b16 %v1771
    %v2828 = vunpack.c.l.b16 %v1772
    %v2829 = vunpack.c.h.b16 %v1772
    %v2830 = vunpack.c.l.b16 %v1773
    %v2831 = vunpack.c.h.b16 %v1773
    %v2832 = vunpack.c.l.b16 %v1774
    %v2833 = vunpack.c.h.b16 %v1774
    %v2834 = vunpack.c.l.b16 %v1775
    %v2835 = vunpack.c.l.b16 %v1776
    %v2836 = vunpack.c.h.b16 %v1776
    %v2837 = vunpack.c.l.b16 %v1777
    %v2838 = vunpack.c.h.b16 %v1777
    %v2839 = vunpack.c.l.b16 %v1778
    %v2840 = vunpack.c.h.b16 %v1778
    %v2841 = vunpack.c.l.b16 %v1779
    %v2842 = vunpack.c.l.b16 %v1780
    %v2843 = vunpack.c.h.b16 %v1780
    %v2844 = vunpack.c.l.b16 %v1781
    %v2845 = vunpack.c.h.b16 %v1781
    %v2846 = vunpack.c.l.b16 %v1782
    %v2847 = vunpack.c.h.b16 %v1782
    %v2848 = vunpack.c.l.b16 %v1783
    %v2849 = vunpack.c.l.b16 %v1784
    %v2850 = vunpack.c.h.b16 %v1784
    %v2851 = vunpack.c.l.b16 %v1785
    %v2852 = vunpack.c.h.b16 %v1785
    %v2853 = vunpack.c.l.b16 %v1786
    %v2854 = vunpack.c.h.b16 %v1786
    %v2855 = vunpack.c.l.b16 %v1787
    %v2856 = vunpack.c.l.b16 %v1788
    %v2857 = vunpack.c.h.b16 %v1788
    %v2858 = vunpack.c.l.b16 %v1789
    %v2859 = vunpack.c.h.b16 %v1789
    %v2860 = vunpack.c.l.b16 %v1790
    %v2861 = vunpack.c.h.b16 %v1790
    %v2862 = vunpack.c.l.b16 %v1791
    %v2863 = vunpack.c.l.b16 %v1792
    %v2864 = vunpack.c.h.b16 %v1792
    %v2865 = vunpack.c.l.b16 %v1793
    %v2866 = vunpack.c.h.b16 %v1793
    %v2867 = vunpack.c.l.b16 %v1794
    %v2868 = vunpack.c.h.b16 %v1794
    %v2869 = vunpack.c.l.b16 %v1795
    %v2870 = vunpack.c.l.b16 %v1796
    %v2871 = vunpack.c.h.b16 %v1796
    %v2872 = vunpack.c.l.b16 %v1797
    %v2873 = vunpack.c.h.b16 %v1797
    %v2874 = vunpack.c.l.b16 %v1798
    %v2875 = vunpack.c.h.b16 %v1798
    %v2876 = vunpack.c.l.b16 %v1799
    %v2877 = vunpack.c.l.b16 %v1800
    %v2878 = vunpack.c.h.b16 %v1800
    %v2879 = vunpack.c.l.b16 %v1801
    %v2880 = vunpack.c.h.b16 %v1801
    %v2881 = vunpack.c.l.b16 %v1802
    %v2882 = vunpack.c.h.b16 %v1802
    %v2883 = vunpack.c.l.b16 %v1803
    %v2884 = vunpack.c.l.b16 %v1804
    %v2885 = vunpack.c.h.b16 %v1804
    %v2886 = vunpack.c.l.b16 %v1805
    %v2887 = vunpack.c.h.b16 %v1805
    %v2888 = vunpack.c.l.b16 %v1806
    %v2889 = vunpack.c.h.b16 %v1806
    %v2890 = vunpack.c.l.b16 %v1807
    %v2891 = vunpack.c.l.b16 %v1808
    %v2892 = vunpack.c.h.b16 %v1808
    %v2893 = vunpack.c.l.b16 %v1809
    %v2894 = vunpack.c.h.b16 %v1809
    %v2895 = vunpack.c.l.b16 %v1810
    %v2896 = vunpack.c.h.b16 %v1810
    %v2897 = vunpack.c.l.b16 %v1811
    %v2898 = vunpack.c.l.b16 %v1812
    %v2899 = vunpack.c.h.b16 %v1812
    %v2900 = vunpack.c.l.b16 %v1813
    %v2901 = vunpack.c.h.b16 %v1813
    %v2902 = vunpack.c.l.b16 %v1814
    %v2903 = vunpack.c.h.b16 %v1814
    %v2904 = vunpack.c.l.b16 %v1815
    %v2905 = vunpack.c.l.b16 %v1816
    %v2906 = vunpack.c.h.b16 %v1816
    %v2907 = vunpack.c.l.b16 %v1817
    %v2908 = vunpack.c.h.b16 %v1817
    %v2909 = vunpack.c.l.b16 %v1818
    %v2910 = vunpack.c.h.b16 %v1818
    %v2911 = vunpack.c.l.b16 %v1819
    %v2912 = vunpack.c.l.b16 %v1820
    %v2913 = vunpack.c.h.b16 %v1820
    %v2914 = vunpack.c.l.b16 %v1821
    %v2915 = vunpack.c.h.b16 %v1821
    %v2916 = vunpack.c.l.b16 %v1822
    %v2917 = vunpack.c.h.b16 %v1822
    %v2918 = vunpack.c.l.b16 %v1823
    %v2919 = vunpack.c.l.b16 %v1824
    %v2920 = vunpack.c.h.b16 %v1824
    %v2921 = vunpack.c.l.b16 %v1825
    %v2922 = vunpack.c.h.b16 %v1825
    %v2923 = vunpack.c.l.b16 %v1826
    %v2924 = vunpack.c.h.b16 %v1826
    %v2925 = vunpack.c.l.b16 %v1827
    %v2926 = vunpack.c.l.b16 %v1828
    %v2927 = vunpack.c.h.b16 %v1828
    %v2928 = vunpack.c.l.b16 %v1829
    %v2929 = vunpack.c.h.b16 %v1829
    %v2930 = vunpack.c.l.b16 %v1830
    %v2931 = vunpack.c.h.b16 %v1830
    %v2932 = vunpack.c.l.b16 %v1831
    %v2933 = vunpack.c.l.b16 %v1832
    %v2934 = vunpack.c.h.b16 %v1832
    %v2935 = vunpack.c.l.b16 %v1833
    %v2936 = vunpack.c.h.b16 %v1833
    %v2937 = vunpack.c.l.b16 %v1834
    %v2938 = vunpack.c.h.b16 %v1834
    %v2939 = vunpack.c.l.b16 %v1835
    %v2940 = vunpack.c.l.b16 %v1836
    %v2941 = vunpack.c.h.b16 %v1836
    %v2942 = vunpack.c.l.b16 %v1837
    %v2943 = vunpack.c.h.b16 %v1837
    %v2944 = vunpack.c.l.b16 %v1838
    %v2945 = vunpack.c.h.b16 %v1838
    %v2946 = vunpack.c.l.b16 %v1839
    %v2947 = vunpack.c.l.b16 %v1840
    %v2948 = vunpack.c.h.b16 %v1840
    %v2949 = vunpack.c.l.b16 %v1841
    %v2950 = vunpack.c.h.b16 %v1841
    %v2951 = vunpack.c.l.b16 %v1842
    %v2952 = vunpack.c.h.b16 %v1842
    %v2953 = vunpack.c.l.b16 %v1843
    %v2954 = vunpack.c.l.b16 %v1844
    %v2955 = vunpack.c.h.b16 %v1844
    %v2956 = vunpack.c.l.b16 %v1845
    %v2957 = vunpack.c.h.b16 %v1845
    %v2958 = vunpack.c.l.b16 %v1846
    %v2959 = vunpack.c.h.b16 %v1846
    %v2960 = vunpack.c.l.b16 %v1847
    %v2961 = vunpack.c.l.b16 %v1848
    %v2962 = vunpack.c.h.b16 %v1848
    %v2963 = vunpack.c.l.b16 %v1849
    %v2964 = vunpack.c.h.b16 %v1849
    %v2965 = vunpack.c.l.b16 %v1850
    %v2966 = vunpack.c.h.b16 %v1850
    %v2967 = vunpack.c.l.b16 %v1851
    %v2968 = vunpack.c.l.b16 %v1852
    %v2969 = vunpack.c.h.b16 %v1852
    %v2970 = vunpack.c.l.b16 %v1853
    %v2971 = vunpack.c.h.b16 %v1853
    %v2972 = vunpack.c.l.b16 %v1854
    %v2973 = vunpack.c.h.b16 %v1854
    %v2974 = vunpack.c.l.b16 %v1855
    %v2975 = vunpack.c.l.b16 %v1856
    %v2976 = vunpack.c.h.b16 %v1856
    %v2977 = vunpack.c.l.b16 %v1857
    %v2978 = vunpack.c.h.b16 %v1857
    %v2979 = vunpack.c.l.b16 %v1858
    %v2980 = vunpack.c.h.b16 %v1858
    %v2981 = vunpack.c.l.b16 %v1859
    %v2982 = vunpack.c.l.b16 %v1860
    %v2983 = vunpack.c.h.b16 %v1860
    %v2984 = vunpack.c.l.b16 %v1861
    %v2985 = vunpack.c.h.b16 %v1861
    %v2986 = vunpack.c.l.b16 %v1862
    %v2987 = vunpack.c.h.b16 %v1862
    %v2988 = vunpack.c.l.b16 %v1863
    %v2989 = vunpack.c.l.b16 %v1864
    %v2990 = vunpack.c.h.b16 %v1864
    %v2991 = vunpack.c.l.b16 %v1865
    %v2992 = vunpack.c.h.b16 %v1865
    %v2993 = vunpack.c.l.b16 %v1866
    %v2994 = vunpack.c.h.b16 %v1866
    %v2995 = vunpack.c.l.b16 %v1867
    %v2996 = vunpack.c.l.b16 %v1868
    %v2997 = vunpack.c.h.b16 %v1868
    %v2998 = vunpack.c.l.b16 %v1869
    %v2999 = vunpack.c.h.b16 %v1869
    %v3000 = vunpack.c.l.b16 %v1870
    %v3001 = vunpack.c.h.b16 %v1870
    %v3002 = vunpack.c.l.b16 %v1871
    %v3003 = vunpack.c.l.b16 %v1872
    %v3004 = vunpack.c.h.b16 %v1872
    %v3005 = vunpack.c.l.b16 %v1873
    %v3006 = vunpack.c.h.b16 %v1873
    %v3007 = vunpack.c.l.b16 %v1874
    %v3008 = vunpack.c.h.b16 %v1874
    %v3009 = vunpack.c.l.b16 %v1875
    %v3010 = vunpack.c.l.b16 %v1876
    %v3011 = vunpack.c.h.b16 %v1876
    %v3012 = vunpack.c.l.b16 %v1877
    %v3013 = vunpack.c.h.b16 %v1877
    %v3014 = vunpack.c.l.b16 %v1878
    %v3015 = vunpack.c.h.b16 %v1878
    %v3016 = vunpack.c.l.b16 %v1879
    %v3017 = vunpack.c.l.b16 %v1880
    %v3018 = vunpack.c.h.b16 %v1880
    %v3019 = vunpack.c.l.b16 %v1881
    %v3020 = vunpack.c.h.b16 %v1881
    %v3021 = vunpack.c.l.b16 %v1882
    %v3022 = vunpack.c.h.b16 %v1882
    %v3023 = vunpack.c.l.b16 %v1883
    %v3024 = vunpack.c.l.b16 %v1884
    %v3025 = vunpack.c.h.b16 %v1884
    %v3026 = vunpack.c.l.b16 %v1885
    %v3027 = vunpack.c.h.b16 %v1885
    %v3028 = vunpack.c.l.b16 %v1886
    %v3029 = vunpack.c.h.b16 %v1886
    %v3030 = vunpack.c.l.b16 %v1887
    %v3031 = vunpack.c.l.b16 %v1888
    %v3032 = vunpack.c.h.b16 %v1888
    %v3033 = vunpack.c.l.b16 %v1889
    %v3034 = vunpack.c.h.b16 %v1889
    %v3035 = vunpack.c.l.b16 %v1890
    %v3036 = vunpack.c.h.b16 %v1890
    %v3037 = vunpack.c.l.b16 %v1891
    %v3038 = vunpack.c.l.b16 %v1892
    %v3039 = vunpack.c.h.b16 %v1892
    %v3040 = vunpack.c.l.b16 %v1893
    %v3041 = vunpack.c.h.b16 %v1893
    %v3042 = vunpack.c.l.b16 %v1894
    %v3043 = vunpack.c.h.b16 %v1894
    %v3044 = vunpack.c.l.b16 %v1895
    %v3045 = vunpack.c.l.b16 %v1896
    %v3046 = vunpack.c.h.b16 %v1896
    %v3047 = vunpack.c.l.b16 %v1897
    %v3048 = vunpack.c.h.b16 %v1897
    %v3049 = vunpack.c.l.b16 %v1898
    %v3050 = vunpack.c.h.b16 %v1898
    %v3051 = vunpack.c.l.b16 %v1899
    %v3052 = vunpack.c.l.b16 %v1900
    %v3053 = vunpack.c.h.b16 %v1900
    %v3054 = vunpack.c.l.b16 %v1901
    %v3055 = vunpack.c.h.b16 %v1901
    %v3056 = vunpack.c.l.b16 %v1902
    %v3057 = vunpack.c.h.b16 %v1902
    %v3058 = vunpack.c.l.b16 %v1903
    %v3059 = vunpack.c.l.b16 %v1904
    %v3060 = vunpack.c.h.b16 %v1904
    %v3061 = vunpack.c.l.b16 %v1905
    %v3062 = vunpack.c.h.b16 %v1905
    %v3063 = vunpack.c.l.b16 %v1906
    %v3064 = vunpack.c.h.b16 %v1906
    %v3065 = vunpack.c.l.b16 %v1907
    %v3066 = vunpack.c.l.b16 %v1908
    %v3067 = vunpack.c.h.b16 %v1908
    %v3068 = vunpack.c.l.b16 %v1909
    %v3069 = vunpack.c.h.b16 %v1909
    %v3070 = vunpack.c.l.b16 %v1910
    %v3071 = vunpack.c.h.b16 %v1910
    %v3072 = vunpack.c.l.b16 %v1911
    %v3073 = vunpack.c.l.b16 %v1912
    %v3074 = vunpack.c.h.b16 %v1912
    %v3075 = vunpack.c.l.b16 %v1913
    %v3076 = vunpack.c.h.b16 %v1913
    %v3077 = vunpack.c.l.b16 %v1914
    %v3078 = vunpack.c.h.b16 %v1914
    %v3079 = vunpack.c.l.b16 %v1915
    %v3080 = vunpack.c.l.b16 %v1916
    %v3081 = vunpack.c.h.b16 %v1916
    %v3082 = vunpack.c.l.b16 %v1917
    %v3083 = vunpack.c.h.b16 %v1917
    %v3084 = vunpack.c.l.b16 %v1918
    %v3085 = vunpack.c.h.b16 %v1918
    %v3086 = vunpack.c.l.b16 %v1919
    %v3087 = vunpack.c.l.b16 %v1920
    %v3088 = vunpack.c.h.b16 %v1920
    %v3089 = vunpack.c.l.b16 %v1921
    %v3090 = vunpack.c.h.b16 %v1921
    %v3091 = vunpack.c.l.b16 %v1922
    %v3092 = vunpack.c.h.b16 %v1922
    %v3093 = vunpack.c.l.b16 %v1923
    %v3094 = vunpack.c.l.b16 %v1924
    %v3095 = vunpack.c.h.b16 %v1924
    %v3096 = vunpack.c.l.b16 %v1925
    %v3097 = vunpack.c.h.b16 %v1925
    %v3098 = vunpack.c.l.b16 %v1926
    %v3099 = vunpack.c.h.b16 %v1926
    %v3100 = vunpack.c.l.b16 %v1927
    %v3101 = vunpack.c.l.b16 %v1928
    %v3102 = vunpack.c.h.b16 %v1928
    %v3103 = vunpack.c.l.b16 %v1929
    %v3104 = vunpack.c.h.b16 %v1929
    %v3105 = vunpack.c.l.b16 %v1930
    %v3106 = vunpack.c.h.b16 %v1930
    %v3107 = vunpack.c.l.b16 %v1931
    %v3108 = vunpack.c.l.b16 %v1932
    %v3109 = vunpack.c.h.b16 %v1932
    %v3110 = vunpack.c.l.b16 %v1933
    %v3111 = vunpack.c.h.b16 %v1933
    %v3112 = vunpack.c.l.b16 %v1934
    %v3113 = vunpack.c.h.b16 %v1934
    %v3114 = vunpack.c.l.b16 %v1935
    %v3115 = vunpack.c.l.b16 %v1936
    %v3116 = vunpack.c.h.b16 %v1936
    %v3117 = vunpack.c.l.b16 %v1937
    %v3118 = vunpack.c.h.b16 %v1937
    %v3119 = vunpack.c.l.b16 %v1938
    %v3120 = vunpack.c.h.b16 %v1938
    %v3121 = vunpack.c.l.b16 %v1939
    %v3122 = vunpack.c.l.b16 %v1940
    %v3123 = vunpack.c.h.b16 %v1940
    %v3124 = vunpack.c.l.b16 %v1941
    %v3125 = vunpack.c.h.b16 %v1941
    %v3126 = vunpack.c.l.b16 %v1942
    %v3127 = vunpack.c.h.b16 %v1942
    %v3128 = vunpack.c.l.b16 %v1943
    %v3129 = vunpack.c.l.b16 %v1944
    %v3130 = vunpack.c.h.b16 %v1944
    %v3131 = vunpack.c.l.b16 %v1945
    %v3132 = vunpack.c.h.b16 %v1945
    %v3133 = vunpack.c.l.b16 %v1946
    %v3134 = vunpack.c.h.b16 %v1946
    %v3135 = vunpack.c.l.b16 %v1947
    %v3136 = vunpack.c.l.b16 %v1948
    %v3137 = vunpack.c.h.b16 %v1948
    %v3138 = vunpack.c.l.b16 %v1949
    %v3139 = vunpack.c.h.b16 %v1949
    %v3140 = vunpack.c.l.b16 %v1950
    %v3141 = vunpack.c.h.b16 %v1950
    %v3142 = vunpack.c.l.b16 %v1951
    %v3143 = vunpack.c.l.b16 %v1952
    %v3144 = vunpack.c.h.b16 %v1952
    %v3145 = vunpack.c.l.b16 %v1953
    %v3146 = vunpack.c.h.b16 %v1953
    %v3147 = vunpack.c.l.b16 %v1954
    %v3148 = vunpack.c.h.b16 %v1954
    %v3149 = vunpack.c.l.b16 %v1955
    %v3150 = vunpack.c.l.b16 %v1956
    %v3151 = vunpack.c.h.b16 %v1956
    %v3152 = vunpack.c.l.b16 %v1957
    %v3153 = vunpack.c.h.b16 %v1957
    %v3154 = vunpack.c.l.b16 %v1958
    %v3155 = vunpack.c.h.b16 %v1958
    %v3156 = vunpack.c.l.b16 %v1959
    %v3157 = vunpack.c.l.b16 %v1960
    %v3158 = vunpack.c.h.b16 %v1960
    %v3159 = vunpack.c.l.b16 %v1961
    %v3160 = vunpack.c.h.b16 %v1961
    %v3161 = vunpack.c.l.b16 %v1962
    %v3162 = vunpack.c.h.b16 %v1962
    %v3163 = vunpack.c.l.b16 %v1963
    %v3164 = vunpack.c.l.b16 %v1964
    %v3165 = vunpack.c.h.b16 %v1964
    %v3166 = vunpack.c.l.b16 %v1965
    %v3167 = vunpack.c.h.b16 %v1965
    %v3168 = vunpack.c.l.b16 %v1966
    %v3169 = vunpack.c.h.b16 %v1966
    %v3170 = vunpack.c.l.b16 %v1967
    %v3171 = vunpack.c.l.b16 %v1968
    %v3172 = vunpack.c.h.b16 %v1968
    %v3173 = vunpack.c.l.b16 %v1969
    %v3174 = vunpack.c.h.b16 %v1969
    %v3175 = vunpack.c.l.b16 %v1970
    %v3176 = vunpack.c.h.b16 %v1970
    %v3177 = vunpack.c.l.b16 %v1971
    %v3178 = vunpack.c.l.b16 %v1972
    %v3179 = vunpack.c.h.b16 %v1972
    %v3180 = vunpack.c.l.b16 %v1973
    %v3181 = vunpack.c.h.b16 %v1973
    %v3182 = vunpack.c.l.b16 %v1974
    %v3183 = vunpack.c.h.b16 %v1974
    %v3184 = vunpack.c.l.b16 %v1975
    %v3185 = vunpack.c.l.b16 %v1976
    %v3186 = vunpack.c.h.b16 %v1976
    %v3187 = vunpack.c.l.b16 %v1977
    %v3188 = vunpack.c.h.b16 %v1977
    %v3189 = vunpack.c.l.b16 %v1978
    %v3190 = vunpack.c.h.b16 %v1978
    %v3191 = vunpack.c.l.b16 %v1979
    %v3192 = vunpack.c.l.b16 %v1980
    %v3193 = vunpack.c.h.b16 %v1980
    %v3194 = vunpack.c.l.b16 %v1981
    %v3195 = vunpack.c.h.b16 %v1981
    %v3196 = vunpack.c.l.b16 %v1982
    %v3197 = vunpack.c.h.b16 %v1982
    %v3198 = vunpack.c.l.b16 %v1983
    %v3199 = vunpack.c.l.b16 %v1984
    %v3200 = vunpack.c.h.b16 %v1984
    %v3201 = vunpack.c.l.b16 %v1985
    %v3202 = vunpack.c.h.b16 %v1985
    %v3203 = vunpack.c.l.b16 %v1986
    %v3204 = vunpack.c.h.b16 %v1986
    %v3205 = vunpack.c.l.b16 %v1987
    %v3206 = vunpack.c.l.b16 %v1988
    %v3207 = vunpack.c.h.b16 %v1988
    %v3208 = vunpack.c.l.b16 %v1989
    %v3209 = vunpack.c.h.b16 %v1989
    %v3210 = vunpack.c.l.b16 %v1990
    %v3211 = vunpack.c.h.b16 %v1990
    %v3212 = vunpack.c.l.b16 %v1991
    %v3213 = vunpack.c.l.b16 %v1992
    %v3214 = vunpack.c.h.b16 %v1992
    %v3215 = vunpack.c.l.b16 %v1993
    %v3216 = vunpack.c.h.b16 %v1993
    %v3217 = vunpack.c.l.b16 %v1994
    %v3218 = vunpack.c.h.b16 %v1994
    %v3219 = vunpack.c.l.b16 %v1995
    %v3220 = vunpack.c.l.b16 %v1996
    %v3221 = vunpack.c.h.b16 %v1996
    %v3222 = vunpack.c.l.b16 %v1997
    %v3223 = vunpack.c.h.b16 %v1997
    %v3224 = vunpack.c.l.b16 %v1998
    %v3225 = vunpack.c.h.b16 %v1998
    %v3226 = vunpack.c.l.b16 %v1999
    %v3227 = vunpack.c.l.b16 %v2000
    %v3228 = vunpack.c.h.b16 %v2000
    %v3229 = vunpack.c.l.b16 %v2001
    %v3230 = vunpack.c.h.b16 %v2001
    %v3231 = vunpack.c.l.b16 %v2002
    %v3232 = vunpack.c.h.b16 %v2002
    %v3233 = vunpack.c.l.b16 %v2003
    %v3234 = vunpack.c.l.b16 %v2004
    %v3235 = vunpack.c.h.b16 %v2004
    %v3236 = vunpack.c.l.b16 %v2005
    %v3237 = vunpack.c.h.b16 %v2005
    %v3238 = vunpack.c.l.b16 %v2006
    %v3239 = vunpack.c.h.b16 %v2006
    %v3240 = vunpack.c.l.b16 %v2007
    %v3241 = vunpack.c.l.b16 %v2008
    %v3242 = vunpack.c.h.b16 %v2008
    %v3243 = vunpack.c.l.b16 %v2009
    %v3244 = vunpack.c.h.b16 %v2009
    %v3245 = vunpack.c.l.b16 %v2010
    %v3246 = vunpack.c.h.b16 %v2010
    %v3247 = vunpack.c.l.b16 %v2011
    %v3248 = vunpack.c.l.b16 %v2012
    %v3249 = vunpack.c.h.b16 %v2012
    %v3250 = vunpack.c.l.b16 %v2013
    %v3251 = vunpack.c.h.b16 %v2013
    %v3252 = vunpack.c.l.b16 %v2014
    %v3253 = vunpack.c.h.b16 %v2014
    %v3254 = vunpack.c.l.b16 %v2015
    %v3255 = vunpack.c.l.b16 %v2016
    %v3256 = vunpack.c.h.b16 %v2016
    %v3257 = vunpack.c.l.b16 %v2017
    %v3258 = vunpack.c.h.b16 %v2017
    %v3259 = vunpack.c.l.b16 %v2018
    %v3260 = vunpack.c.h.b16 %v2018
    %v3261 = vunpack.c.l.b16 %v2019
    %v3262 = vunpack.c.l.b16 %v2020
    %v3263 = vunpack.c.h.b16 %v2020
    %v3264 = vunpack.c.l.b16 %v2021
    %v3265 = vunpack.c.h.b16 %v2021
    %v3266 = vunpack.c.l.b16 %v2022
    %v3267 = vunpack.c.h.b16 %v2022
    %v3268 = vunpack.c.l.b16 %v2023
    %v3269 = vunpack.c.l.b16 %v2024
    %v3270 = vunpack.c.h.b16 %v2024
    %v3271 = vunpack.c.l.b16 %v2025
    %v3272 = vunpack.c.h.b16 %v2025
    %v3273 = vunpack.c.l.b16 %v2026
    %v3274 = vunpack.c.h.b16 %v2026
    %v3275 = vunpack.c.l.b16 %v2027
    %v3276 = vunpack.c.l.b16 %v2028
    %v3277 = vunpack.c.h.b16 %v2028
    %v3278 = vunpack.c.l.b16 %v2029
    %v3279 = vunpack.c.h.b16 %v2029
    %v3280 = vunpack.c.l.b16 %v2030
    %v3281 = vunpack.c.h.b16 %v2030
    %v3282 = vunpack.c.l.b16 %v2031
    %v3283 = vunpack.c.l.b16 %v2032
    %v3284 = vunpack.c.h.b16 %v2032
    %v3285 = vunpack.c.l.b16 %v2033
    %v3286 = vunpack.c.h.b16 %v2033
    %v3287 = vunpack.c.l.b16 %v2034
    %v3288 = vunpack.c.h.b16 %v2034
    %v3289 = vunpack.c.l.b16 %v2035
    %v3290 = vunpack.c.l.b16 %v2036
    %v3291 = vunpack.c.h.b16 %v2036
    %v3292 = vunpack.c.l.b16 %v2037
    %v3293 = vunpack.c.h.b16 %v2037
    %v3294 = vunpack.c.l.b16 %v2038
    %v3295 = vunpack.c.h.b16 %v2038
    %v3296 = vunpack.c.l.b16 %v2039
    %v3297 = vunpack.c.l.b16 %v2040
    %v3298 = vunpack.c.h.b16 %v2040
    %v3299 = vunpack.c.l.b16 %v2041
    %v3300 = vunpack.c.h.b16 %v2041
    %v3301 = vunpack.c.l.b16 %v2042
    %v3302 = vunpack.c.h.b16 %v2042
    %v3303 = vunpack.c.l.b16 %v2043
    %v3304 = vunpack.c.l.b16 %v2044
    %v3305 = vunpack.c.h.b16 %v2044
    %v3306 = vunpack.c.l.b16 %v2045
    %v3307 = vunpack.c.h.b16 %v2045
    %v3308 = vunpack.c.l.b16 %v2046
    %v3309 = vunpack.c.h.b16 %v2046
    %v3310 = vunpack.c.l.b16 %v2047
    %v3311 = vunpack.c.l.b16 %v2048
    %v3312 = vunpack.c.h.b16 %v2048
    %v3313 = vunpack.c.l.b16 %v2049
    %v3314 = vunpack.c.h.b16 %v2049
    %v3315 = vunpack.c.l.b16 %v2050
    %v3316 = vunpack.c.h.b16 %v2050
    %v3317 = vunpack.c.l.b16 %v2051
    %v3318 = vunpack.c.l.b16 %v2052
    %v3319 = vunpack.c.h.b16 %v2052
    %v3320 = vunpack.c.l.b16 %v2053
    %v3321 = vunpack.c.h.b16 %v2053
    %v3322 = vunpack.c.l.b16 %v2054
    %v3323 = vunpack.c.h.b16 %v2054
    %v3324 = vunpack.c.l.b16 %v2055
    %v3325 = vpack.c.b16 %v2548, %v2541
    %v3326 = vpack.c.b16 %v2549, %v2542
    %v3327 = vpack.c.b16 %v2550, %v2543
    %v3328 = vpack.c.b16 %v2551, %v2544
    %v3329 = vpack.c.b16 %v2552, %v2545
    %v3330 = vpack.c.b16 %v2553, %v2546
    %v3331 = vpack.c.b16 %v2554, %v2547
    %v3332 = vpack.c.b16 %v2562, %v2555
    %v3333 = vpack.c.b16 %v2563, %v2556
    %v3334 = vpack.c.b16 %v2564, %v2557
    %v3335 = vpack.c.b16 %v2565, %v2558
    %v3336 = vpack.c.b16 %v2566, %v2559
    %v3337 = vpack.c.b16 %v2567, %v2560
    %v3338 = vpack.c.b16 %v2568, %v2561
    %v3339 = vpack.c.b16 %v2576, %v2569
    %v3340 = vpack.c.b16 %v2577, %v2570
    %v3341 = vpack.c.b16 %v2578, %v2571
    %v3342 = vpack.c.b16 %v2579, %v2572
    %v3343 = vpack.c.b16 %v2580, %v2573
    %v3344 = vpack.c.b16 %v2581, %v2574
    %v3345 = vpack.c.b16 %v2582, %v2575
    %v3346 = vpack.c.b16 %v2590, %v2583
    %v3347 = vpack.c.b16 %v2591, %v2584
    %v3348 = vpack.c.b16 %v2592, %v2585
    %v3349 = vpack.c.b16 %v2593, %v2586
    %v3350 = vpack.c.b16 %v2594, %v2587
    %v3351 = vpack.c.b16 %v2595, %v2588
    %v3352 = vpack.c.b16 %v2596, %v2589
    %v3353 = vpack.c.b16 %v2604, %v2597
    %v3354 = vpack.c.b16 %v2605, %v2598
    %v3355 = vpack.c.b16 %v2606, %v2599
    %v3356 = vpack.c.b16 %v2607, %v2600
    %v3357 = vpack.c.b16 %v2608, %v2601
    %v3358 = vpack.c.b16 %v2609, %v2602
    %v3359 = vpack.c.b16 %v2610, %v2603
    %v3360 = vpack.c.b16 %v2618, %v2611
    %v3361 = vpack.c.b16 %v2619, %v2612
    %v3362 = vpack.c.b16 %v2620, %v2613
    %v3363 = vpack.c.b16 %v2621, %v2614
    %v3364 = vpack.c.b16 %v2622, %v2615
    %v3365 = vpack.c.b16 %v2623, %v2616
    %v3366 = vpack.c.b16 %v2624, %v2617
    %v3367 = vpack.c.b16 %v2632, %v2625
    %v3368 = vpack.c.b16 %v2633, %v2626
    %v3369 = vpack.c.b16 %v2634, %v2627
    %v3370 = vpack.c.b16 %v2635, %v2628
    %v3371 = vpack.c.b16 %v2636, %v2629
    %v3372 = vpack.c.b16 %v2637, %v2630
    %v3373 = vpack.c.b16 %v2638, %v2631
    %v3374 = vpack.c.b16 %v2646, %v2639
    %v3375 = vpack.c.b16 %v2647, %v2640
    %v3376 = vpack.c.b16 %v2648, %v2641
    %v3377 = vpack.c.b16 %v2649, %v2642
    %v3378 = vpack.c.b16 %v2650, %v2643
    %v3379 = vpack.c.b16 %v2651, %v2644
    %v3380 = vpack.c.b16 %v2652, %v2645
    %v3381 = vpack.c.b16 %v2660, %v2653
    %v3382 = vpack.c.b16 %v2661, %v2654
    %v3383 = vpack.c.b16 %v2662, %v2655
    %v3384 = vpack.c.b16 %v2663, %v2656
    %v3385 = vpack.c.b16 %v2664, %v2657
    %v3386 = vpack.c.b16 %v2665, %v2658
    %v3387 = vpack.c.b16 %v2666, %v2659
    %v3388 = vpack.c.b16 %v2674, %v2667
    %v3389 = vpack.c.b16 %v2675, %v2668
    %v3390 = vpack.c.b16 %v2676, %v2669
    %v3391 = vpack.c.b16 %v2677, %v2670
    %v3392 = vpack.c.b16 %v2678, %v2671
    %v3393 = vpack.c.b16 %v2679, %v2672
    %v3394 = vpack.c.b16 %v2680, %v2673
    %v3395 = vpack.c.b16 %v2688, %v2681
    %v3396 = vpack.c.b16 %v2689, %v2682
    %v3397 = vpack.c.b16 %v2690, %v2683
    %v3398 = vpack.c.b16 %v2691, %v2684
    %v3399 = vpack.c.b16 %v2692, %v2685
    %v3400 = vpack.c.b16 %v2693, %v2686
    %v3401 = vpack.c.b16 %v2694, %v2687
    %v3402 = vpack.c.b16 %v2702, %v2695
    %v3403 = vpack.c.b16 %v2703, %v2696
    %v3404 = vpack.c.b16 %v2704, %v2697
    %v3405 = vpack.c.b16 %v2705, %v2698
    %v3406 = vpack.c.b16 %v2706, %v2699
    %v3407 = vpack.c.b16 %v2707, %v2700
    %v3408 = vpack.c.b16 %v2708, %v2701
    %v3409 = vpack.c.b16 %v2716, %v2709
    %v3410 = vpack.c.b16 %v2717, %v2710
    %v3411 = vpack.c.b16 %v2718, %v2711
    %v3412 = vpack.c.b16 %v2719, %v2712
    %v3413 = vpack.c.b16 %v2720, %v2713
    %v3414 = vpack.c.b16 %v2721, %v2714
    %v3415 = vpack.c.b16 %v2722, %v2715
    %v3416 = vpack.c.b16 %v2730, %v2723
    %v3417 = vpack.c.b16 %v2731, %v2724
    %v3418 = vpack.c.b16 %v2732, %v2725
    %v3419 = vpack.c.b16 %v2733, %v2726
    %v3420 = vpack.c.b16 %v2734, %v2727
    %v3421 = vpack.c.b16 %v2735, %v2728
    %v3422 = vpack.c.b16 %v2736, %v2729
    %v3423 = vpack.c.b16 %v2744, %v2737
    %v3424 = vpack.c.b16 %v2745, %v2738
    %v3425 = vpack.c.b16 %v2746, %v2739
    %v3426 = vpack.c.b16 %v2747, %v2740
    %v3427 = vpack.c.b16 %v2748, %v2741
    %v3428 = vpack.c.b16 %v2749, %v2742
    %v3429 = vpack.c.b16 %v2750, %v2743
    %v3430 = vpack.c.b16 %v2758, %v2751
    %v3431 = vpack.c.b16 %v2759, %v2752
    %v3432 = vpack.c.b16 %v2760, %v2753
    %v3433 = vpack.c.b16 %v2761, %v2754
    %v3434 = vpack.c.b16 %v2762, %v2755
    %v3435 = vpack.c.b16 %v2763, %v2756
    %v3436 = vpack.c.b16 %v2764, %v2757
    %v3437 = vpack.c.b16 %v2772, %v2765
    %v3438 = vpack.c.b16 %v2773, %v2766
    %v3439 = vpack.c.b16 %v2774, %v2767
    %v3440 = vpack.c.b16 %v2775, %v2768
    %v3441 = vpack.c.b16 %v2776, %v2769
    %v3442 = vpack.c.b16 %v2777, %v2770
    %v3443 = vpack.c.b16 %v2778, %v2771
    %v3444 = vpack.c.b16 %v2786, %v2779
    %v3445 = vpack.c.b16 %v2787, %v2780
    %v3446 = vpack.c.b16 %v2788, %v2781
    %v3447 = vpack.c.b16 %v2789, %v2782
    %v3448 = vpack.c.b16 %v2790, %v2783
    %v3449 = vpack.c.b16 %v2791, %v2784
    %v3450 = vpack.c.b16 %v2792, %v2785
    %v3451 = vpack.c.b16 %v2800, %v2793
    %v3452 = vpack.c.b16 %v2801, %v2794
    %v3453 = vpack.c.b16 %v2802, %v2795
    %v3454 = vpack.c.b16 %v2803, %v2796
    %v3455 = vpack.c.b16 %v2804, %v2797
    %v3456 = vpack.c.b16 %v2805, %v2798
    %v3457 = vpack.c.b16 %v2806, %v2799
    %v3458 = vpack.c.b16 %v2814, %v2807
    %v3459 = vpack.c.b16 %v2815, %v2808
    %v3460 = vpack.c.b16 %v2816, %v2809
    %v3461 = vpack.c.b16 %v2817, %v2810
    %v3462 = vpack.c.b16 %v2818, %v2811
    %v3463 = vpack.c.b16 %v2819, %v2812
    %v3464 = vpack.c.b16 %v2820, %v2813
    %v3465 = vpack.c.b16 %v2828, %v2821
    %v3466 = vpack.c.b16 %v2829, %v2822
    %v3467 = vpack.c.b16 %v2830, %v2823
    %v3468 = vpack.c.b16 %v2831, %v2824
    %v3469 = vpack.c.b16 %v2832, %v2825
    %v3470 = vpack.c.b16 %v2833, %v2826
    %v3471 = vpack.c.b16 %v2834, %v2827
    %v3472 = vpack.c.b16 %v2842, %v2835
    %v3473 = vpack.c.b16 %v2843, %v2836
    %v3474 = vpack.c.b16 %v2844, %v2837
    %v3475 = vpack.c.b16 %v2845, %v2838
    %v3476 = vpack.c.b16 %v2846, %v2839
    %v3477 = vpack.c.b16 %v2847, %v2840
    %v3478 = vpack.c.b16 %v2848, %v2841
    %v3479 = vpack.c.b16 %v2856, %v2849
    %v3480 = vpack.c.b16 %v2857, %v2850
    %v3481 = vpack.c.b16 %v2858, %v2851
    %v3482 = vpack.c.b16 %v2859, %v2852
    %v3483 = vpack.c.b16 %v2860, %v2853
    %v3484 = vpack.c.b16 %v2861, %v2854
    %v3485 = vpack.c.b16 %v2862, %v2855
    %v3486 = vpack.c.b16 %v2870, %v2863
    %v3487 = vpack.c.b16 %v2871, %v2864
    %v3488 = vpack.c.b16 %v2872, %v2865
    %v3489 = vpack.c.b16 %v2873, %v2866
    %v3490 = vpack.c.b16 %v2874, %v2867
    %v3491 = vpack.c.b16 %v2875, %v2868
    %v3492 = vpack.c.b16 %v2876, %v2869
    %v3493 = vpack.c.b16 %v2884, %v2877
    %v3494 = vpack.c.b16 %v2885, %v2878
    %v3495 = vpack.c.b16 %v2886, %v2879
    %v3496 = vpack.c.b16 %v2887, %v2880
    %v3497 = vpack.c.b16 %v2888, %v2881
    %v3498 = vpack.c.b16 %v2889, %v2882
    %v3499 = vpack.c.b16 %v2890, %v2883
    %v3500 = vpack.c.b16 %v2898, %v2891
    %v3501 = vpack.c.b16 %v2899, %v2892
    %v3502 = vpack.c.b16 %v2900, %v2893
    %v3503 = vpack.c.b16 %v2901, %v2894
    %v3504 = vpack.c.b16 %v2902, %v2895
    %v3505 = vpack.c.b16 %v2903, %v2896
    %v3506 = vpack.c.b16 %v2904, %v2897
    %v3507 = vpack.c.b16 %v2912, %v2905
    %v3508 = vpack.c.b16 %v2913, %v2906
    %v3509 = vpack.c.b16 %v2914, %v2907
    %v3510 = vpack.c.b16 %v2915, %v2908
    %v3511 = vpack.c.b16 %v2916, %v2909
    %v3512 = vpack.c.b16 %v2917, %v2910
    %v3513 = vpack.c.b16 %v2918, %v2911
    %v3514 = vpack.c.b16 %v2926, %v2919
    %v3515 = vpack.c.b16 %v2927, %v2920
    %v3516 = vpack.c.b16 %v2928, %v2921
    %v3517 = vpack.c.b16 %v2929, %v2922
    %v3518 = vpack.c.b16 %v2930, %v2923
    %v3519 = vpack.c.b16 %v2931, %v2924
    %v3520 = vpack.c.b16 %v2932, %v2925
    %v3521 = vpack.c.b16 %v2940, %v2933
    %v3522 = vpack.c.b16 %v2941, %v2934
    %v3523 = vpack.c.b16 %v2942, %v2935
    %v3524 = vpack.c.b16 %v2943, %v2936
    %v3525 = vpack.c.b16 %v2944, %v2937
    %v3526 = vpack.c.b16 %v2945, %v2938
    %v3527 = vpack.c.b16 %v2946, %v2939
    %v3528 = vpack.c.b16 %v2954, %v2947
    %v3529 = vpack.c.b16 %v2955, %v2948
    %v3530 = vpack.c.b16 %v2956, %v2949
    %v3531 = vpack.c.b16 %v2957, %v2950
    %v3532 = vpack.c.b16 %v2958, %v2951
    %v3533 = vpack.c.b16 %v2959, %v2952
    %v3534 = vpack.c.b16 %v2960, %v2953
    %v3535 = vpack.c.b16 %v2968, %v2961
    %v3536 = vpack.c.b16 %v2969, %v2962
    %v3537 = vpack.c.b16 %v2970, %v2963
    %v3538 = vpack.c.b16 %v2971, %v2964
    %v3539 = vpack.c.b16 %v2972, %v2965
    %v3540 = vpack.c.b16 %v2973, %v2966
    %v3541 = vpack.c.b16 %v2974, %v2967
    %v3542 = vpack.c.b16 %v2982, %v2975
    %v3543 = vpack.c.b16 %v2983, %v2976
    %v3544 = vpack.c.b16 %v2984, %v2977
    %v3545 = vpack.c.b16 %v2985, %v2978
    %v3546 = vpack.c.b16 %v2986, %v2979
    %v3547 = vpack.c.b16 %v2987, %v2980
    %v3548 = vpack.c.b16 %v2988, %v2981
    %v3549 = vpack.c.b16 %v2996, %v2989
    %v3550 = vpack.c.b16 %v2997, %v2990
    %v3551 = vpack.c.b16 %v2998, %v2991
    %v3552 = vpack.c.b16 %v2999, %v2992
    %v3553 = vpack.c.b16 %v3000, %v2993
    %v3554 = vpack.c.b16 %v3001, %v2994
    %v3555 = vpack.c.b16 %v3002, %v2995
    %v3556 = vpack.c.b16 %v3010, %v3003
    %v3557 = vpack.c.b16 %v3011, %v3004
    %v3558 = vpack.c.b16 %v3012, %v3005
    %v3559 = vpack.c.b16 %v3013, %v3006
    %v3560 = vpack.c.b16 %v3014, %v3007
    %v3561 = vpack.c.b16 %v3015, %v3008
    %v3562 = vpack.c.b16 %v3016, %v3009
    %v3563 = vpack.c.b16 %v3024, %v3017
    %v3564 = vpack.c.b16 %v3025, %v3018
    %v3565 = vpack.c.b16 %v3026, %v3019
    %v3566 = vpack.c.b16 %v3027, %v3020
    %v3567 = vpack.c.b16 %v3028, %v3021
    %v3568 = vpack.c.b16 %v3029, %v3022
    %v3569 = vpack.c.b16 %v3030, %v3023
    %v3570 = vpack.c.b16 %v3038, %v3031
    %v3571 = vpack.c.b16 %v3039, %v3032
    %v3572 = vpack.c.b16 %v3040, %v3033
    %v3573 = vpack.c.b16 %v3041, %v3034
    %v3574 = vpack.c.b16 %v3042, %v3035
    %v3575 = vpack.c.b16 %v3043, %v3036
    %v3576 = vpack.c.b16 %v3044, %v3037
    %v3577 = vpack.c.b16 %v3052, %v3045
    %v3578 = vpack.c.b16 %v3053, %v3046
    %v3579 = vpack.c.b16 %v3054, %v3047
    %v3580 = vpack.c.b16 %v3055, %v3048
    %v3581 = vpack.c.b16 %v3056, %v3049
    %v3582 = vpack.c.b16 %v3057, %v3050
    %v3583 = vpack.c.b16 %v3058, %v3051
    %v3584 = vpack.c.b16 %v3066, %v3059
    %v3585 = vpack.c.b16 %v3067, %v3060
    %v3586 = vpack.c.b16 %v3068, %v3061
    %v3587 = vpack.c.b16 %v3069, %v3062
    %v3588 = vpack.c.b16 %v3070, %v3063
    %v3589 = vpack.c.b16 %v3071, %v3064
    %v3590 = vpack.c.b16 %v3072, %v3065
    %v3591 = vpack.c.b16 %v3080, %v3073
    %v3592 = vpack.c.b16 %v3081, %v3074
    %v3593 = vpack.c.b16 %v3082, %v3075
    %v3594 = vpack.c.b16 %v3083, %v3076
    %v3595 = vpack.c.b16 %v3084, %v3077
    %v3596 = vpack.c.b16 %v3085, %v3078
    %v3597 = vpack.c.b16 %v3086, %v3079
    %v3598 = vpack.c.b16 %v3094, %v3087
    %v3599 = vpack.c.b16 %v3095, %v3088
    %v3600 = vpack.c.b16 %v3096, %v3089
    %v3601 = vpack.c.b16 %v3097, %v3090
    %v3602 = vpack.c.b16 %v3098, %v3091
    %v3603 = vpack.c.b16 %v3099, %v3092
    %v3604 = vpack.c.b16 %v3100, %v3093
    %v3605 = vpack.c.b16 %v3108, %v3101
    %v3606 = vpack.c.b16 %v3109, %v3102
    %v3607 = vpack.c.b16 %v3110, %v3103
    %v3608 = vpack.c.b16 %v3111, %v3104
    %v3609 = vpack.c.b16 %v3112, %v3105
    %v3610 = vpack.c.b16 %v3113, %v3106
    %v3611 = vpack.c.b16 %v3114, %v3107
    %v3612 = vpack.c.b16 %v3122, %v3115
    %v3613 = vpack.c.b16 %v3123, %v3116
    %v3614 = vpack.c.b16 %v3124, %v3117
    %v3615 = vpack.c.b16 %v3125, %v3118
    %v3616 = vpack.c.b16 %v3126, %v3119
    %v3617 = vpack.c.b16 %v3127, %v3120
    %v3618 = vpack.c.b16 %v3128, %v3121
    %v3619 = vpack.c.b16 %v3136, %v3129
    %v3620 = vpack.c.b16 %v3137, %v3130
    %v3621 = vpack.c.b16 %v3138, %v3131
    %v3622 = vpack.c.b16 %v3139, %v3132
    %v3623 = vpack.c.b16 %v3140, %v3133
    %v3624 = vpack.c.b16 %v3141, %v3134
    %v3625 = vpack.c.b16 %v3142, %v3135
    %v3626 = vpack.c.b16 %v3150, %v3143
    %v3627 = vpack.c.b16 %v3151, %v3144
    %v3628 = vpack.c.b16 %v3152, %v3145
    %v3629 = vpack.c.b16 %v3153, %v3146
    %v3630 = vpack.c.b16 %v3154, %v3147
    %v3631 = vpack.c.b16 %v3155, %v3148
    %v3632 = vpack.c.b16 %v3156, %v3149
    %v3633 = vpack.c.b16 %v3164, %v3157
    %v3634 = vpack.c.b16 %v3165, %v3158
    %v3635 = vpack.c.b16 %v3166, %v3159
    %v3636 = vpack.c.b16 %v3167, %v3160
    %v3637 = vpack.c.b16 %v3168, %v3161
    %v3638 = vpack.c.b16 %v3169, %v3162
    %v3639 = vpack.c.b16 %v3170, %v3163
    %v3640 = vpack.c.b16 %v3178, %v3171
    %v3641 = vpack.c.b16 %v3179, %v3172
    %v3642 = vpack.c.b16 %v3180, %v3173
    %v3643 = vpack.c.b16 %v3181, %v3174
    %v3644 = vpack.c.b16 %v3182, %v3175
    %v3645 = vpack.c.b16 %v3183, %v3176
    %v3646 = vpack.c.b16 %v3184, %v3177
    %v3647 = vpack.c.b16 %v3192, %v3185
    %v3648 = vpack.c.b16 %v3193, %v3186
    %v3649 = vpack.c.b16 %v3194, %v3187
    %v3650 = vpack.c.b16 %v3195, %v3188
    %v3651 = vpack.c.b16 %v3196, %v3189
    %v3652 = vpack.c.b16 %v3197, %v3190
    %v3653 = vpack.c.b16 %v3198, %v3191
    %v3654 = vpack.c.b16 %v3206, %v3199
    %v3655 = vpack.c.b16 %v3207, %v3200
    %v3656 = vpack.c.b16 %v3208, %v3201
    %v3657 = vpack.c.b16 %v3209, %v3202
    %v3658 = vpack.c.b16 %v3210, %v3203
    %v3659 = vpack.c.b16 %v3211, %v3204
    %v3660 = vpack.c.b16 %v3212, %v3205
    %v3661 = vpack.c.b16 %v3220, %v3213
    %v3662 = vpack.c.b16 %v3221, %v3214
    %v3663 = vpack.c.b16 %v3222, %v3215
    %v3664 = vpack.c.b16 %v3223, %v3216
    %v3665 = vpack.c.b16 %v3224, %v3217
    %v3666 = vpack.c.b16 %v3225, %v3218
    %v3667 = vpack.c.b16 %v3226, %v3219
    %v3668 = vpack.c.b16 %v3234, %v3227
    %v3669 = vpack.c.b16 %v3235, %v3228
    %v3670 = vpack.c.b16 %v3236, %v3229
    %v3671 = vpack.c.b16 %v3237, %v3230
    %v3672 = vpack.c.b16 %v3238, %v3231
    %v3673 = vpack.c.b16 %v3239, %v3232
    %v3674 = vpack.c.b16 %v3240, %v3233
    %v3675 = vpack.c.b16 %v3248, %v3241
    %v3676 = vpack.c.b16 %v3249, %v3242
    %v3677 = vpack.c.b16 %v3250, %v3243
    %v3678 = vpack.c.b16 %v3251, %v3244
    %v3679 = vpack.c.b16 %v3252, %v3245
    %v3680 = vpack.c.b16 %v3253, %v3246
    %v3681 = vpack.c.b16 %v3254, %v3247
    %v3682 = vpack.c.b16 %v3262, %v3255
    %v3683 = vpack.c.b16 %v3263, %v3256
    %v3684 = vpack.c.b16 %v3264, %v3257
    %v3685 = vpack.c.b16 %v3265, %v3258
    %v3686 = vpack.c.b16 %v3266, %v3259
    %v3687 = vpack.c.b16 %v3267, %v3260
    %v3688 = vpack.c.b16 %v3268, %v3261
    %v3689 = vpack.c.b16 %v3276, %v3269
    %v3690 = vpack.c.b16 %v3277, %v3270
    %v3691 = vpack.c.b16 %v3278, %v3271
    %v3692 = vpack.c.b16 %v3279, %v3272
    %v3693 = vpack.c.b16 %v3280, %v3273
    %v3694 = vpack.c.b16 %v3281, %v3274
    %v3695 = vpack.c.b16 %v3282, %v3275
    %v3696 = vpack.c.b16 %v3290, %v3283
    %v3697 = vpack.c.b16 %v3291, %v3284
    %v3698 = vpack.c.b16 %v3292, %v3285
    %v3699 = vpack.c.b16 %v3293, %v3286
    %v3700 = vpack.c.b16 %v3294, %v3287
    %v3701 = vpack.c.b16 %v3295, %v3288
    %v3702 = vpack.c.b16 %v3296, %v3289
    %v3703 = vpack.c.b16 %v3304, %v3297
    %v3704 = vpack.c.b16 %v3305, %v3298
    %v3705 = vpack.c.b16 %v3306, %v3299
    %v3706 = vpack.c.b16 %v3307, %v3300
    %v3707 = vpack.c.b16 %v3308, %v3301
    %v3708 = vpack.c.b16 %v3309, %v3302
    %v3709 = vpack.c.b16 %v3310, %v3303
    %v3710 = vpack.c.b16 %v3318, %v3311
    %v3711 = vpack.c.b16 %v3319, %v3312
    %v3712 = vpack.c.b16 %v3320, %v3313
    %v3713 = vpack.c.b16 %v3321, %v3314
    %v3714 = vpack.c.b16 %v3322, %v3315
    %v3715 = vpack.c.b16 %v3323, %v3316
    %v3716 = vpack.c.b16 %v3324, %v3317
    %4109 = vmatprep.subr.bf16.mxu0 %v3326
    %4110 = vmatpush1.bf16.msra.mxu0 %v3325
    %4111 = vmatprep.subr.bf16.mxu0 %v3333
    %4112 = vmatpush1.bf16.msra.mxu0 %v3332
    %4113 = vmatprep.subr.bf16.mxu0 %v3340
    %4114 = vmatpush1.bf16.msra.mxu0 %v3339
    %4115 = vmatprep.subr.bf16.mxu0 %v3347
    %4116 = vmatpush1.bf16.msra.mxu0 %v3346
    %4117 = vmatprep.subr.bf16.mxu0 %v3354
    %4118 = vmatpush1.bf16.msra.mxu0 %v3353
    %4119 = vmatprep.subr.bf16.mxu0 %v3361
    %4120 = vmatpush1.bf16.msra.mxu0 %v3360
    %4121 = vmatprep.subr.bf16.mxu0 %v3368
    %4122 = vmatpush1.bf16.msra.mxu0 %v3367
    %4123 = vmatprep.subr.bf16.mxu0 %v3375
    %4124 = vmatpush1.bf16.msra.mxu0 %v3374
    %4125 = vmatprep.subr.bf16.mxu0 %v3382
    %4126 = vmatpush1.bf16.msra.mxu0 %v3381
    %4127 = vmatprep.subr.bf16.mxu0 %v3389
    %4128 = vmatpush1.bf16.msra.mxu0 %v3388
    %4129 = vmatprep.subr.bf16.mxu0 %v3396
    %4130 = vmatpush1.bf16.msra.mxu0 %v3395
    %4131 = vmatprep.subr.bf16.mxu0 %v3403
    %4132 = vmatpush1.bf16.msra.mxu0 %v3402
    %4133 = vmatprep.subr.bf16.mxu0 %v3410
    %4134 = vmatpush1.bf16.msra.mxu0 %v3409
    %4135 = vmatprep.subr.bf16.mxu0 %v3417
    %4136 = vmatpush1.bf16.msra.mxu0 %v3416
    %4137 = vmatprep.subr.bf16.mxu0 %v3424
    %4138 = vmatpush1.bf16.msra.mxu0 %v3423
    %4139 = vmatprep.subr.bf16.mxu0 %v3431
    %4140 = vmatpush1.bf16.msra.mxu0 %v3430
    %4141 = vmatprep.mubr.bf16.mxu0 %v1602
    %4142 = vmatmul.mubr.bf16.gmra.mrb[0].mxu0 %v1601
    %v4143 = vpop.f32.mrb[0].mxu0
    %v4144 = vadd.f32 %v2061, %v4143
    %v4145 = vpop.f32.mrb[0].mxu0
    %v4146 = vadd.f32 %v2065, %v4145
    %v4147 = vpop.f32.mrb[0].mxu0
    %v4148 = vadd.f32 %v2061, %v4147
    %v4149 = vpop.f32.mrb[0].mxu0
    %v4150 = vadd.f32 %v2065, %v4149
    %4151 = vdwg.mxu0
    %4152 = vmatprep.subr.bf16.mxu0 %v3438
    %4153 = vmatpush1.bf16.msra.mxu0 %v3437
    %4154 = vmatprep.subr.bf16.mxu0 %v3445
    %4155 = vmatpush1.bf16.msra.mxu0 %v3444
    %4156 = vmatprep.subr.bf16.mxu0 %v3452
    %4157 = vmatpush1.bf16.msra.mxu0 %v3451
    %4158 = vmatprep.subr.bf16.mxu0 %v3459
    %4159 = vmatpush1.bf16.msra.mxu0 %v3458
    %4160 = vmatprep.subr.bf16.mxu0 %v3466
    %4161 = vmatpush1.bf16.msra.mxu0 %v3465
    %4162 = vmatprep.subr.bf16.mxu0 %v3473
    %4163 = vmatpush1.bf16.msra.mxu0 %v3472
    %4164 = vmatprep.subr.bf16.mxu0 %v3480
    %4165 = vmatpush1.bf16.msra.mxu0 %v3479
    %4166 = vmatprep.subr.bf16.mxu0 %v3487
    %4167 = vmatpush1.bf16.msra.mxu0 %v3486
    %4168 = vmatprep.subr.bf16.mxu0 %v3494
    %4169 = vmatpush1.bf16.msra.mxu0 %v3493
    %4170 = vmatprep.subr.bf16.mxu0 %v3501
    %4171 = vmatpush1.bf16.msra.mxu0 %v3500
    %4172 = vmatprep.subr.bf16.mxu0 %v3508
    %4173 = vmatpush1.bf16.msra.mxu0 %v3507
    %4174 = vmatprep.subr.bf16.mxu0 %v3515
    %4175 = vmatpush1.bf16.msra.mxu0 %v3514
    %4176 = vmatprep.subr.bf16.mxu0 %v3522
    %4177 = vmatpush1.bf16.msra.mxu0 %v3521
    %4178 = vmatprep.subr.bf16.mxu0 %v3529
    %4179 = vmatpush1.bf16.msra.mxu0 %v3528
    %4180 = vmatprep.subr.bf16.mxu0 %v3536
    %4181 = vmatpush1.bf16.msra.mxu0 %v3535
    %4182 = vmatprep.subr.bf16.mxu0 %v3543
    %4183 = vmatpush1.bf16.msra.mxu0 %v3542
    %4184 = vmatprep.mubr.bf16.mxu0 %v1604
    %4185 = vmatmul.mubr.bf16.gmra.mrb[0].mxu0 %v1603
    %v4186 = vpop.f32.mrb[0].mxu0
    %v4187 = vadd.f32 %v4144, %v4186
    %v4188 = vpop.f32.mrb[0].mxu0
    %v4189 = vadd.f32 %v4146, %v4188
    %v4190 = vpop.f32.mrb[0].mxu0
    %v4191 = vadd.f32 %v4148, %v4190
    %v4192 = vpop.f32.mrb[0].mxu0
    %v4193 = vadd.f32 %v4150, %v4192
    %4194 = vdwg.mxu0
    %4195 = vmatprep.subr.bf16.mxu0 %v3550
    %4196 = vmatpush1.bf16.msra.mxu0 %v3549
    %4197 = vmatprep.subr.bf16.mxu0 %v3557
    %4198 = vmatpush1.bf16.msra.mxu0 %v3556
    %4199 = vmatprep.subr.bf16.mxu0 %v3564
    %4200 = vmatpush1.bf16.msra.mxu0 %v3563
    %4201 = vmatprep.subr.bf16.mxu0 %v3571
    %4202 = vmatpush1.bf16.msra.mxu0 %v3570
    %4203 = vmatprep.subr.bf16.mxu0 %v3578
    %4204 = vmatpush1.bf16.msra.mxu0 %v3577
    %4205 = vmatprep.subr.bf16.mxu0 %v3585
    %4206 = vmatpush1.bf16.msra.mxu0 %v3584
    %4207 = vmatprep.subr.bf16.mxu0 %v3592
    %4208 = vmatpush1.bf16.msra.mxu0 %v3591
    %4209 = vmatprep.subr.bf16.mxu0 %v3599
    %4210 = vmatpush1.bf16.msra.mxu0 %v3598
    %4211 = vmatprep.subr.bf16.mxu0 %v3606
    %4212 = vmatpush1.bf16.msra.mxu0 %v3605
    %4213 = vmatprep.subr.bf16.mxu0 %v3613
    %4214 = vmatpush1.bf16.msra.mxu0 %v3612
    %4215 = vmatprep.subr.bf16.mxu0 %v3620
    %4216 = vmatpush1.bf16.msra.mxu0 %v3619
    %4217 = vmatprep.subr.bf16.mxu0 %v3627
    %4218 = vmatpush1.bf16.msra.mxu0 %v3626
    %4219 = vmatprep.subr.bf16.mxu0 %v3634
    %4220 = vmatpush1.bf16.msra.mxu0 %v3633
    %4221 = vmatprep.subr.bf16.mxu0 %v3641
    %4222 = vmatpush1.bf16.msra.mxu0 %v3640
    %4223 = vmatprep.subr.bf16.mxu0 %v3648
    %4224 = vmatpush1.bf16.msra.mxu0 %v3647
    %4225 = vmatprep.subr.bf16.mxu0 %v3655
    %4226 = vmatpush1.bf16.msra.mxu0 %v3654
    %4227 = vmatprep.mubr.bf16.mxu0 %v1606
    %4228 = vmatmul.mubr.bf16.gmra.mrb[0].mxu0 %v1605
    %v4229 = vpop.f32.mrb[0].mxu0
    %v4230 = vadd.f32 %v4187, %v4229
    %v4231 = vpop.f32.mrb[0].mxu0
    %v4232 = vadd.f32 %v4189, %v4231
    %v4233 = vpop.f32.mrb[0].mxu0
    %v4234 = vadd.f32 %v4191, %v4233
    %v4235 = vpop.f32.mrb[0].mxu0
    %v4236 = vadd.f32 %v4193, %v4235
    %4237 = vdwg.mxu0
    %4238 = vmatprep.subr.bf16.mxu0 %v3662
    %4239 = vmatpush1.bf16.msra.mxu0 %v3661
    %4240 = vmatprep.subr.bf16.mxu0 %v3669
    %4241 = vmatpush1.bf16.msra.mxu0 %v3668
    %4242 = vmatprep.subr.bf16.mxu0 %v3676
    %4243 = vmatpush1.bf16.msra.mxu0 %v3675
    %4244 = vmatprep.subr.bf16.mxu0 %v3683
    %4245 = vmatpush1.bf16.msra.mxu0 %v3682
    %4246 = vmatprep.subr.bf16.mxu0 %v3690
    %4247 = vmatpush1.bf16.msra.mxu0 %v3689
    %4248 = vmatprep.subr.bf16.mxu0 %v3697
    %4249 = vmatpush1.bf16.msra.mxu0 %v3696
    %4250 = vmatprep.subr.bf16.mxu0 %v3704
    %4251 = vmatpush1.bf16.msra.mxu0 %v3703
    %4252 = vmatprep.subr.bf16.mxu0 %v3711
    %4253 = vmatpush1.bf16.msra.mxu0 %v3710
    %4254 = vmatprep.subr.bf16.mxu0 0
    %4255 = vmatpush1.bf16.msra.mxu0 0
    %4256 = vmatprep.subr.bf16.mxu0 0
    %4257 = vmatpush1.bf16.msra.mxu0 0
    %4258 = vmatprep.subr.bf16.mxu0 0
    %4259 = vmatpush1.bf16.msra.mxu0 0
    %4260 = vmatprep.subr.bf16.mxu0 0
    %4261 = vmatpush1.bf16.msra.mxu0 0
    %4262 = vmatprep.subr.bf16.mxu0 0
    %4263 = vmatpush1.bf16.msra.mxu0 0
    %4264 = vmatprep.subr.bf16.mxu0 0
    %4265 = vmatpush1.bf16.msra.mxu0 0
    %4266 = vmatprep.subr.bf16.mxu0 0
    %4267 = vmatpush1.bf16.msra.mxu0 0
    %4268 = vmatprep.subr.bf16.mxu0 0
    %4269 = vmatpush1.bf16.msra.mxu0 0
    %4270 = vmatprep.mubr.bf16.mxu0 0
    %4271 = vmatmul.mubr.bf16.gmra.mrb[0].mxu0 %v1607
    %v4272 = vpop.f32.mrb[0].mxu0
    %v4273 = vadd.f32 %v4230, %v4272
    %v4274 = vpop.f32.mrb[0].mxu0
    %v4275 = vadd.f32 %v4232, %v4274
    %v4276 = vpop.f32.mrb[0].mxu0
    %v4277 = vadd.f32 %v4234, %v4276
    %v4278 = vpop.f32.mrb[0].mxu0
    %v4279 = vadd.f32 %v4236, %v4278
    %4280 = vdwg.mxu0
    %4281 = vmatprep.subr.bf16.mxu0 %v3328
    %4282 = vmatpush1.bf16.msra.mxu0 %v3327
    %4283 = vmatprep.subr.bf16.mxu0 %v3335
    %4284 = vmatpush1.bf16.msra.mxu0 %v3334
    %4285 = vmatprep.subr.bf16.mxu0 %v3342
    %4286 = vmatpush1.bf16.msra.mxu0 %v3341
    %4287 = vmatprep.subr.bf16.mxu0 %v3349
    %4288 = vmatpush1.bf16.msra.mxu0 %v3348
    %4289 = vmatprep.subr.bf16.mxu0 %v3356
    %4290 = vmatpush1.bf16.msra.mxu0 %v3355
    %4291 = vmatprep.subr.bf16.mxu0 %v3363
    %4292 = vmatpush1.bf16.msra.mxu0 %v3362
    %4293 = vmatprep.subr.bf16.mxu0 %v3370
    %4294 = vmatpush1.bf16.msra.mxu0 %v3369
    %4295 = vmatprep.subr.bf16.mxu0 %v3377
    %4296 = vmatpush1.bf16.msra.mxu0 %v3376
    %4297 = vmatprep.subr.bf16.mxu0 %v3384
    %4298 = vmatpush1.bf16.msra.mxu0 %v3383
    %4299 = vmatprep.subr.bf16.mxu0 %v3391
    %4300 = vmatpush1.bf16.msra.mxu0 %v3390
    %4301 = vmatprep.subr.bf16.mxu0 %v3398
    %4302 = vmatpush1.bf16.msra.mxu0 %v3397
    %4303 = vmatprep.subr.bf16.mxu0 %v3405
    %4304 = vmatpush1.bf16.msra.mxu0 %v3404
    %4305 = vmatprep.subr.bf16.mxu0 %v3412
    %4306 = vmatpush1.bf16.msra.mxu0 %v3411
    %4307 = vmatprep.subr.bf16.mxu0 %v3419
    %4308 = vmatpush1.bf16.msra.mxu0 %v3418
    %4309 = vmatprep.subr.bf16.mxu0 %v3426
    %4310 = vmatpush1.bf16.msra.mxu0 %v3425
    %4311 = vmatprep.subr.bf16.mxu0 %v3433
    %4312 = vmatpush1.bf16.msra.mxu0 %v3432
    %4313 = vmatprep.mubr.bf16.mxu0 %v1602
    %4314 = vmatmul.mubr.bf16.gmra.mrb[0].mxu0 %v1601
    %v4315 = vpop.f32.mrb[0].mxu0
    %v4316 = vadd.f32 %v2069, %v4315
    %v4317 = vpop.f32.mrb[0].mxu0
    %v4318 = vadd.f32 %v2073, %v4317
    %v4319 = vpop.f32.mrb[0].mxu0
    %v4320 = vadd.f32 %v2069, %v4319
    %v4321 = vpop.f32.mrb[0].mxu0
    %v4322 = vadd.f32 %v2073, %v4321
    %4323 = vdwg.mxu0
    %4324 = vmatprep.subr.bf16.mxu0 %v3440
    %4325 = vmatpush1.bf16.msra.mxu0 %v3439
    %4326 = vmatprep.subr.bf16.mxu0 %v3447
    %4327 = vmatpush1.bf16.msra.mxu0 %v3446
    %4328 = vmatprep.subr.bf16.mxu0 %v3454
    %4329 = vmatpush1.bf16.msra.mxu0 %v3453
    %4330 = vmatprep.subr.bf16.mxu0 %v3461
    %4331 = vmatpush1.bf16.msra.mxu0 %v3460
    %4332 = vmatprep.subr.bf16.mxu0 %v3468
    %4333 = vmatpush1.bf16.msra.mxu0 %v3467
    %4334 = vmatprep.subr.bf16.mxu0 %v3475
    %4335 = vmatpush1.bf16.msra.mxu0 %v3474
    %4336 = vmatprep.subr.bf16.mxu0 %v3482
    %4337 = vmatpush1.bf16.msra.mxu0 %v3481
    %4338 = vmatprep.subr.bf16.mxu0 %v3489
    %4339 = vmatpush1.bf16.msra.mxu0 %v3488
    %4340 = vmatprep.subr.bf16.mxu0 %v3496
    %4341 = vmatpush1.bf16.msra.mxu0 %v3495
    %4342 = vmatprep.subr.bf16.mxu0 %v3503
    %4343 = vmatpush1.bf16.msra.mxu0 %v3502
    %4344 = vmatprep.subr.bf16.mxu0 %v3510
    %4345 = vmatpush1.bf16.msra.mxu0 %v3509
    %4346 = vmatprep.subr.bf16.mxu0 %v3517
    %4347 = vmatpush1.bf16.msra.mxu0 %v3516
    %4348 = vmatprep.subr.bf16.mxu0 %v3524
    %4349 = vmatpush1.bf16.msra.mxu0 %v3523
    %4350 = vmatprep.subr.bf16.mxu0 %v3531
    %4351 = vmatpush1.bf16.msra.mxu0 %v3530
    %4352 = vmatprep.subr.bf16.mxu0 %v3538
    %4353 = vmatpush1.bf16.msra.mxu0 %v3537
    %4354 = vmatprep.subr.bf16.mxu0 %v3545
    %4355 = vmatpush1.bf16.msra.mxu0 %v3544
    %4356 = vmatprep.mubr.bf16.mxu0 %v1604
    %4357 = vmatmul.mubr.bf16.gmra.mrb[0].mxu0 %v1603
    %v4358 = vpop.f32.mrb[0].mxu0
    %v4359 = vadd.f32 %v4316, %v4358
    %v4360 = vpop.f32.mrb[0].mxu0
    %v4361 = vadd.f32 %v4318, %v4360
    %v4362 = vpop.f32.mrb[0].mxu0
    %v4363 = vadd.f32 %v4320, %v4362
    %v4364 = vpop.f32.mrb[0].mxu0
    %v4365 = vadd.f32 %v4322, %v4364
    %4366 = vdwg.mxu0
    %4367 = vmatprep.subr.bf16.mxu0 %v3552
    %4368 = vmatpush1.bf16.msra.mxu0 %v3551
    %4369 = vmatprep.subr.bf16.mxu0 %v3559
    %4370 = vmatpush1.bf16.msra.mxu0 %v3558
    %4371 = vmatprep.subr.bf16.mxu0 %v3566
    %4372 = vmatpush1.bf16.msra.mxu0 %v3565
    %4373 = vmatprep.subr.bf16.mxu0 %v3573
    %4374 = vmatpush1.bf16.msra.mxu0 %v3572
    %4375 = vmatprep.subr.bf16.mxu0 %v3580
    %4376 = vmatpush1.bf16.msra.mxu0 %v3579
    %4377 = vmatprep.subr.bf16.mxu0 %v3587
    %4378 = vmatpush1.bf16.msra.mxu0 %v3586
    %4379 = vmatprep.subr.bf16.mxu0 %v3594
    %4380 = vmatpush1.bf16.msra.mxu0 %v3593
    %4381 = vmatprep.subr.bf16.mxu0 %v3601
    %4382 = vmatpush1.bf16.msra.mxu0 %v3600
    %4383 = vmatprep.subr.bf16.mxu0 %v3608
    %4384 = vmatpush1.bf16.msra.mxu0 %v3607
    %4385 = vmatprep.subr.bf16.mxu0 %v3615
    %4386 = vmatpush1.bf16.msra.mxu0 %v3614
    %4387 = vmatprep.subr.bf16.mxu0 %v3622
    %4388 = vmatpush1.bf16.msra.mxu0 %v3621
    %4389 = vmatprep.subr.bf16.mxu0 %v3629
    %4390 = vmatpush1.bf16.msra.mxu0 %v3628
    %4391 = vmatprep.subr.bf16.mxu0 %v3636
    %4392 = vmatpush1.bf16.msra.mxu0 %v3635
    %4393 = vmatprep.subr.bf16.mxu0 %v3643
    %4394 = vmatpush1.bf16.msra.mxu0 %v3642
    %4395 = vmatprep.subr.bf16.mxu0 %v3650
    %4396 = vmatpush1.bf16.msra.mxu0 %v3649
    %4397 = vmatprep.subr.bf16.mxu0 %v3657
    %4398 = vmatpush1.bf16.msra.mxu0 %v3656
    %4399 = vmatprep.mubr.bf16.mxu0 %v1606
    %4400 = vmatmul.mubr.bf16.gmra.mrb[0].mxu0 %v1605
    %v4401 = vpop.f32.mrb[0].mxu0
    %v4402 = vadd.f32 %v4359, %v4401
    %v4403 = vpop.f32.mrb[0].mxu0
    %v4404 = vadd.f32 %v4361, %v4403
    %v4405 = vpop.f32.mrb[0].mxu0
    %v4406 = vadd.f32 %v4363, %v4405
    %v4407 = vpop.f32.mrb[0].mxu0
    %v4408 = vadd.f32 %v4365, %v4407
    %4409 = vdwg.mxu0
    %4410 = vmatprep.subr.bf16.mxu0 %v3664
    %4411 = vmatpush1.bf16.msra.mxu0 %v3663
    %4412 = vmatprep.subr.bf16.mxu0 %v3671
    %4413 = vmatpush1.bf16.msra.mxu0 %v3670
    %4414 = vmatprep.subr.bf16.mxu0 %v3678
    %4415 = vmatpush1.bf16.msra.mxu0 %v3677
    %4416 = vmatprep.subr.bf16.mxu0 %v3685
    %4417 = vmatpush1.bf16.msra.mxu0 %v3684
    %4418 = vmatprep.subr.bf16.mxu0 %v3692
    %4419 = vmatpush1.bf16.msra.mxu0 %v3691
    %4420 = vmatprep.subr.bf16.mxu0 %v3699
    %4421 = vmatpush1.bf16.msra.mxu0 %v3698
    %4422 = vmatprep.subr.bf16.mxu0 %v3706
    %4423 = vmatpush1.bf16.msra.mxu0 %v3705
    %4424 = vmatprep.subr.bf16.mxu0 %v3713
    %4425 = vmatpush1.bf16.msra.mxu0 %v3712
    %4426 = vmatprep.subr.bf16.mxu0 0
    %4427 = vmatpush1.bf16.msra.mxu0 0
    %4428 = vmatprep.subr.bf16.mxu0 0
    %4429 = vmatpush1.bf16.msra.mxu0 0
    %4430 = vmatprep.subr.bf16.mxu0 0
    %4431 = vmatpush1.bf16.msra.mxu0 0
    %4432 = vmatprep.subr.bf16.mxu0 0
    %4433 = vmatpush1.bf16.msra.mxu0 0
    %4434 = vmatprep.subr.bf16.mxu0 0
    %4435 = vmatpush1.bf16.msra.mxu0 0
    %4436 = vmatprep.subr.bf16.mxu0 0
    %4437 = vmatpush1.bf16.msra.mxu0 0
    %4438 = vmatprep.subr.bf16.mxu0 0
    %4439 = vmatpush1.bf16.msra.mxu0 0
    %4440 = vmatprep.subr.bf16.mxu0 0
    %4441 = vmatpush1.bf16.msra.mxu0 0
    %4442 = vmatprep.mubr.bf16.mxu0 0
    %4443 = vmatmul.mubr.bf16.gmra.mrb[0].mxu0 %v1607
    %v4444 = vpop.f32.mrb[0].mxu0
    %v4445 = vadd.f32 %v4402, %v4444
    %v4446 = vpop.f32.mrb[0].mxu0
    %v4447 = vadd.f32 %v4404, %v4446
    %v4448 = vpop.f32.mrb[0].mxu0
    %v4449 = vadd.f32 %v4406, %v4448
    %v4450 = vpop.f32.mrb[0].mxu0
    %v4451 = vadd.f32 %v4408, %v4450
    %4452 = vdwg.mxu0
    %4453 = vmatprep.subr.bf16.mxu0 %v3330
    %4454 = vmatpush1.bf16.msra.mxu0 %v3329
    %4455 = vmatprep.subr.bf16.mxu0 %v3337
    %4456 = vmatpush1.bf16.msra.mxu0 %v3336
    %4457 = vmatprep.subr.bf16.mxu0 %v3344
    %4458 = vmatpush1.bf16.msra.mxu0 %v3343
    %4459 = vmatprep.subr.bf16.mxu0 %v3351
    %4460 = vmatpush1.bf16.msra.mxu0 %v3350
    %4461 = vmatprep.subr.bf16.mxu0 %v3358
    %4462 = vmatpush1.bf16.msra.mxu0 %v3357
    %4463 = vmatprep.subr.bf16.mxu0 %v3365
    %4464 = vmatpush1.bf16.msra.mxu0 %v3364
    %4465 = vmatprep.subr.bf16.mxu0 %v3372
    %4466 = vmatpush1.bf16.msra.mxu0 %v3371
    %4467 = vmatprep.subr.bf16.mxu0 %v3379
    %4468 = vmatpush1.bf16.msra.mxu0 %v3378
    %4469 = vmatprep.subr.bf16.mxu0 %v3386
    %4470 = vmatpush1.bf16.msra.mxu0 %v3385
    %4471 = vmatprep.subr.bf16.mxu0 %v3393
    %4472 = vmatpush1.bf16.msra.mxu0 %v3392
    %4473 = vmatprep.subr.bf16.mxu0 %v3400
    %4474 = vmatpush1.bf16.msra.mxu0 %v3399
    %4475 = vmatprep.subr.bf16.mxu0 %v3407
    %4476 = vmatpush1.bf16.msra.mxu0 %v3406
    %4477 = vmatprep.subr.bf16.mxu0 %v3414
    %4478 = vmatpush1.bf16.msra.mxu0 %v3413
    %4479 = vmatprep.subr.bf16.mxu0 %v3421
    %4480 = vmatpush1.bf16.msra.mxu0 %v3420
    %4481 = vmatprep.subr.bf16.mxu0 %v3428
    %4482 = vmatpush1.bf16.msra.mxu0 %v3427
    %4483 = vmatprep.subr.bf16.mxu0 %v3435
    %4484 = vmatpush1.bf16.msra.mxu0 %v3434
    %4485 = vmatprep.mubr.bf16.mxu0 %v1602
    %4486 = vmatmul.mubr.bf16.gmra.mrb[0].mxu0 %v1601
    %v4487 = vpop.f32.mrb[0].mxu0
    %v4488 = vadd.f32 %v2077, %v4487
    %v4489 = vpop.f32.mrb[0].mxu0
    %v4490 = vadd.f32 %v2081, %v4489
    %v4491 = vpop.f32.mrb[0].mxu0
    %v4492 = vadd.f32 %v2077, %v4491
    %v4493 = vpop.f32.mrb[0].mxu0
    %v4494 = vadd.f32 %v2081, %v4493
    %4495 = vdwg.mxu0
    %4496 = vmatprep.subr.bf16.mxu0 %v3442
    %4497 = vmatpush1.bf16.msra.mxu0 %v3441
    %4498 = vmatprep.subr.bf16.mxu0 %v3449
    %4499 = vmatpush1.bf16.msra.mxu0 %v3448
    %4500 = vmatprep.subr.bf16.mxu0 %v3456
    %4501 = vmatpush1.bf16.msra.mxu0 %v3455
    %4502 = vmatprep.subr.bf16.mxu0 %v3463
    %4503 = vmatpush1.bf16.msra.mxu0 %v3462
    %4504 = vmatprep.subr.bf16.mxu0 %v3470
    %4505 = vmatpush1.bf16.msra.mxu0 %v3469
    %4506 = vmatprep.subr.bf16.mxu0 %v3477
    %4507 = vmatpush1.bf16.msra.mxu0 %v3476
    %4508 = vmatprep.subr.bf16.mxu0 %v3484
    %4509 = vmatpush1.bf16.msra.mxu0 %v3483
    %4510 = vmatprep.subr.bf16.mxu0 %v3491
    %4511 = vmatpush1.bf16.msra.mxu0 %v3490
    %4512 = vmatprep.subr.bf16.mxu0 %v3498
    %4513 = vmatpush1.bf16.msra.mxu0 %v3497
    %4514 = vmatprep.subr.bf16.mxu0 %v3505
    %4515 = vmatpush1.bf16.msra.mxu0 %v3504
    %4516 = vmatprep.subr.bf16.mxu0 %v3512
    %4517 = vmatpush1.bf16.msra.mxu0 %v3511
    %4518 = vmatprep.subr.bf16.mxu0 %v3519
    %4519 = vmatpush1.bf16.msra.mxu0 %v3518
    %4520 = vmatprep.subr.bf16.mxu0 %v3526
    %4521 = vmatpush1.bf16.msra.mxu0 %v3525
    %4522 = vmatprep.subr.bf16.mxu0 %v3533
    %4523 = vmatpush1.bf16.msra.mxu0 %v3532
    %4524 = vmatprep.subr.bf16.mxu0 %v3540
    %4525 = vmatpush1.bf16.msra.mxu0 %v3539
    %4526 = vmatprep.subr.bf16.mxu0 %v3547
    %4527 = vmatpush1.bf16.msra.mxu0 %v3546
    %4528 = vmatprep.mubr.bf16.mxu0 %v1604
    %4529 = vmatmul.mubr.bf16.gmra.mrb[0].mxu0 %v1603
    %v4530 = vpop.f32.mrb[0].mxu0
    %v4531 = vadd.f32 %v4488, %v4530
    %v4532 = vpop.f32.mrb[0].mxu0
    %v4533 = vadd.f32 %v4490, %v4532
    %v4534 = vpop.f32.mrb[0].mxu0
    %v4535 = vadd.f32 %v4492, %v4534
    %v4536 = vpop.f32.mrb[0].mxu0
    %v4537 = vadd.f32 %v4494, %v4536
    %4538 = vdwg.mxu0
    %4539 = vmatprep.subr.bf16.mxu0 %v3554
    %4540 = vmatpush1.bf16.msra.mxu0 %v3553
    %4541 = vmatprep.subr.bf16.mxu0 %v3561
    %4542 = vmatpush1.bf16.msra.mxu0 %v3560
    %4543 = vmatprep.subr.bf16.mxu0 %v3568
    %4544 = vmatpush1.bf16.msra.mxu0 %v3567
    %4545 = vmatprep.subr.bf16.mxu0 %v3575
    %4546 = vmatpush1.bf16.msra.mxu0 %v3574
    %4547 = vmatprep.subr.bf16.mxu0 %v3582
    %4548 = vmatpush1.bf16.msra.mxu0 %v3581
    %4549 = vmatprep.subr.bf16.mxu0 %v3589
    %4550 = vmatpush1.bf16.msra.mxu0 %v3588
    %4551 = vmatprep.subr.bf16.mxu0 %v3596
    %4552 = vmatpush1.bf16.msra.mxu0 %v3595
    %4553 = vmatprep.subr.bf16.mxu0 %v3603
    %4554 = vmatpush1.bf16.msra.mxu0 %v3602
    %4555 = vmatprep.subr.bf16.mxu0 %v3610
    %4556 = vmatpush1.bf16.msra.mxu0 %v3609
    %4557 = vmatprep.subr.bf16.mxu0 %v3617
    %4558 = vmatpush1.bf16.msra.mxu0 %v3616
    %4559 = vmatprep.subr.bf16.mxu0 %v3624
    %4560 = vmatpush1.bf16.msra.mxu0 %v3623
    %4561 = vmatprep.subr.bf16.mxu0 %v3631
    %4562 = vmatpush1.bf16.msra.mxu0 %v3630
    %4563 = vmatprep.subr.bf16.mxu0 %v3638
    %4564 = vmatpush1.bf16.msra.mxu0 %v3637
    %4565 = vmatprep.subr.bf16.mxu0 %v3645
    %4566 = vmatpush1.bf16.msra.mxu0 %v3644
    %4567 = vmatprep.subr.bf16.mxu0 %v3652
    %4568 = vmatpush1.bf16.msra.mxu0 %v3651
    %4569 = vmatprep.subr.bf16.mxu0 %v3659
    %4570 = vmatpush1.bf16.msra.mxu0 %v3658
    %4571 = vmatprep.mubr.bf16.mxu0 %v1606
    %4572 = vmatmul.mubr.bf16.gmra.mrb[0].mxu0 %v1605
    %v4573 = vpop.f32.mrb[0].mxu0
    %v4574 = vadd.f32 %v4531, %v4573
    %v4575 = vpop.f32.mrb[0].mxu0
    %v4576 = vadd.f32 %v4533, %v4575
    %v4577 = vpop.f32.mrb[0].mxu0
    %v4578 = vadd.f32 %v4535, %v4577
    %v4579 = vpop.f32.mrb[0].mxu0
    %v4580 = vadd.f32 %v4537, %v4579
    %4581 = vdwg.mxu0
    %4582 = vmatprep.subr.bf16.mxu0 %v3666
    %4583 = vmatpush1.bf16.msra.mxu0 %v3665
    %4584 = vmatprep.subr.bf16.mxu0 %v3673
    %4585 = vmatpush1.bf16.msra.mxu0 %v3672
    %4586 = vmatprep.subr.bf16.mxu0 %v3680
    %4587 = vmatpush1.bf16.msra.mxu0 %v3679
    %4588 = vmatprep.subr.bf16.mxu0 %v3687
    %4589 = vmatpush1.bf16.msra.mxu0 %v3686
    %4590 = vmatprep.subr.bf16.mxu0 %v3694
    %4591 = vmatpush1.bf16.msra.mxu0 %v3693
    %4592 = vmatprep.subr.bf16.mxu0 %v3701
    %4593 = vmatpush1.bf16.msra.mxu0 %v3700
    %4594 = vmatprep.subr.bf16.mxu0 %v3708
    %4595 = vmatpush1.bf16.msra.mxu0 %v3707
    %4596 = vmatprep.subr.bf16.mxu0 %v3715
    %4597 = vmatpush1.bf16.msra.mxu0 %v3714
    %4598 = vmatprep.subr.bf16.mxu0 0
    %4599 = vmatpush1.bf16.msra.mxu0 0
    %4600 = vmatprep.subr.bf16.mxu0 0
    %4601 = vmatpush1.bf16.msra.mxu0 0
    %4602 = vmatprep.subr.bf16.mxu0 0
    %4603 = vmatpush1.bf16.msra.mxu0 0
    %4604 = vmatprep.subr.bf16.mxu0 0
    %4605 = vmatpush1.bf16.msra.mxu0 0
    %4606 = vmatprep.subr.bf16.mxu0 0
    %4607 = vmatpush1.bf16.msra.mxu0 0
    %4608 = vmatprep.subr.bf16.mxu0 0
    %4609 = vmatpush1.bf16.msra.mxu0 0
    %4610 = vmatprep.subr.bf16.mxu0 0
    %4611 = vmatpush1.bf16.msra.mxu0 0
    %4612 = vmatprep.subr.bf16.mxu0 0
    %4613 = vmatpush1.bf16.msra.mxu0 0
    %4614 = vmatprep.mubr.bf16.mxu0 0
    %4615 = vmatmul.mubr.bf16.gmra.mrb[0].mxu0 %v1607
    %v4616 = vpop.f32.mrb[0].mxu0
    %v4617 = vadd.f32 %v4574, %v4616
    %v4618 = vpop.f32.mrb[0].mxu0
    %v4619 = vadd.f32 %v4576, %v4618
    %v4620 = vpop.f32.mrb[0].mxu0
    %v4621 = vadd.f32 %v4578, %v4620
    %v4622 = vpop.f32.mrb[0].mxu0
    %v4623 = vadd.f32 %v4580, %v4622
    %4624 = vdwg.mxu0
    %4625 = vmatprep.subr.bf16.mxu0 0
    %4626 = vmatpush1.bf16.msra.mxu0 %v3331
    %4627 = vmatprep.subr.bf16.mxu0 0
    %4628 = vmatpush1.bf16.msra.mxu0 %v3338
    %4629 = vmatprep.subr.bf16.mxu0 0
    %4630 = vmatpush1.bf16.msra.mxu0 %v3345
    %4631 = vmatprep.subr.bf16.mxu0 0
    %4632 = vmatpush1.bf16.msra.mxu0 %v3352
    %4633 = vmatprep.subr.bf16.mxu0 0
    %4634 = vmatpush1.bf16.msra.mxu0 %v3359
    %4635 = vmatprep.subr.bf16.mxu0 0
    %4636 = vmatpush1.bf16.msra.mxu0 %v3366
    %4637 = vmatprep.subr.bf16.mxu0 0
    %4638 = vmatpush1.bf16.msra.mxu0 %v3373
    %4639 = vmatprep.subr.bf16.mxu0 0
    %4640 = vmatpush1.bf16.msra.mxu0 %v3380
    %4641 = vmatprep.subr.bf16.mxu0 0
    %4642 = vmatpush1.bf16.msra.mxu0 %v3387
    %4643 = vmatprep.subr.bf16.mxu0 0
    %4644 = vmatpush1.bf16.msra.mxu0 %v3394
    %4645 = vmatprep.subr.bf16.mxu0 0
    %4646 = vmatpush1.bf16.msra.mxu0 %v3401
    %4647 = vmatprep.subr.bf16.mxu0 0
    %4648 = vmatpush1.bf16.msra.mxu0 %v3408
    %4649 = vmatprep.subr.bf16.mxu0 0
    %4650 = vmatpush1.bf16.msra.mxu0 %v3415
    %4651 = vmatprep.subr.bf16.mxu0 0
    %4652 = vmatpush1.bf16.msra.mxu0 %v3422
    %4653 = vmatprep.subr.bf16.mxu0 0
    %4654 = vmatpush1.bf16.msra.mxu0 %v3429
    %4655 = vmatprep.subr.bf16.mxu0 0
    %4656 = vmatpush1.bf16.msra.mxu0 %v3436
    %4657 = vmatprep.mubr.bf16.mxu0 %v1602
    %4658 = vmatmul.mubr.bf16.gmra.mrb[0].mxu0 %v1601
    %v4659 = vpop.f32.mrb[0].mxu0
    %v4660 = vadd.f32 %v2085, %v4659
    %v4661 = vpop.f32.mrb[0].mxu0
    %v4662 = vpop.f32.mrb[0].mxu0
    %v4663 = vadd.f32 %v2085, %v4662
    %v4664 = vpop.f32.mrb[0].mxu0
    %4665 = vdwg.mxu0
    %4666 = vmatprep.subr.bf16.mxu0 0
    %4667 = vmatpush1.bf16.msra.mxu0 %v3443
    %4668 = vmatprep.subr.bf16.mxu0 0
    %4669 = vmatpush1.bf16.msra.mxu0 %v3450
    %4670 = vmatprep.subr.bf16.mxu0 0
    %4671 = vmatpush1.bf16.msra.mxu0 %v3457
    %4672 = vmatprep.subr.bf16.mxu0 0
    %4673 = vmatpush1.bf16.msra.mxu0 %v3464
    %4674 = vmatprep.subr.bf16.mxu0 0
    %4675 = vmatpush1.bf16.msra.mxu0 %v3471
    %4676 = vmatprep.subr.bf16.mxu0 0
    %4677 = vmatpush1.bf16.msra.mxu0 %v3478
    %4678 = vmatprep.subr.bf16.mxu0 0
    %4679 = vmatpush1.bf16.msra.mxu0 %v3485
    %4680 = vmatprep.subr.bf16.mxu0 0
    %4681 = vmatpush1.bf16.msra.mxu0 %v3492
    %4682 = vmatprep.subr.bf16.mxu0 0
    %4683 = vmatpush1.bf16.msra.mxu0 %v3499
    %4684 = vmatprep.subr.bf16.mxu0 0
    %4685 = vmatpush1.bf16.msra.mxu0 %v3506
    %4686 = vmatprep.subr.bf16.mxu0 0
    %4687 = vmatpush1.bf16.msra.mxu0 %v3513
    %4688 = vmatprep.subr.bf16.mxu0 0
    %4689 = vmatpush1.bf16.msra.mxu0 %v3520
    %4690 = vmatprep.subr.bf16.mxu0 0
    %4691 = vmatpush1.bf16.msra.mxu0 %v3527
    %4692 = vmatprep.subr.bf16.mxu0 0
    %4693 = vmatpush1.bf16.msra.mxu0 %v3534
    %4694 = vmatprep.subr.bf16.mxu0 0
    %4695 = vmatpush1.bf16.msra.mxu0 %v3541
    %4696 = vmatprep.subr.bf16.mxu0 0
    %4697 = vmatpush1.bf16.msra.mxu0 %v3548
    %4698 = vmatprep.mubr.bf16.mxu0 %v1604
    %4699 = vmatmul.mubr.bf16.gmra.mrb[0].mxu0 %v1603
    %v4700 = vpop.f32.mrb[0].mxu0
    %v4701 = vadd.f32 %v4660, %v4700
    %v4702 = vpop.f32.mrb[0].mxu0
    %v4703 = vpop.f32.mrb[0].mxu0
    %v4704 = vadd.f32 %v4663, %v4703
    %v4705 = vpop.f32.mrb[0].mxu0
    %4706 = vdwg.mxu0
    %4707 = vmatprep.subr.bf16.mxu0 0
    %4708 = vmatpush1.bf16.msra.mxu0 %v3555
    %4709 = vmatprep.subr.bf16.mxu0 0
    %4710 = vmatpush1.bf16.msra.mxu0 %v3562
    %4711 = vmatprep.subr.bf16.mxu0 0
    %4712 = vmatpush1.bf16.msra.mxu0 %v3569
    %4713 = vmatprep.subr.bf16.mxu0 0
    %4714 = vmatpush1.bf16.msra.mxu0 %v3576
    %4715 = vmatprep.subr.bf16.mxu0 0
    %4716 = vmatpush1.bf16.msra.mxu0 %v3583
    %4717 = vmatprep.subr.bf16.mxu0 0
    %4718 = vmatpush1.bf16.msra.mxu0 %v3590
    %4719 = vmatprep.subr.bf16.mxu0 0
    %4720 = vmatpush1.bf16.msra.mxu0 %v3597
    %4721 = vmatprep.subr.bf16.mxu0 0
    %4722 = vmatpush1.bf16.msra.mxu0 %v3604
    %4723 = vmatprep.subr.bf16.mxu0 0
    %4724 = vmatpush1.bf16.msra.mxu0 %v3611
    %4725 = vmatprep.subr.bf16.mxu0 0
    %4726 = vmatpush1.bf16.msra.mxu0 %v3618
    %4727 = vmatprep.subr.bf16.mxu0 0
    %4728 = vmatpush1.bf16.msra.mxu0 %v3625
    %4729 = vmatprep.subr.bf16.mxu0 0
    %4730 = vmatpush1.bf16.msra.mxu0 %v3632
    %4731 = vmatprep.subr.bf16.mxu0 0
    %4732 = vmatpush1.bf16.msra.mxu0 %v3639
    %4733 = vmatprep.subr.bf16.mxu0 0
    %4734 = vmatpush1.bf16.msra.mxu0 %v3646
    %4735 = vmatprep.subr.bf16.mxu0 0
    %4736 = vmatpush1.bf16.msra.mxu0 %v3653
    %4737 = vmatprep.subr.bf16.mxu0 0
    %4738 = vmatpush1.bf16.msra.mxu0 %v3660
    %4739 = vmatprep.mubr.bf16.mxu0 %v1606
    %4740 = vmatmul.mubr.bf16.gmra.mrb[0].mxu0 %v1605
    %v4741 = vpop.f32.mrb[0].mxu0
    %v4742 = vadd.f32 %v4701, %v4741
    %v4743 = vpop.f32.mrb[0].mxu0
    %v4744 = vpop.f32.mrb[0].mxu0
    %v4745 = vadd.f32 %v4704, %v4744
    %v4746 = vpop.f32.mrb[0].mxu0
    %4747 = vdwg.mxu0
    %4748 = vmatprep.subr.bf16.mxu0 0
    %4749 = vmatpush1.bf16.msra.mxu0 %v3667
    %4750 = vmatprep.subr.bf16.mxu0 0
    %4751 = vmatpush1.bf16.msra.mxu0 %v3674
    %4752 = vmatprep.subr.bf16.mxu0 0
    %4753 = vmatpush1.bf16.msra.mxu0 %v3681
    %4754 = vmatprep.subr.bf16.mxu0 0
    %4755 = vmatpush1.bf16.msra.mxu0 %v3688
    %4756 = vmatprep.subr.bf16.mxu0 0
    %4757 = vmatpush1.bf16.msra.mxu0 %v3695
    %4758 = vmatprep.subr.bf16.mxu0 0
    %4759 = vmatpush1.bf16.msra.mxu0 %v3702
    %4760 = vmatprep.subr.bf16.mxu0 0
    %4761 = vmatpush1.bf16.msra.mxu0 %v3709
    %4762 = vmatprep.subr.bf16.mxu0 0
    %4763 = vmatpush1.bf16.msra.mxu0 %v3716
    %4764 = vmatprep.subr.bf16.mxu0 0
    %4765 = vmatpush1.bf16.msra.mxu0 0
    %4766 = vmatprep.subr.bf16.mxu0 0
    %4767 = vmatpush1.bf16.msra.mxu0 0
    %4768 = vmatprep.subr.bf16.mxu0 0
    %4769 = vmatpush1.bf16.msra.mxu0 0
    %4770 = vmatprep.subr.bf16.mxu0 0
    %4771 = vmatpush1.bf16.msra.mxu0 0
    %4772 = vmatprep.subr.bf16.mxu0 0
    %4773 = vmatpush1.bf16.msra.mxu0 0
    %4774 = vmatprep.subr.bf16.mxu0 0
    %4775 = vmatpush1.bf16.msra.mxu0 0
    %4776 = vmatprep.subr.bf16.mxu0 0
    %4777 = vmatpush1.bf16.msra.mxu0 0
    %4778 = vmatprep.subr.bf16.mxu0 0
    %4779 = vmatpush1.bf16.msra.mxu0 0
    %4780 = vmatprep.mubr.bf16.mxu0 0
    %4781 = vmatmul.mubr.bf16.gmra.mrb[0].mxu0 %v1607
    %v4782 = vpop.f32.mrb[0].mxu0
    %v4783 = vadd.f32 %v4742, %v4782
    %v4784 = vpop.f32.mrb[0].mxu0
    %v4785 = vpop.f32.mrb[0].mxu0
    %v4786 = vadd.f32 %v4745, %v4785
    %v4787 = vpop.f32.mrb[0].mxu0
    %4788 = vdwg.mxu0
    %v4789 = vmax.f32 %v4273, 0.0
    %v4790 = vmax.f32 %v4275, 0.0
    %v4791 = vmax.f32 %v4445, 0.0
    %v4792 = vmax.f32 %v4447, 0.0
    %v4793 = vmax.f32 %v4617, 0.0
    %v4794 = vmax.f32 %v4619, 0.0
    %v4795 = vmax.f32 %v4783, 0.0
    %v4796 = vmax.f32 %v4277, 0.0
    %v4797 = vmax.f32 %v4279, 0.0
    %v4798 = vmax.f32 %v4449, 0.0
    %v4799 = vmax.f32 %v4451, 0.0
    %v4800 = vmax.f32 %v4621, 0.0
    %v4801 = vmax.f32 %v4623, 0.0
    %v4802 = vmax.f32 %v4786, 0.0
    %v4803 = vpack.c.bf16 %v4796, %v4789
    %v4804 = vpack.c.bf16 %v4797, %v4790
    %v4805 = vpack.c.bf16 %v4798, %v4791
    %v4806 = vpack.c.bf16 %v4799, %v4792
    %v4807 = vpack.c.bf16 %v4800, %v4793
    %v4808 = vpack.c.bf16 %v4801, %v4794
    %v4809 = vpack.c.bf16 %v4802, %v4795
    %v4810 = vld [vmem:[#allocation9] sm:$0xff]
    %v4811 = vld [vmem:[#allocation9 + $0x8] sm:$0xf]
    %v4812 = vld [vmem:[#allocation9 + $0xc] sm:$0xff]
    %v4813 = vld [vmem:[#allocation9 + $0x14] sm:$0xf]
    %v4814 = vld [vmem:[#allocation9 + $0x18] sm:$0xff]
    %v4815 = vld [vmem:[#allocation9 + $0x20] sm:$0xf]
    %v4816 = vld [vmem:[#allocation9 + $0x24] sm:$0xff]
    %v4817 = vld [vmem:[#allocation9 + $0x2c] sm:$0xf]
    %v4818 = vld [vmem:[#allocation9 + $0x30] sm:$0xff]
    %v4819 = vld [vmem:[#allocation9 + $0x38] sm:$0xf]
    %v4820 = vld [vmem:[#allocation9 + $0x3c] sm:$0xff]
    %v4821 = vld [vmem:[#allocation9 + $0x44] sm:$0xf]
    %v4822 = vld [vmem:[#allocation9 + $0x48] sm:$0xff]
    %v4823 = vld [vmem:[#allocation9 + $0x50] sm:$0xf]
    %v4824 = vld [vmem:[#allocation9 + $0x54] sm:$0xff]
    %v4825 = vld [vmem:[#allocation9 + $0x5c] sm:$0xf]
    %v4826 = vld [vmem:[#allocation9 + $0x60] sm:$0xff]
    %v4827 = vld [vmem:[#allocation9 + $0x68] sm:$0xf]
    %v4828 = vld [vmem:[#allocation9 + $0x6c] sm:$0xff]
    %v4829 = vld [vmem:[#allocation9 + $0x74] sm:$0xf]
    %v4830 = vld [vmem:[#allocation9 + $0x78] sm:$0xff]
    %v4831 = vld [vmem:[#allocation9 + $0x80] sm:$0xf]
    %v4832 = vld [vmem:[#allocation9 + $0x84] sm:$0xff]
    %v4833 = vld [vmem:[#allocation9 + $0x8c] sm:$0xf]
    %v4834 = vld [vmem:[#allocation9 + $0x90] sm:$0xff]
    %v4835 = vld [vmem:[#allocation9 + $0x98] sm:$0xf]
    %v4836 = vld [vmem:[#allocation9 + $0x9c] sm:$0xff]
    %v4837 = vld [vmem:[#allocation9 + $0xa4] sm:$0xf]
    %v4838 = vld [vmem:[#allocation9 + $0xa8] sm:$0xff]
    %v4839 = vld [vmem:[#allocation9 + $0xb0] sm:$0xf]
    %v4840 = vld [vmem:[#allocation9 + $0xb4] sm:$0xff]
    %v4841 = vld [vmem:[#allocation9 + $0xbc] sm:$0xf]
    %v4842 = vld [vmem:[#allocation9 + $0xc0] sm:$0xff]
    %v4843 = vld [vmem:[#allocation9 + $0xc8] sm:$0xf]
    %v4844 = vld [vmem:[#allocation9 + $0xcc] sm:$0xff]
    %v4845 = vld [vmem:[#allocation9 + $0xd4] sm:$0xf]
    %v4846 = vld [vmem:[#allocation9 + $0xd8] sm:$0xff]
    %v4847 = vld [vmem:[#allocation9 + $0xe0] sm:$0xf]
    %v4848 = vld [vmem:[#allocation9 + $0xe4] sm:$0xff]
    %v4849 = vld [vmem:[#allocation9 + $0xec] sm:$0xf]
    %v4850 = vld [vmem:[#allocation9 + $0xf0] sm:$0xff]
    %v4851 = vld [vmem:[#allocation9 + $0xf8] sm:$0xf]
    %v4852 = vld [vmem:[#allocation9 + $0xfc] sm:$0xff]
    %v4853 = vld [vmem:[#allocation9 + $0x104] sm:$0xf]
    %v4854 = vld [vmem:[#allocation9 + $0x108] sm:$0xff]
    %v4855 = vld [vmem:[#allocation9 + $0x110] sm:$0xf]
    %v4856 = vld [vmem:[#allocation9 + $0x114] sm:$0xff]
    %v4857 = vld [vmem:[#allocation9 + $0x11c] sm:$0xf]
    %v4858 = vld [vmem:[#allocation9 + $0x120] sm:$0xff]
    %v4859 = vld [vmem:[#allocation9 + $0x128] sm:$0xf]
    %v4860 = vld [vmem:[#allocation9 + $0x12c] sm:$0xff]
    %v4861 = vld [vmem:[#allocation9 + $0x134] sm:$0xf]
    %v4862 = vld [vmem:[#allocation9 + $0x138] sm:$0xff]
    %v4863 = vld [vmem:[#allocation9 + $0x140] sm:$0xf]
    %v4864 = vld [vmem:[#allocation9 + $0x144] sm:$0xff]
    %v4865 = vld [vmem:[#allocation9 + $0x14c] sm:$0xf]
    %v4866 = vld [vmem:[#allocation9 + $0x150] sm:$0xff]
    %v4867 = vld [vmem:[#allocation9 + $0x158] sm:$0xf]
    %v4868 = vld [vmem:[#allocation9 + $0x15c] sm:$0xff]
    %v4869 = vld [vmem:[#allocation9 + $0x164] sm:$0xf]
    %v4870 = vld [vmem:[#allocation9 + $0x168] sm:$0xff]
    %v4871 = vld [vmem:[#allocation9 + $0x170] sm:$0xf]
    %v4872 = vld [vmem:[#allocation9 + $0x174] sm:$0xff]
    %v4873 = vld [vmem:[#allocation9 + $0x17c] sm:$0xf]
    %v4874 = vld [vmem:[#allocation9 + $0x180] sm:$0xff]
    %v4875 = vld [vmem:[#allocation9 + $0x188] sm:$0xf]
    %v4876 = vld [vmem:[#allocation9 + $0x18c] sm:$0xff]
    %v4877 = vld [vmem:[#allocation9 + $0x194] sm:$0xf]
    %v4878 = vld [vmem:[#allocation9 + $0x198] sm:$0xff]
    %v4879 = vld [vmem:[#allocation9 + $0x1a0] sm:$0xf]
    %v4880 = vld [vmem:[#allocation9 + $0x1a4] sm:$0xff]
    %v4881 = vld [vmem:[#allocation9 + $0x1ac] sm:$0xf]
    %v4882 = vld [vmem:[#allocation9 + $0x1b0] sm:$0xff]
    %v4883 = vld [vmem:[#allocation9 + $0x1b8] sm:$0xf]
    %v4884 = vld [vmem:[#allocation9 + $0x1bc] sm:$0xff]
    %v4885 = vld [vmem:[#allocation9 + $0x1c4] sm:$0xf]
    %v4886 = vld [vmem:[#allocation9 + $0x1c8] sm:$0xff]
    %v4887 = vld [vmem:[#allocation9 + $0x1d0] sm:$0xf]
    %v4888 = vld [vmem:[#allocation9 + $0x1d4] sm:$0xff]
    %v4889 = vld [vmem:[#allocation9 + $0x1dc] sm:$0xf]
    %v4890 = vld [vmem:[#allocation9 + $0x1e0] sm:$0xff]
    %v4891 = vld [vmem:[#allocation9 + $0x1e8] sm:$0xf]
    %v4892 = vld [vmem:[#allocation9 + $0x1ec] sm:$0xff]
    %v4893 = vld [vmem:[#allocation9 + $0x1f4] sm:$0xf]
    %v4894 = vld [vmem:[#allocation9 + $0x1f8] sm:$0xff]
    %v4895 = vld [vmem:[#allocation9 + $0x200] sm:$0xf]
    %v4896 = vld [vmem:[#allocation9 + $0x204] sm:$0xff]
    %v4897 = vld [vmem:[#allocation9 + $0x20c] sm:$0xf]
    %v4898 = vld [vmem:[#allocation9 + $0x210] sm:$0xff]
    %v4899 = vld [vmem:[#allocation9 + $0x218] sm:$0xf]
    %v4900 = vld [vmem:[#allocation9 + $0x21c] sm:$0xff]
    %v4901 = vld [vmem:[#allocation9 + $0x224] sm:$0xf]
    %v4902 = vld [vmem:[#allocation9 + $0x228] sm:$0xff]
    %v4903 = vld [vmem:[#allocation9 + $0x230] sm:$0xf]
    %v4904 = vld [vmem:[#allocation9 + $0x234] sm:$0xff]
    %v4905 = vld [vmem:[#allocation9 + $0x23c] sm:$0xf]
    %v4906 = vld [vmem:[#allocation9 + $0x240] sm:$0xff]
    %v4907 = vld [vmem:[#allocation9 + $0x248] sm:$0xf]
    %v4908 = vld [vmem:[#allocation9 + $0x24c] sm:$0xff]
    %v4909 = vld [vmem:[#allocation9 + $0x254] sm:$0xf]
    %v4910 = vld [vmem:[#allocation9 + $0x258] sm:$0xff]
    %v4911 = vld [vmem:[#allocation9 + $0x260] sm:$0xf]
    %v4912 = vld [vmem:[#allocation9 + $0x264] sm:$0xff]
    %v4913 = vld [vmem:[#allocation9 + $0x26c] sm:$0xf]
    %v4914 = vld [vmem:[#allocation9 + $0x270] sm:$0xff]
    %v4915 = vld [vmem:[#allocation9 + $0x278] sm:$0xf]
    %v4916 = vld [vmem:[#allocation9 + $0x27c] sm:$0xff]
    %v4917 = vld [vmem:[#allocation9 + $0x284] sm:$0xf]
    %v4918 = vld [vmem:[#allocation9 + $0x288] sm:$0xff]
    %v4919 = vld [vmem:[#allocation9 + $0x290] sm:$0xf]
    %v4920 = vld [vmem:[#allocation9 + $0x294] sm:$0xff]
    %v4921 = vld [vmem:[#allocation9 + $0x29c] sm:$0xf]
    %v4922 = vld [vmem:[#allocation9 + $0x2a0] sm:$0xff]
    %v4923 = vld [vmem:[#allocation9 + $0x2a8] sm:$0xf]
    %v4924 = vld [vmem:[#allocation9 + $0x2ac] sm:$0xff]
    %v4925 = vld [vmem:[#allocation9 + $0x2b4] sm:$0xf]
    %v4926 = vld [vmem:[#allocation9 + $0x2b8] sm:$0xff]
    %v4927 = vld [vmem:[#allocation9 + $0x2c0] sm:$0xf]
    %v4928 = vld [vmem:[#allocation9 + $0x2c4] sm:$0xff]
    %v4929 = vld [vmem:[#allocation9 + $0x2cc] sm:$0xf]
    %v4930 = vld [vmem:[#allocation9 + $0x2d0] sm:$0xff]
    %v4931 = vld [vmem:[#allocation9 + $0x2d8] sm:$0xf]
    %v4932 = vld [vmem:[#allocation9 + $0x2dc] sm:$0xff]
    %v4933 = vld [vmem:[#allocation9 + $0x2e4] sm:$0xf]
    %v4934 = vld [vmem:[#allocation9 + $0x2e8] sm:$0xff]
    %v4935 = vld [vmem:[#allocation9 + $0x2f0] sm:$0xf]
    %v4936 = vld [vmem:[#allocation9 + $0x2f4] sm:$0xff]
    %v4937 = vld [vmem:[#allocation9 + $0x2fc] sm:$0xf]
    %v4938 = vld [vmem:[#allocation9 + $0x300] sm:$0xff]
    %v4939 = vld [vmem:[#allocation9 + $0x308] sm:$0xf]
    %v4940 = vld [vmem:[#allocation9 + $0x30c] sm:$0xff]
    %v4941 = vld [vmem:[#allocation9 + $0x314] sm:$0xf]
    %v4942 = vld [vmem:[#allocation9 + $0x318] sm:$0xff]
    %v4943 = vld [vmem:[#allocation9 + $0x320] sm:$0xf]
    %v4944 = vld [vmem:[#allocation9 + $0x324] sm:$0xff]
    %v4945 = vld [vmem:[#allocation9 + $0x32c] sm:$0xf]
    %v4946 = vld [vmem:[#allocation9 + $0x330] sm:$0xff]
    %v4947 = vld [vmem:[#allocation9 + $0x338] sm:$0xf]
    %v4948 = vld [vmem:[#allocation9 + $0x33c] sm:$0xff]
    %v4949 = vld [vmem:[#allocation9 + $0x344] sm:$0xf]
    %v4950 = vld [vmem:[#allocation9 + $0x348] sm:$0xff]
    %v4951 = vld [vmem:[#allocation9 + $0x350] sm:$0xf]
    %v4952 = vld [vmem:[#allocation9 + $0x354] sm:$0xff]
    %v4953 = vld [vmem:[#allocation9 + $0x35c] sm:$0xf]
    %v4954 = vld [vmem:[#allocation9 + $0x360] sm:$0xff]
    %v4955 = vld [vmem:[#allocation9 + $0x368] sm:$0xf]
    %v4956 = vld [vmem:[#allocation9 + $0x36c] sm:$0xff]
    %v4957 = vld [vmem:[#allocation9 + $0x374] sm:$0xf]
    %v4958 = vld [vmem:[#allocation9 + $0x378] sm:$0xff]
    %v4959 = vld [vmem:[#allocation9 + $0x380] sm:$0xf]
    %v4960 = vld [vmem:[#allocation9 + $0x384] sm:$0xff]
    %v4961 = vld [vmem:[#allocation9 + $0x38c] sm:$0xf]
    %v4962 = vld [vmem:[#allocation9 + $0x390] sm:$0xff]
    %v4963 = vld [vmem:[#allocation9 + $0x398] sm:$0xf]
    %v4964 = vld [vmem:[#allocation9 + $0x39c] sm:$0xff]
    %v4965 = vld [vmem:[#allocation9 + $0x3a4] sm:$0xf]
    %v4966 = vld [vmem:[#allocation9 + $0x3a8] sm:$0xff]
    %v4967 = vld [vmem:[#allocation9 + $0x3b0] sm:$0xf]
    %v4968 = vld [vmem:[#allocation9 + $0x3b4] sm:$0xff]
    %v4969 = vld [vmem:[#allocation9 + $0x3bc] sm:$0xf]
    %v4970 = vld [vmem:[#allocation9 + $0x3c0] sm:$0xff]
    %v4971 = vld [vmem:[#allocation9 + $0x3c8] sm:$0xf]
    %v4972 = vld [vmem:[#allocation9 + $0x3cc] sm:$0xff]
    %v4973 = vld [vmem:[#allocation9 + $0x3d4] sm:$0xf]
    %v4974 = vld [vmem:[#allocation9 + $0x3d8] sm:$0xff]
    %v4975 = vld [vmem:[#allocation9 + $0x3e0] sm:$0xf]
    %v4976 = vld [vmem:[#allocation9 + $0x3e4] sm:$0xff]
    %v4977 = vld [vmem:[#allocation9 + $0x3ec] sm:$0xf]
    %v4978 = vld [vmem:[#allocation9 + $0x3f0] sm:$0xff]
    %v4979 = vld [vmem:[#allocation9 + $0x3f8] sm:$0xf]
    %v4980 = vld [vmem:[#allocation9 + $0x3fc] sm:$0xff]
    %v4981 = vld [vmem:[#allocation9 + $0x404] sm:$0xf]
    %v4982 = vld [vmem:[#allocation9 + $0x408] sm:$0xff]
    %v4983 = vld [vmem:[#allocation9 + $0x410] sm:$0xf]
    %v4984 = vld [vmem:[#allocation9 + $0x414] sm:$0xff]
    %v4985 = vld [vmem:[#allocation9 + $0x41c] sm:$0xf]
    %v4986 = vld [vmem:[#allocation9 + $0x420] sm:$0xff]
    %v4987 = vld [vmem:[#allocation9 + $0x428] sm:$0xf]
    %v4988 = vld [vmem:[#allocation9 + $0x42c] sm:$0xff]
    %v4989 = vld [vmem:[#allocation9 + $0x434] sm:$0xf]
    %v4990 = vld [vmem:[#allocation9 + $0x438] sm:$0xff]
    %v4991 = vld [vmem:[#allocation9 + $0x440] sm:$0xf]
    %v4992 = vld [vmem:[#allocation9 + $0x444] sm:$0xff]
    %v4993 = vld [vmem:[#allocation9 + $0x44c] sm:$0xf]
    %v4994 = vld [vmem:[#allocation9 + $0x450] sm:$0xff]
    %v4995 = vld [vmem:[#allocation9 + $0x458] sm:$0xf]
    %v4996 = vld [vmem:[#allocation9 + $0x45c] sm:$0xff]
    %v4997 = vld [vmem:[#allocation9 + $0x464] sm:$0xf]
    %v4998 = vld [vmem:[#allocation9 + $0x468] sm:$0xff]
    %v4999 = vld [vmem:[#allocation9 + $0x470] sm:$0xf]
    %v5000 = vld [vmem:[#allocation9 + $0x474] sm:$0xff]
    %v5001 = vld [vmem:[#allocation9 + $0x47c] sm:$0xf]
    %v5002 = vld [vmem:[#allocation9 + $0x480] sm:$0xff]
    %v5003 = vld [vmem:[#allocation9 + $0x488] sm:$0xf]
    %v5004 = vld [vmem:[#allocation9 + $0x48c] sm:$0xff]
    %v5005 = vld [vmem:[#allocation9 + $0x494] sm:$0xf]
    %v5006 = vld [vmem:[#allocation9 + $0x498] sm:$0xff]
    %v5007 = vld [vmem:[#allocation9 + $0x4a0] sm:$0xf]
    %v5008 = vld [vmem:[#allocation9 + $0x4a4] sm:$0xff]
    %v5009 = vld [vmem:[#allocation9 + $0x4ac] sm:$0xf]
    %v5010 = vld [vmem:[#allocation9 + $0x4b0] sm:$0xff]
    %v5011 = vld [vmem:[#allocation9 + $0x4b8] sm:$0xf]
    %v5012 = vld [vmem:[#allocation9 + $0x4bc] sm:$0xff]
    %v5013 = vld [vmem:[#allocation9 + $0x4c4] sm:$0xf]
    %v5014 = vld [vmem:[#allocation9 + $0x4c8] sm:$0xff]
    %v5015 = vld [vmem:[#allocation9 + $0x4d0] sm:$0xf]
    %v5016 = vld [vmem:[#allocation9 + $0x4d4] sm:$0xff]
    %v5017 = vld [vmem:[#allocation9 + $0x4dc] sm:$0xf]
    %v5018 = vld [vmem:[#allocation9 + $0x4e0] sm:$0xff]
    %v5019 = vld [vmem:[#allocation9 + $0x4e8] sm:$0xf]
    %v5020 = vld [vmem:[#allocation9 + $0x4ec] sm:$0xff]
    %v5021 = vld [vmem:[#allocation9 + $0x4f4] sm:$0xf]
    %v5022 = vld [vmem:[#allocation9 + $0x4f8] sm:$0xff]
    %v5023 = vld [vmem:[#allocation9 + $0x500] sm:$0xf]
    %v5024 = vld [vmem:[#allocation9 + $0x504] sm:$0xff]
    %v5025 = vld [vmem:[#allocation9 + $0x50c] sm:$0xf]
    %v5026 = vld [vmem:[#allocation9 + $0x510] sm:$0xff]
    %v5027 = vld [vmem:[#allocation9 + $0x518] sm:$0xf]
    %v5028 = vld [vmem:[#allocation9 + $0x51c] sm:$0xff]
    %v5029 = vld [vmem:[#allocation9 + $0x524] sm:$0xf]
    %v5030 = vld [vmem:[#allocation9 + $0x528] sm:$0xff]
    %v5031 = vld [vmem:[#allocation9 + $0x530] sm:$0xf]
    %v5032 = vld [vmem:[#allocation9 + $0x534] sm:$0xff]
    %v5033 = vld [vmem:[#allocation9 + $0x53c] sm:$0xf]
    %v5034 = vld [vmem:[#allocation10] sm:$0x7]
    %v5036 = vlaneseq
    %v5037 = vshrl.u32 %v5036, 7
    %v5038 = vsub.s32 0, %v5037
    %v5039 = vrot.slane %v5034, %v5038
    %v5040 = vlaneseq
    %v5041 = vshrl.u32 %v5040, 7
    %v5042 = vsub.s32 1, %v5041
    %v5043 = vrot.slane %v5034, %v5042
    %v5044 = vlaneseq
    %v5045 = vshrl.u32 %v5044, 7
    %v5046 = vsub.s32 2, %v5045
    %v5047 = vrot.slane %v5034, %v5046
    %v5275 = vunpack.c.l.b16 %v4810
    %v5276 = vunpack.c.h.b16 %v4810
    %v5277 = vunpack.c.l.b16 %v4811
    %v5278 = vunpack.c.l.b16 %v4812
    %v5279 = vunpack.c.h.b16 %v4812
    %v5280 = vunpack.c.l.b16 %v4813
    %v5281 = vunpack.c.l.b16 %v4814
    %v5282 = vunpack.c.h.b16 %v4814
    %v5283 = vunpack.c.l.b16 %v4815
    %v5284 = vunpack.c.l.b16 %v4816
    %v5285 = vunpack.c.h.b16 %v4816
    %v5286 = vunpack.c.l.b16 %v4817
    %v5287 = vunpack.c.l.b16 %v4818
    %v5288 = vunpack.c.h.b16 %v4818
    %v5289 = vunpack.c.l.b16 %v4819
    %v5290 = vunpack.c.l.b16 %v4820
    %v5291 = vunpack.c.h.b16 %v4820
    %v5292 = vunpack.c.l.b16 %v4821
    %v5293 = vunpack.c.l.b16 %v4822
    %v5294 = vunpack.c.h.b16 %v4822
    %v5295 = vunpack.c.l.b16 %v4823
    %v5296 = vunpack.c.l.b16 %v4824
    %v5297 = vunpack.c.h.b16 %v4824
    %v5298 = vunpack.c.l.b16 %v4825
    %v5299 = vunpack.c.l.b16 %v4826
    %v5300 = vunpack.c.h.b16 %v4826
    %v5301 = vunpack.c.l.b16 %v4827
    %v5302 = vunpack.c.l.b16 %v4828
    %v5303 = vunpack.c.h.b16 %v4828
    %v5304 = vunpack.c.l.b16 %v4829
    %v5305 = vunpack.c.l.b16 %v4830
    %v5306 = vunpack.c.h.b16 %v4830
    %v5307 = vunpack.c.l.b16 %v4831
    %v5308 = vunpack.c.l.b16 %v4832
    %v5309 = vunpack.c.h.b16 %v4832
    %v5310 = vunpack.c.l.b16 %v4833
    %v5311 = vunpack.c.l.b16 %v4834
    %v5312 = vunpack.c.h.b16 %v4834
    %v5313 = vunpack.c.l.b16 %v4835
    %v5314 = vunpack.c.l.b16 %v4836
    %v5315 = vunpack.c.h.b16 %v4836
    %v5316 = vunpack.c.l.b16 %v4837
    %v5317 = vunpack.c.l.b16 %v4838
    %v5318 = vunpack.c.h.b16 %v4838
    %v5319 = vunpack.c.l.b16 %v4839
    %v5320 = vunpack.c.l.b16 %v4840
    %v5321 = vunpack.c.h.b16 %v4840
    %v5322 = vunpack.c.l.b16 %v4841
    %v5323 = vunpack.c.l.b16 %v4842
    %v5324 = vunpack.c.h.b16 %v4842
    %v5325 = vunpack.c.l.b16 %v4843
    %v5326 = vunpack.c.l.b16 %v4844
    %v5327 = vunpack.c.h.b16 %v4844
    %v5328 = vunpack.c.l.b16 %v4845
    %v5329 = vunpack.c.l.b16 %v4846
    %v5330 = vunpack.c.h.b16 %v4846
    %v5331 = vunpack.c.l.b16 %v4847
    %v5332 = vunpack.c.l.b16 %v4848
    %v5333 = vunpack.c.h.b16 %v4848
    %v5334 = vunpack.c.l.b16 %v4849
    %v5335 = vunpack.c.l.b16 %v4850
    %v5336 = vunpack.c.h.b16 %v4850
    %v5337 = vunpack.c.l.b16 %v4851
    %v5338 = vunpack.c.l.b16 %v4852
    %v5339 = vunpack.c.h.b16 %v4852
    %v5340 = vunpack.c.l.b16 %v4853
    %v5341 = vunpack.c.l.b16 %v4854
    %v5342 = vunpack.c.h.b16 %v4854
    %v5343 = vunpack.c.l.b16 %v4855
    %v5344 = vunpack.c.l.b16 %v4856
    %v5345 = vunpack.c.h.b16 %v4856
    %v5346 = vunpack.c.l.b16 %v4857
    %v5347 = vunpack.c.l.b16 %v4858
    %v5348 = vunpack.c.h.b16 %v4858
    %v5349 = vunpack.c.l.b16 %v4859
    %v5350 = vunpack.c.l.b16 %v4860
    %v5351 = vunpack.c.h.b16 %v4860
    %v5352 = vunpack.c.l.b16 %v4861
    %v5353 = vunpack.c.l.b16 %v4862
    %v5354 = vunpack.c.h.b16 %v4862
    %v5355 = vunpack.c.l.b16 %v4863
    %v5356 = vunpack.c.l.b16 %v4864
    %v5357 = vunpack.c.h.b16 %v4864
    %v5358 = vunpack.c.l.b16 %v4865
    %v5359 = vunpack.c.l.b16 %v4866
    %v5360 = vunpack.c.h.b16 %v4866
    %v5361 = vunpack.c.l.b16 %v4867
    %v5362 = vunpack.c.l.b16 %v4868
    %v5363 = vunpack.c.h.b16 %v4868
    %v5364 = vunpack.c.l.b16 %v4869
    %v5365 = vunpack.c.l.b16 %v4870
    %v5366 = vunpack.c.h.b16 %v4870
    %v5367 = vunpack.c.l.b16 %v4871
    %v5368 = vunpack.c.l.b16 %v4872
    %v5369 = vunpack.c.h.b16 %v4872
    %v5370 = vunpack.c.l.b16 %v4873
    %v5371 = vunpack.c.l.b16 %v4874
    %v5372 = vunpack.c.h.b16 %v4874
    %v5373 = vunpack.c.l.b16 %v4875
    %v5374 = vunpack.c.l.b16 %v4876
    %v5375 = vunpack.c.h.b16 %v4876
    %v5376 = vunpack.c.l.b16 %v4877
    %v5377 = vunpack.c.l.b16 %v4878
    %v5378 = vunpack.c.h.b16 %v4878
    %v5379 = vunpack.c.l.b16 %v4879
    %v5380 = vunpack.c.l.b16 %v4880
    %v5381 = vunpack.c.h.b16 %v4880
    %v5382 = vunpack.c.l.b16 %v4881
    %v5383 = vunpack.c.l.b16 %v4882
    %v5384 = vunpack.c.h.b16 %v4882
    %v5385 = vunpack.c.l.b16 %v4883
    %v5386 = vunpack.c.l.b16 %v4884
    %v5387 = vunpack.c.h.b16 %v4884
    %v5388 = vunpack.c.l.b16 %v4885
    %v5389 = vunpack.c.l.b16 %v4886
    %v5390 = vunpack.c.h.b16 %v4886
    %v5391 = vunpack.c.l.b16 %v4887
    %v5392 = vunpack.c.l.b16 %v4888
    %v5393 = vunpack.c.h.b16 %v4888
    %v5394 = vunpack.c.l.b16 %v4889
    %v5395 = vunpack.c.l.b16 %v4890
    %v5396 = vunpack.c.h.b16 %v4890
    %v5397 = vunpack.c.l.b16 %v4891
    %v5398 = vunpack.c.l.b16 %v4892
    %v5399 = vunpack.c.h.b16 %v4892
    %v5400 = vunpack.c.l.b16 %v4893
    %v5401 = vunpack.c.l.b16 %v4894
    %v5402 = vunpack.c.h.b16 %v4894
    %v5403 = vunpack.c.l.b16 %v4895
    %v5404 = vunpack.c.l.b16 %v4896
    %v5405 = vunpack.c.h.b16 %v4896
    %v5406 = vunpack.c.l.b16 %v4897
    %v5407 = vunpack.c.l.b16 %v4898
    %v5408 = vunpack.c.h.b16 %v4898
    %v5409 = vunpack.c.l.b16 %v4899
    %v5410 = vunpack.c.l.b16 %v4900
    %v5411 = vunpack.c.h.b16 %v4900
    %v5412 = vunpack.c.l.b16 %v4901
    %v5413 = vunpack.c.l.b16 %v4902
    %v5414 = vunpack.c.h.b16 %v4902
    %v5415 = vunpack.c.l.b16 %v4903
    %v5416 = vunpack.c.l.b16 %v4904
    %v5417 = vunpack.c.h.b16 %v4904
    %v5418 = vunpack.c.l.b16 %v4905
    %v5419 = vunpack.c.l.b16 %v4906
    %v5420 = vunpack.c.h.b16 %v4906
    %v5421 = vunpack.c.l.b16 %v4907
    %v5422 = vunpack.c.l.b16 %v4908
    %v5423 = vunpack.c.h.b16 %v4908
    %v5424 = vunpack.c.l.b16 %v4909
    %v5425 = vunpack.c.l.b16 %v4910
    %v5426 = vunpack.c.h.b16 %v4910
    %v5427 = vunpack.c.l.b16 %v4911
    %v5428 = vunpack.c.l.b16 %v4912
    %v5429 = vunpack.c.h.b16 %v4912
    %v5430 = vunpack.c.l.b16 %v4913
    %v5431 = vunpack.c.l.b16 %v4914
    %v5432 = vunpack.c.h.b16 %v4914
    %v5433 = vunpack.c.l.b16 %v4915
    %v5434 = vunpack.c.l.b16 %v4916
    %v5435 = vunpack.c.h.b16 %v4916
    %v5436 = vunpack.c.l.b16 %v4917
    %v5437 = vunpack.c.l.b16 %v4918
    %v5438 = vunpack.c.h.b16 %v4918
    %v5439 = vunpack.c.l.b16 %v4919
    %v5440 = vunpack.c.l.b16 %v4920
    %v5441 = vunpack.c.h.b16 %v4920
    %v5442 = vunpack.c.l.b16 %v4921
    %v5443 = vunpack.c.l.b16 %v4922
    %v5444 = vunpack.c.h.b16 %v4922
    %v5445 = vunpack.c.l.b16 %v4923
    %v5446 = vunpack.c.l.b16 %v4924
    %v5447 = vunpack.c.h.b16 %v4924
    %v5448 = vunpack.c.l.b16 %v4925
    %v5449 = vunpack.c.l.b16 %v4926
    %v5450 = vunpack.c.h.b16 %v4926
    %v5451 = vunpack.c.l.b16 %v4927
    %v5452 = vunpack.c.l.b16 %v4928
    %v5453 = vunpack.c.h.b16 %v4928
    %v5454 = vunpack.c.l.b16 %v4929
    %v5455 = vunpack.c.l.b16 %v4930
    %v5456 = vunpack.c.h.b16 %v4930
    %v5457 = vunpack.c.l.b16 %v4931
    %v5458 = vunpack.c.l.b16 %v4932
    %v5459 = vunpack.c.h.b16 %v4932
    %v5460 = vunpack.c.l.b16 %v4933
    %v5461 = vunpack.c.l.b16 %v4934
    %v5462 = vunpack.c.h.b16 %v4934
    %v5463 = vunpack.c.l.b16 %v4935
    %v5464 = vunpack.c.l.b16 %v4936
    %v5465 = vunpack.c.h.b16 %v4936
    %v5466 = vunpack.c.l.b16 %v4937
    %v5467 = vunpack.c.l.b16 %v4938
    %v5468 = vunpack.c.h.b16 %v4938
    %v5469 = vunpack.c.l.b16 %v4939
    %v5470 = vunpack.c.l.b16 %v4940
    %v5471 = vunpack.c.h.b16 %v4940
    %v5472 = vunpack.c.l.b16 %v4941
    %v5473 = vunpack.c.l.b16 %v4942
    %v5474 = vunpack.c.h.b16 %v4942
    %v5475 = vunpack.c.l.b16 %v4943
    %v5476 = vunpack.c.l.b16 %v4944
    %v5477 = vunpack.c.h.b16 %v4944
    %v5478 = vunpack.c.l.b16 %v4945
    %v5479 = vunpack.c.l.b16 %v4946
    %v5480 = vunpack.c.h.b16 %v4946
    %v5481 = vunpack.c.l.b16 %v4947
    %v5482 = vunpack.c.l.b16 %v4948
    %v5483 = vunpack.c.h.b16 %v4948
    %v5484 = vunpack.c.l.b16 %v4949
    %v5485 = vunpack.c.l.b16 %v4950
    %v5486 = vunpack.c.h.b16 %v4950
    %v5487 = vunpack.c.l.b16 %v4951
    %v5488 = vunpack.c.l.b16 %v4952
    %v5489 = vunpack.c.h.b16 %v4952
    %v5490 = vunpack.c.l.b16 %v4953
    %v5491 = vunpack.c.l.b16 %v4954
    %v5492 = vunpack.c.h.b16 %v4954
    %v5493 = vunpack.c.l.b16 %v4955
    %v5494 = vunpack.c.l.b16 %v4956
    %v5495 = vunpack.c.h.b16 %v4956
    %v5496 = vunpack.c.l.b16 %v4957
    %v5497 = vunpack.c.l.b16 %v4958
    %v5498 = vunpack.c.h.b16 %v4958
    %v5499 = vunpack.c.l.b16 %v4959
    %v5500 = vunpack.c.l.b16 %v4960
    %v5501 = vunpack.c.h.b16 %v4960
    %v5502 = vunpack.c.l.b16 %v4961
    %v5503 = vunpack.c.l.b16 %v4962
    %v5504 = vunpack.c.h.b16 %v4962
    %v5505 = vunpack.c.l.b16 %v4963
    %v5506 = vunpack.c.l.b16 %v4964
    %v5507 = vunpack.c.h.b16 %v4964
    %v5508 = vunpack.c.l.b16 %v4965
    %v5509 = vunpack.c.l.b16 %v4966
    %v5510 = vunpack.c.h.b16 %v4966
    %v5511 = vunpack.c.l.b16 %v4967
    %v5512 = vunpack.c.l.b16 %v4968
    %v5513 = vunpack.c.h.b16 %v4968
    %v5514 = vunpack.c.l.b16 %v4969
    %v5515 = vunpack.c.l.b16 %v4970
    %v5516 = vunpack.c.h.b16 %v4970
    %v5517 = vunpack.c.l.b16 %v4971
    %v5518 = vunpack.c.l.b16 %v4972
    %v5519 = vunpack.c.h.b16 %v4972
    %v5520 = vunpack.c.l.b16 %v4973
    %v5521 = vunpack.c.l.b16 %v4974
    %v5522 = vunpack.c.h.b16 %v4974
    %v5523 = vunpack.c.l.b16 %v4975
    %v5524 = vunpack.c.l.b16 %v4976
    %v5525 = vunpack.c.h.b16 %v4976
    %v5526 = vunpack.c.l.b16 %v4977
    %v5527 = vunpack.c.l.b16 %v4978
    %v5528 = vunpack.c.h.b16 %v4978
    %v5529 = vunpack.c.l.b16 %v4979
    %v5530 = vunpack.c.l.b16 %v4980
    %v5531 = vunpack.c.h.b16 %v4980
    %v5532 = vunpack.c.l.b16 %v4981
    %v5533 = vunpack.c.l.b16 %v4982
    %v5534 = vunpack.c.h.b16 %v4982
    %v5535 = vunpack.c.l.b16 %v4983
    %v5536 = vunpack.c.l.b16 %v4984
    %v5537 = vunpack.c.h.b16 %v4984
    %v5538 = vunpack.c.l.b16 %v4985
    %v5539 = vunpack.c.l.b16 %v4986
    %v5540 = vunpack.c.h.b16 %v4986
    %v5541 = vunpack.c.l.b16 %v4987
    %v5542 = vunpack.c.l.b16 %v4988
    %v5543 = vunpack.c.h.b16 %v4988
    %v5544 = vunpack.c.l.b16 %v4989
    %v5545 = vunpack.c.l.b16 %v4990
    %v5546 = vunpack.c.h.b16 %v4990
    %v5547 = vunpack.c.l.b16 %v4991
    %v5548 = vunpack.c.l.b16 %v4992
    %v5549 = vunpack.c.h.b16 %v4992
    %v5550 = vunpack.c.l.b16 %v4993
    %v5551 = vunpack.c.l.b16 %v4994
    %v5552 = vunpack.c.h.b16 %v4994
    %v5553 = vunpack.c.l.b16 %v4995
    %v5554 = vunpack.c.l.b16 %v4996
    %v5555 = vunpack.c.h.b16 %v4996
    %v5556 = vunpack.c.l.b16 %v4997
    %v5557 = vunpack.c.l.b16 %v4998
    %v5558 = vunpack.c.h.b16 %v4998
    %v5559 = vunpack.c.l.b16 %v4999
    %v5560 = vunpack.c.l.b16 %v5000
    %v5561 = vunpack.c.h.b16 %v5000
    %v5562 = vunpack.c.l.b16 %v5001
    %v5563 = vunpack.c.l.b16 %v5002
    %v5564 = vunpack.c.h.b16 %v5002
    %v5565 = vunpack.c.l.b16 %v5003
    %v5566 = vunpack.c.l.b16 %v5004
    %v5567 = vunpack.c.h.b16 %v5004
    %v5568 = vunpack.c.l.b16 %v5005
    %v5569 = vunpack.c.l.b16 %v5006
    %v5570 = vunpack.c.h.b16 %v5006
    %v5571 = vunpack.c.l.b16 %v5007
    %v5572 = vunpack.c.l.b16 %v5008
    %v5573 = vunpack.c.h.b16 %v5008
    %v5574 = vunpack.c.l.b16 %v5009
    %v5575 = vunpack.c.l.b16 %v5010
    %v5576 = vunpack.c.h.b16 %v5010
    %v5577 = vunpack.c.l.b16 %v5011
    %v5578 = vunpack.c.l.b16 %v5012
    %v5579 = vunpack.c.h.b16 %v5012
    %v5580 = vunpack.c.l.b16 %v5013
    %v5581 = vunpack.c.l.b16 %v5014
    %v5582 = vunpack.c.h.b16 %v5014
    %v5583 = vunpack.c.l.b16 %v5015
    %v5584 = vunpack.c.l.b16 %v5016
    %v5585 = vunpack.c.h.b16 %v5016
    %v5586 = vunpack.c.l.b16 %v5017
    %v5587 = vunpack.c.l.b16 %v5018
    %v5588 = vunpack.c.h.b16 %v5018
    %v5589 = vunpack.c.l.b16 %v5019
    %v5590 = vunpack.c.l.b16 %v5020
    %v5591 = vunpack.c.h.b16 %v5020
    %v5592 = vunpack.c.l.b16 %v5021
    %v5593 = vunpack.c.l.b16 %v5022
    %v5594 = vunpack.c.h.b16 %v5022
    %v5595 = vunpack.c.l.b16 %v5023
    %v5596 = vunpack.c.l.b16 %v5024
    %v5597 = vunpack.c.h.b16 %v5024
    %v5598 = vunpack.c.l.b16 %v5025
    %v5599 = vunpack.c.l.b16 %v5026
    %v5600 = vunpack.c.h.b16 %v5026
    %v5601 = vunpack.c.l.b16 %v5027
    %v5602 = vunpack.c.l.b16 %v5028
    %v5603 = vunpack.c.h.b16 %v5028
    %v5604 = vunpack.c.l.b16 %v5029
    %v5605 = vunpack.c.l.b16 %v5030
    %v5606 = vunpack.c.h.b16 %v5030
    %v5607 = vunpack.c.l.b16 %v5031
    %v5608 = vunpack.c.l.b16 %v5032
    %v5609 = vunpack.c.h.b16 %v5032
    %v5610 = vunpack.c.l.b16 %v5033
    %v5611 = vpack.c.b16 %v5278, %v5275
    %v5612 = vpack.c.b16 %v5279, %v5276
    %v5613 = vpack.c.b16 %v5280, %v5277
    %v5614 = vpack.c.b16 %v5284, %v5281
    %v5615 = vpack.c.b16 %v5285, %v5282
    %v5616 = vpack.c.b16 %v5286, %v5283
    %v5617 = vpack.c.b16 %v5290, %v5287
    %v5618 = vpack.c.b16 %v5291, %v5288
    %v5619 = vpack.c.b16 %v5292, %v5289
    %v5620 = vpack.c.b16 %v5296, %v5293
    %v5621 = vpack.c.b16 %v5297, %v5294
    %v5622 = vpack.c.b16 %v5298, %v5295
    %v5623 = vpack.c.b16 %v5302, %v5299
    %v5624 = vpack.c.b16 %v5303, %v5300
    %v5625 = vpack.c.b16 %v5304, %v5301
    %v5626 = vpack.c.b16 %v5308, %v5305
    %v5627 = vpack.c.b16 %v5309, %v5306
    %v5628 = vpack.c.b16 %v5310, %v5307
    %v5629 = vpack.c.b16 %v5314, %v5311
    %v5630 = vpack.c.b16 %v5315, %v5312
    %v5631 = vpack.c.b16 %v5316, %v5313
    %v5632 = vpack.c.b16 %v5320, %v5317
    %v5633 = vpack.c.b16 %v5321, %v5318
    %v5634 = vpack.c.b16 %v5322, %v5319
    %v5635 = vpack.c.b16 %v5326, %v5323
    %v5636 = vpack.c.b16 %v5327, %v5324
    %v5637 = vpack.c.b16 %v5328, %v5325
    %v5638 = vpack.c.b16 %v5332, %v5329
    %v5639 = vpack.c.b16 %v5333, %v5330
    %v5640 = vpack.c.b16 %v5334, %v5331
    %v5641 = vpack.c.b16 %v5338, %v5335
    %v5642 = vpack.c.b16 %v5339, %v5336
    %v5643 = vpack.c.b16 %v5340, %v5337
    %v5644 = vpack.c.b16 %v5344, %v5341
    %v5645 = vpack.c.b16 %v5345, %v5342
    %v5646 = vpack.c.b16 %v5346, %v5343
    %v5647 = vpack.c.b16 %v5350, %v5347
    %v5648 = vpack.c.b16 %v5351, %v5348
    %v5649 = vpack.c.b16 %v5352, %v5349
    %v5650 = vpack.c.b16 %v5356, %v5353
    %v5651 = vpack.c.b16 %v5357, %v5354
    %v5652 = vpack.c.b16 %v5358, %v5355
    %v5653 = vpack.c.b16 %v5362, %v5359
    %v5654 = vpack.c.b16 %v5363, %v5360
    %v5655 = vpack.c.b16 %v5364, %v5361
    %v5656 = vpack.c.b16 %v5368, %v5365
    %v5657 = vpack.c.b16 %v5369, %v5366
    %v5658 = vpack.c.b16 %v5370, %v5367
    %v5659 = vpack.c.b16 %v5374, %v5371
    %v5660 = vpack.c.b16 %v5375, %v5372
    %v5661 = vpack.c.b16 %v5376, %v5373
    %v5662 = vpack.c.b16 %v5380, %v5377
    %v5663 = vpack.c.b16 %v5381, %v5378
    %v5664 = vpack.c.b16 %v5382, %v5379
    %v5665 = vpack.c.b16 %v5386, %v5383
    %v5666 = vpack.c.b16 %v5387, %v5384
    %v5667 = vpack.c.b16 %v5388, %v5385
    %v5668 = vpack.c.b16 %v5392, %v5389
    %v5669 = vpack.c.b16 %v5393, %v5390
    %v5670 = vpack.c.b16 %v5394, %v5391
    %v5671 = vpack.c.b16 %v5398, %v5395
    %v5672 = vpack.c.b16 %v5399, %v5396
    %v5673 = vpack.c.b16 %v5400, %v5397
    %v5674 = vpack.c.b16 %v5404, %v5401
    %v5675 = vpack.c.b16 %v5405, %v5402
    %v5676 = vpack.c.b16 %v5406, %v5403
    %v5677 = vpack.c.b16 %v5410, %v5407
    %v5678 = vpack.c.b16 %v5411, %v5408
    %v5679 = vpack.c.b16 %v5412, %v5409
    %v5680 = vpack.c.b16 %v5416, %v5413
    %v5681 = vpack.c.b16 %v5417, %v5414
    %v5682 = vpack.c.b16 %v5418, %v5415
    %v5683 = vpack.c.b16 %v5422, %v5419
    %v5684 = vpack.c.b16 %v5423, %v5420
    %v5685 = vpack.c.b16 %v5424, %v5421
    %v5686 = vpack.c.b16 %v5428, %v5425
    %v5687 = vpack.c.b16 %v5429, %v5426
    %v5688 = vpack.c.b16 %v5430, %v5427
    %v5689 = vpack.c.b16 %v5434, %v5431
    %v5690 = vpack.c.b16 %v5435, %v5432
    %v5691 = vpack.c.b16 %v5436, %v5433
    %v5692 = vpack.c.b16 %v5440, %v5437
    %v5693 = vpack.c.b16 %v5441, %v5438
    %v5694 = vpack.c.b16 %v5442, %v5439
    %v5695 = vpack.c.b16 %v5446, %v5443
    %v5696 = vpack.c.b16 %v5447, %v5444
    %v5697 = vpack.c.b16 %v5448, %v5445
    %v5698 = vpack.c.b16 %v5452, %v5449
    %v5699 = vpack.c.b16 %v5453, %v5450
    %v5700 = vpack.c.b16 %v5454, %v5451
    %v5701 = vpack.c.b16 %v5458, %v5455
    %v5702 = vpack.c.b16 %v5459, %v5456
    %v5703 = vpack.c.b16 %v5460, %v5457
    %v5704 = vpack.c.b16 %v5464, %v5461
    %v5705 = vpack.c.b16 %v5465, %v5462
    %v5706 = vpack.c.b16 %v5466, %v5463
    %v5707 = vpack.c.b16 %v5470, %v5467
    %v5708 = vpack.c.b16 %v5471, %v5468
    %v5709 = vpack.c.b16 %v5472, %v5469
    %v5710 = vpack.c.b16 %v5476, %v5473
    %v5711 = vpack.c.b16 %v5477, %v5474
    %v5712 = vpack.c.b16 %v5478, %v5475
    %v5713 = vpack.c.b16 %v5482, %v5479
    %v5714 = vpack.c.b16 %v5483, %v5480
    %v5715 = vpack.c.b16 %v5484, %v5481
    %v5716 = vpack.c.b16 %v5488, %v5485
    %v5717 = vpack.c.b16 %v5489, %v5486
    %v5718 = vpack.c.b16 %v5490, %v5487
    %v5719 = vpack.c.b16 %v5494, %v5491
    %v5720 = vpack.c.b16 %v5495, %v5492
    %v5721 = vpack.c.b16 %v5496, %v5493
    %v5722 = vpack.c.b16 %v5500, %v5497
    %v5723 = vpack.c.b16 %v5501, %v5498
    %v5724 = vpack.c.b16 %v5502, %v5499
    %v5725 = vpack.c.b16 %v5506, %v5503
    %v5726 = vpack.c.b16 %v5507, %v5504
    %v5727 = vpack.c.b16 %v5508, %v5505
    %v5728 = vpack.c.b16 %v5512, %v5509
    %v5729 = vpack.c.b16 %v5513, %v5510
    %v5730 = vpack.c.b16 %v5514, %v5511
    %v5731 = vpack.c.b16 %v5518, %v5515
    %v5732 = vpack.c.b16 %v5519, %v5516
    %v5733 = vpack.c.b16 %v5520, %v5517
    %v5734 = vpack.c.b16 %v5524, %v5521
    %v5735 = vpack.c.b16 %v5525, %v5522
    %v5736 = vpack.c.b16 %v5526, %v5523
    %v5737 = vpack.c.b16 %v5530, %v5527
    %v5738 = vpack.c.b16 %v5531, %v5528
    %v5739 = vpack.c.b16 %v5532, %v5529
    %v5740 = vpack.c.b16 %v5536, %v5533
    %v5741 = vpack.c.b16 %v5537, %v5534
    %v5742 = vpack.c.b16 %v5538, %v5535
    %v5743 = vpack.c.b16 %v5542, %v5539
    %v5744 = vpack.c.b16 %v5543, %v5540
    %v5745 = vpack.c.b16 %v5544, %v5541
    %v5746 = vpack.c.b16 %v5548, %v5545
    %v5747 = vpack.c.b16 %v5549, %v5546
    %v5748 = vpack.c.b16 %v5550, %v5547
    %v5749 = vpack.c.b16 %v5554, %v5551
    %v5750 = vpack.c.b16 %v5555, %v5552
    %v5751 = vpack.c.b16 %v5556, %v5553
    %v5752 = vpack.c.b16 %v5560, %v5557
    %v5753 = vpack.c.b16 %v5561, %v5558
    %v5754 = vpack.c.b16 %v5562, %v5559
    %v5755 = vpack.c.b16 %v5566, %v5563
    %v5756 = vpack.c.b16 %v5567, %v5564
    %v5757 = vpack.c.b16 %v5568, %v5565
    %v5758 = vpack.c.b16 %v5572, %v5569
    %v5759 = vpack.c.b16 %v5573, %v5570
    %v5760 = vpack.c.b16 %v5574, %v5571
    %v5761 = vpack.c.b16 %v5578, %v5575
    %v5762 = vpack.c.b16 %v5579, %v5576
    %v5763 = vpack.c.b16 %v5580, %v5577
    %v5764 = vpack.c.b16 %v5584, %v5581
    %v5765 = vpack.c.b16 %v5585, %v5582
    %v5766 = vpack.c.b16 %v5586, %v5583
    %v5767 = vpack.c.b16 %v5590, %v5587
    %v5768 = vpack.c.b16 %v5591, %v5588
    %v5769 = vpack.c.b16 %v5592, %v5589
    %v5770 = vpack.c.b16 %v5596, %v5593
    %v5771 = vpack.c.b16 %v5597, %v5594
    %v5772 = vpack.c.b16 %v5598, %v5595
    %v5773 = vpack.c.b16 %v5602, %v5599
    %v5774 = vpack.c.b16 %v5603, %v5600
    %v5775 = vpack.c.b16 %v5604, %v5601
    %v5776 = vpack.c.b16 %v5608, %v5605
    %v5777 = vpack.c.b16 %v5609, %v5606
    %v5778 = vpack.c.b16 %v5610, %v5607
    %5947 = vmatprep.subr.bf16.mxu0 %v5612
    %5948 = vmatpush1.bf16.msra.mxu0 %v5611
    %5949 = vmatprep.subr.bf16.mxu0 %v5615
    %5950 = vmatpush1.bf16.msra.mxu0 %v5614
    %5951 = vmatprep.subr.bf16.mxu0 %v5618
    %5952 = vmatpush1.bf16.msra.mxu0 %v5617
    %5953 = vmatprep.subr.bf16.mxu0 %v5621
    %5954 = vmatpush1.bf16.msra.mxu0 %v5620
    %5955 = vmatprep.subr.bf16.mxu0 %v5624
    %5956 = vmatpush1.bf16.msra.mxu0 %v5623
    %5957 = vmatprep.subr.bf16.mxu0 %v5627
    %5958 = vmatpush1.bf16.msra.mxu0 %v5626
    %5959 = vmatprep.subr.bf16.mxu0 %v5630
    %5960 = vmatpush1.bf16.msra.mxu0 %v5629
    %5961 = vmatprep.subr.bf16.mxu0 %v5633
    %5962 = vmatpush1.bf16.msra.mxu0 %v5632
    %5963 = vmatprep.subr.bf16.mxu0 %v5636
    %5964 = vmatpush1.bf16.msra.mxu0 %v5635
    %5965 = vmatprep.subr.bf16.mxu0 %v5639
    %5966 = vmatpush1.bf16.msra.mxu0 %v5638
    %5967 = vmatprep.subr.bf16.mxu0 %v5642
    %5968 = vmatpush1.bf16.msra.mxu0 %v5641
    %5969 = vmatprep.subr.bf16.mxu0 %v5645
    %5970 = vmatpush1.bf16.msra.mxu0 %v5644
    %5971 = vmatprep.subr.bf16.mxu0 %v5648
    %5972 = vmatpush1.bf16.msra.mxu0 %v5647
    %5973 = vmatprep.subr.bf16.mxu0 %v5651
    %5974 = vmatpush1.bf16.msra.mxu0 %v5650
    %5975 = vmatprep.subr.bf16.mxu0 %v5654
    %5976 = vmatpush1.bf16.msra.mxu0 %v5653
    %5977 = vmatprep.subr.bf16.mxu0 %v5657
    %5978 = vmatpush1.bf16.msra.mxu0 %v5656
    %5979 = vmatprep.mubr.bf16.mxu0 %v4804
    %5980 = vmatmul.mubr.bf16.gmra.mrb[0].mxu0 %v4803
    %v5981 = vpop.f32.mrb[0].mxu0
    %v5982 = vadd.f32 %v5039, %v5981
    %v5983 = vpop.f32.mrb[0].mxu0
    %v5984 = vadd.f32 %v5043, %v5983
    %v5985 = vpop.f32.mrb[0].mxu0
    %v5986 = vadd.f32 %v5039, %v5985
    %v5987 = vpop.f32.mrb[0].mxu0
    %v5988 = vadd.f32 %v5043, %v5987
    %5989 = vdwg.mxu0
    %5990 = vmatprep.subr.bf16.mxu0 %v5660
    %5991 = vmatpush1.bf16.msra.mxu0 %v5659
    %5992 = vmatprep.subr.bf16.mxu0 %v5663
    %5993 = vmatpush1.bf16.msra.mxu0 %v5662
    %5994 = vmatprep.subr.bf16.mxu0 %v5666
    %5995 = vmatpush1.bf16.msra.mxu0 %v5665
    %5996 = vmatprep.subr.bf16.mxu0 %v5669
    %5997 = vmatpush1.bf16.msra.mxu0 %v5668
    %5998 = vmatprep.subr.bf16.mxu0 %v5672
    %5999 = vmatpush1.bf16.msra.mxu0 %v5671
    %6000 = vmatprep.subr.bf16.mxu0 %v5675
    %6001 = vmatpush1.bf16.msra.mxu0 %v5674
    %6002 = vmatprep.subr.bf16.mxu0 %v5678
    %6003 = vmatpush1.bf16.msra.mxu0 %v5677
    %6004 = vmatprep.subr.bf16.mxu0 %v5681
    %6005 = vmatpush1.bf16.msra.mxu0 %v5680
    %6006 = vmatprep.subr.bf16.mxu0 %v5684
    %6007 = vmatpush1.bf16.msra.mxu0 %v5683
    %6008 = vmatprep.subr.bf16.mxu0 %v5687
    %6009 = vmatpush1.bf16.msra.mxu0 %v5686
    %6010 = vmatprep.subr.bf16.mxu0 %v5690
    %6011 = vmatpush1.bf16.msra.mxu0 %v5689
    %6012 = vmatprep.subr.bf16.mxu0 %v5693
    %6013 = vmatpush1.bf16.msra.mxu0 %v5692
    %6014 = vmatprep.subr.bf16.mxu0 %v5696
    %6015 = vmatpush1.bf16.msra.mxu0 %v5695
    %6016 = vmatprep.subr.bf16.mxu0 %v5699
    %6017 = vmatpush1.bf16.msra.mxu0 %v5698
    %6018 = vmatprep.subr.bf16.mxu0 %v5702
    %6019 = vmatpush1.bf16.msra.mxu0 %v5701
    %6020 = vmatprep.subr.bf16.mxu0 %v5705
    %6021 = vmatpush1.bf16.msra.mxu0 %v5704
    %6022 = vmatprep.mubr.bf16.mxu0 %v4806
    %6023 = vmatmul.mubr.bf16.gmra.mrb[0].mxu0 %v4805
    %v6024 = vpop.f32.mrb[0].mxu0
    %v6025 = vadd.f32 %v5982, %v6024
    %v6026 = vpop.f32.mrb[0].mxu0
    %v6027 = vadd.f32 %v5984, %v6026
    %v6028 = vpop.f32.mrb[0].mxu0
    %v6029 = vadd.f32 %v5986, %v6028
    %v6030 = vpop.f32.mrb[0].mxu0
    %v6031 = vadd.f32 %v5988, %v6030
    %6032 = vdwg.mxu0
    %6033 = vmatprep.subr.bf16.mxu0 %v5708
    %6034 = vmatpush1.bf16.msra.mxu0 %v5707
    %6035 = vmatprep.subr.bf16.mxu0 %v5711
    %6036 = vmatpush1.bf16.msra.mxu0 %v5710
    %6037 = vmatprep.subr.bf16.mxu0 %v5714
    %6038 = vmatpush1.bf16.msra.mxu0 %v5713
    %6039 = vmatprep.subr.bf16.mxu0 %v5717
    %6040 = vmatpush1.bf16.msra.mxu0 %v5716
    %6041 = vmatprep.subr.bf16.mxu0 %v5720
    %6042 = vmatpush1.bf16.msra.mxu0 %v5719
    %6043 = vmatprep.subr.bf16.mxu0 %v5723
    %6044 = vmatpush1.bf16.msra.mxu0 %v5722
    %6045 = vmatprep.subr.bf16.mxu0 %v5726
    %6046 = vmatpush1.bf16.msra.mxu0 %v5725
    %6047 = vmatprep.subr.bf16.mxu0 %v5729
    %6048 = vmatpush1.bf16.msra.mxu0 %v5728
    %6049 = vmatprep.subr.bf16.mxu0 %v5732
    %6050 = vmatpush1.bf16.msra.mxu0 %v5731
    %6051 = vmatprep.subr.bf16.mxu0 %v5735
    %6052 = vmatpush1.bf16.msra.mxu0 %v5734
    %6053 = vmatprep.subr.bf16.mxu0 %v5738
    %6054 = vmatpush1.bf16.msra.mxu0 %v5737
    %6055 = vmatprep.subr.bf16.mxu0 %v5741
    %6056 = vmatpush1.bf16.msra.mxu0 %v5740
    %6057 = vmatprep.subr.bf16.mxu0 %v5744
    %6058 = vmatpush1.bf16.msra.mxu0 %v5743
    %6059 = vmatprep.subr.bf16.mxu0 %v5747
    %6060 = vmatpush1.bf16.msra.mxu0 %v5746
    %6061 = vmatprep.subr.bf16.mxu0 %v5750
    %6062 = vmatpush1.bf16.msra.mxu0 %v5749
    %6063 = vmatprep.subr.bf16.mxu0 %v5753
    %6064 = vmatpush1.bf16.msra.mxu0 %v5752
    %6065 = vmatprep.mubr.bf16.mxu0 %v4808
    %6066 = vmatmul.mubr.bf16.gmra.mrb[0].mxu0 %v4807
    %v6067 = vpop.f32.mrb[0].mxu0
    %v6068 = vadd.f32 %v6025, %v6067
    %v6069 = vpop.f32.mrb[0].mxu0
    %v6070 = vadd.f32 %v6027, %v6069
    %v6071 = vpop.f32.mrb[0].mxu0
    %v6072 = vadd.f32 %v6029, %v6071
    %v6073 = vpop.f32.mrb[0].mxu0
    %v6074 = vadd.f32 %v6031, %v6073
    %6075 = vdwg.mxu0
    %6076 = vmatprep.subr.bf16.mxu0 %v5756
    %6077 = vmatpush1.bf16.msra.mxu0 %v5755
    %6078 = vmatprep.subr.bf16.mxu0 %v5759
    %6079 = vmatpush1.bf16.msra.mxu0 %v5758
    %6080 = vmatprep.subr.bf16.mxu0 %v5762
    %6081 = vmatpush1.bf16.msra.mxu0 %v5761
    %6082 = vmatprep.subr.bf16.mxu0 %v5765
    %6083 = vmatpush1.bf16.msra.mxu0 %v5764
    %6084 = vmatprep.subr.bf16.mxu0 %v5768
    %6085 = vmatpush1.bf16.msra.mxu0 %v5767
    %6086 = vmatprep.subr.bf16.mxu0 %v5771
    %6087 = vmatpush1.bf16.msra.mxu0 %v5770
    %6088 = vmatprep.subr.bf16.mxu0 %v5774
    %6089 = vmatpush1.bf16.msra.mxu0 %v5773
    %6090 = vmatprep.subr.bf16.mxu0 %v5777
    %6091 = vmatpush1.bf16.msra.mxu0 %v5776
    %6092 = vmatprep.subr.bf16.mxu0 0
    %6093 = vmatpush1.bf16.msra.mxu0 0
    %6094 = vmatprep.subr.bf16.mxu0 0
    %6095 = vmatpush1.bf16.msra.mxu0 0
    %6096 = vmatprep.subr.bf16.mxu0 0
    %6097 = vmatpush1.bf16.msra.mxu0 0
    %6098 = vmatprep.subr.bf16.mxu0 0
    %6099 = vmatpush1.bf16.msra.mxu0 0
    %6100 = vmatprep.subr.bf16.mxu0 0
    %6101 = vmatpush1.bf16.msra.mxu0 0
    %6102 = vmatprep.subr.bf16.mxu0 0
    %6103 = vmatpush1.bf16.msra.mxu0 0
    %6104 = vmatprep.subr.bf16.mxu0 0
    %6105 = vmatpush1.bf16.msra.mxu0 0
    %6106 = vmatprep.subr.bf16.mxu0 0
    %6107 = vmatpush1.bf16.msra.mxu0 0
    %6108 = vmatprep.mubr.bf16.mxu0 0
    %6109 = vmatmul.mubr.bf16.gmra.mrb[0].mxu0 %v4809
    %v6110 = vpop.f32.mrb[0].mxu0
    %v6111 = vadd.f32 %v6068, %v6110
    %v6112 = vpop.f32.mrb[0].mxu0
    %v6113 = vadd.f32 %v6070, %v6112
    %v6114 = vpop.f32.mrb[0].mxu0
    %v6115 = vadd.f32 %v6072, %v6114
    %v6116 = vpop.f32.mrb[0].mxu0
    %v6117 = vadd.f32 %v6074, %v6116
    %6118 = vdwg.mxu0
    %6119 = vmatprep.subr.bf16.mxu0 0
    %6120 = vmatpush1.bf16.msra.mxu0 %v5613
    %6121 = vmatprep.subr.bf16.mxu0 0
    %6122 = vmatpush1.bf16.msra.mxu0 %v5616
    %6123 = vmatprep.subr.bf16.mxu0 0
    %6124 = vmatpush1.bf16.msra.mxu0 %v5619
    %6125 = vmatprep.subr.bf16.mxu0 0
    %6126 = vmatpush1.bf16.msra.mxu0 %v5622
    %6127 = vmatprep.subr.bf16.mxu0 0
    %6128 = vmatpush1.bf16.msra.mxu0 %v5625
    %6129 = vmatprep.subr.bf16.mxu0 0
    %6130 = vmatpush1.bf16.msra.mxu0 %v5628
    %6131 = vmatprep.subr.bf16.mxu0 0
    %6132 = vmatpush1.bf16.msra.mxu0 %v5631
    %6133 = vmatprep.subr.bf16.mxu0 0
    %6134 = vmatpush1.bf16.msra.mxu0 %v5634
    %6135 = vmatprep.subr.bf16.mxu0 0
    %6136 = vmatpush1.bf16.msra.mxu0 %v5637
    %6137 = vmatprep.subr.bf16.mxu0 0
    %6138 = vmatpush1.bf16.msra.mxu0 %v5640
    %6139 = vmatprep.subr.bf16.mxu0 0
    %6140 = vmatpush1.bf16.msra.mxu0 %v5643
    %6141 = vmatprep.subr.bf16.mxu0 0
    %6142 = vmatpush1.bf16.msra.mxu0 %v5646
    %6143 = vmatprep.subr.bf16.mxu0 0
    %6144 = vmatpush1.bf16.msra.mxu0 %v5649
    %6145 = vmatprep.subr.bf16.mxu0 0
    %6146 = vmatpush1.bf16.msra.mxu0 %v5652
    %6147 = vmatprep.subr.bf16.mxu0 0
    %6148 = vmatpush1.bf16.msra.mxu0 %v5655
    %6149 = vmatprep.subr.bf16.mxu0 0
    %6150 = vmatpush1.bf16.msra.mxu0 %v5658
    %6151 = vmatprep.mubr.bf16.mxu0 %v4804
    %6152 = vmatmul.mubr.bf16.gmra.mrb[0].mxu0 %v4803
    %v6153 = vpop.f32.mrb[0].mxu0
    %v6154 = vadd.f32 %v5047, %v6153
    %v6155 = vpop.f32.mrb[0].mxu0
    %v6156 = vpop.f32.mrb[0].mxu0
    %v6157 = vadd.f32 %v5047, %v6156
    %v6158 = vpop.f32.mrb[0].mxu0
    %6159 = vdwg.mxu0
    %6160 = vmatprep.subr.bf16.mxu0 0
    %6161 = vmatpush1.bf16.msra.mxu0 %v5661
    %6162 = vmatprep.subr.bf16.mxu0 0
    %6163 = vmatpush1.bf16.msra.mxu0 %v5664
    %6164 = vmatprep.subr.bf16.mxu0 0
    %6165 = vmatpush1.bf16.msra.mxu0 %v5667
    %6166 = vmatprep.subr.bf16.mxu0 0
    %6167 = vmatpush1.bf16.msra.mxu0 %v5670
    %6168 = vmatprep.subr.bf16.mxu0 0
    %6169 = vmatpush1.bf16.msra.mxu0 %v5673
    %6170 = vmatprep.subr.bf16.mxu0 0
    %6171 = vmatpush1.bf16.msra.mxu0 %v5676
    %6172 = vmatprep.subr.bf16.mxu0 0
    %6173 = vmatpush1.bf16.msra.mxu0 %v5679
    %6174 = vmatprep.subr.bf16.mxu0 0
    %6175 = vmatpush1.bf16.msra.mxu0 %v5682
    %6176 = vmatprep.subr.bf16.mxu0 0
    %6177 = vmatpush1.bf16.msra.mxu0 %v5685
    %6178 = vmatprep.subr.bf16.mxu0 0
    %6179 = vmatpush1.bf16.msra.mxu0 %v5688
    %6180 = vmatprep.subr.bf16.mxu0 0
    %6181 = vmatpush1.bf16.msra.mxu0 %v5691
    %6182 = vmatprep.subr.bf16.mxu0 0
    %6183 = vmatpush1.bf16.msra.mxu0 %v5694
    %6184 = vmatprep.subr.bf16.mxu0 0
    %6185 = vmatpush1.bf16.msra.mxu0 %v5697
    %6186 = vmatprep.subr.bf16.mxu0 0
    %6187 = vmatpush1.bf16.msra.mxu0 %v5700
    %6188 = vmatprep.subr.bf16.mxu0 0
    %6189 = vmatpush1.bf16.msra.mxu0 %v5703
    %6190 = vmatprep.subr.bf16.mxu0 0
    %6191 = vmatpush1.bf16.msra.mxu0 %v5706
    %6192 = vmatprep.mubr.bf16.mxu0 %v4806
    %6193 = vmatmul.mubr.bf16.gmra.mrb[0].mxu0 %v4805
    %v6194 = vpop.f32.mrb[0].mxu0
    %v6195 = vadd.f32 %v6154, %v6194
    %v6196 = vpop.f32.mrb[0].mxu0
    %v6197 = vpop.f32.mrb[0].mxu0
    %v6198 = vadd.f32 %v6157, %v6197
    %v6199 = vpop.f32.mrb[0].mxu0
    %6200 = vdwg.mxu0
    %6201 = vmatprep.subr.bf16.mxu0 0
    %6202 = vmatpush1.bf16.msra.mxu0 %v5709
    %6203 = vmatprep.subr.bf16.mxu0 0
    %6204 = vmatpush1.bf16.msra.mxu0 %v5712
    %6205 = vmatprep.subr.bf16.mxu0 0
    %6206 = vmatpush1.bf16.msra.mxu0 %v5715
    %6207 = vmatprep.subr.bf16.mxu0 0
    %6208 = vmatpush1.bf16.msra.mxu0 %v5718
    %6209 = vmatprep.subr.bf16.mxu0 0
    %6210 = vmatpush1.bf16.msra.mxu0 %v5721
    %6211 = vmatprep.subr.bf16.mxu0 0
    %6212 = vmatpush1.bf16.msra.mxu0 %v5724
    %6213 = vmatprep.subr.bf16.mxu0 0
    %6214 = vmatpush1.bf16.msra.mxu0 %v5727
    %6215 = vmatprep.subr.bf16.mxu0 0
    %6216 = vmatpush1.bf16.msra.mxu0 %v5730
    %6217 = vmatprep.subr.bf16.mxu0 0
    %6218 = vmatpush1.bf16.msra.mxu0 %v5733
    %6219 = vmatprep.subr.bf16.mxu0 0
    %6220 = vmatpush1.bf16.msra.mxu0 %v5736
    %6221 = vmatprep.subr.bf16.mxu0 0
    %6222 = vmatpush1.bf16.msra.mxu0 %v5739
    %6223 = vmatprep.subr.bf16.mxu0 0
    %6224 = vmatpush1.bf16.msra.mxu0 %v5742
    %6225 = vmatprep.subr.bf16.mxu0 0
    %6226 = vmatpush1.bf16.msra.mxu0 %v5745
    %6227 = vmatprep.subr.bf16.mxu0 0
    %6228 = vmatpush1.bf16.msra.mxu0 %v5748
    %6229 = vmatprep.subr.bf16.mxu0 0
    %6230 = vmatpush1.bf16.msra.mxu0 %v5751
    %6231 = vmatprep.subr.bf16.mxu0 0
    %6232 = vmatpush1.bf16.msra.mxu0 %v5754
    %6233 = vmatprep.mubr.bf16.mxu0 %v4808
    %6234 = vmatmul.mubr.bf16.gmra.mrb[0].mxu0 %v4807
    %v6235 = vpop.f32.mrb[0].mxu0
    %v6236 = vadd.f32 %v6195, %v6235
    %v6237 = vpop.f32.mrb[0].mxu0
    %v6238 = vpop.f32.mrb[0].mxu0
    %v6239 = vadd.f32 %v6198, %v6238
    %v6240 = vpop.f32.mrb[0].mxu0
    %6241 = vdwg.mxu0
    %6242 = vmatprep.subr.bf16.mxu0 0
    %6243 = vmatpush1.bf16.msra.mxu0 %v5757
    %6244 = vmatprep.subr.bf16.mxu0 0
    %6245 = vmatpush1.bf16.msra.mxu0 %v5760
    %6246 = vmatprep.subr.bf16.mxu0 0
    %6247 = vmatpush1.bf16.msra.mxu0 %v5763
    %6248 = vmatprep.subr.bf16.mxu0 0
    %6249 = vmatpush1.bf16.msra.mxu0 %v5766
    %6250 = vmatprep.subr.bf16.mxu0 0
    %6251 = vmatpush1.bf16.msra.mxu0 %v5769
    %6252 = vmatprep.subr.bf16.mxu0 0
    %6253 = vmatpush1.bf16.msra.mxu0 %v5772
    %6254 = vmatprep.subr.bf16.mxu0 0
    %6255 = vmatpush1.bf16.msra.mxu0 %v5775
    %6256 = vmatprep.subr.bf16.mxu0 0
    %6257 = vmatpush1.bf16.msra.mxu0 %v5778
    %6258 = vmatprep.subr.bf16.mxu0 0
    %6259 = vmatpush1.bf16.msra.mxu0 0
    %6260 = vmatprep.subr.bf16.mxu0 0
    %6261 = vmatpush1.bf16.msra.mxu0 0
    %6262 = vmatprep.subr.bf16.mxu0 0
    %6263 = vmatpush1.bf16.msra.mxu0 0
    %6264 = vmatprep.subr.bf16.mxu0 0
    %6265 = vmatpush1.bf16.msra.mxu0 0
    %6266 = vmatprep.subr.bf16.mxu0 0
    %6267 = vmatpush1.bf16.msra.mxu0 0
    %6268 = vmatprep.subr.bf16.mxu0 0
    %6269 = vmatpush1.bf16.msra.mxu0 0
    %6270 = vmatprep.subr.bf16.mxu0 0
    %6271 = vmatpush1.bf16.msra.mxu0 0
    %6272 = vmatprep.subr.bf16.mxu0 0
    %6273 = vmatpush1.bf16.msra.mxu0 0
    %6274 = vmatprep.mubr.bf16.mxu0 0
    %6275 = vmatmul.mubr.bf16.gmra.mrb[0].mxu0 %v4809
    %v6276 = vpop.f32.mrb[0].mxu0
    %v6277 = vadd.f32 %v6236, %v6276
    %v6278 = vpop.f32.mrb[0].mxu0
    %v6279 = vpop.f32.mrb[0].mxu0
    %v6280 = vadd.f32 %v6239, %v6279
    %v6281 = vpop.f32.mrb[0].mxu0
    %6282 = vdwg.mxu0
    %v6283 = vmax.f32 %v6111, 0.0
    %v6284 = vmax.f32 %v6113, 0.0
    %v6285 = vmax.f32 %v6277, 0.0
    %v6286 = vmax.f32 %v6115, 0.0
    %v6287 = vmax.f32 %v6117, 0.0
    %v6288 = vmax.f32 %v6280, 0.0
    %v6289 = vpack.c.bf16 %v6286, %v6283
    %v6290 = vpack.c.bf16 %v6287, %v6284
    %v6291 = vpack.c.bf16 %v6288, %v6285
    %v6292 = vld [vmem:[#allocation12] sm:$0xf]
    %v6293 = vld [vmem:[#allocation12 + $0x4] sm:$0xf]
    %v6294 = vld [vmem:[#allocation12 + $0x8] sm:$0xf]
    %v6295 = vld [vmem:[#allocation12 + $0xc] sm:$0xf]
    %v6296 = vld [vmem:[#allocation12 + $0x10] sm:$0xf]
    %v6297 = vld [vmem:[#allocation12 + $0x14] sm:$0xf]
    %v6298 = vld [vmem:[#allocation12 + $0x18] sm:$0xf]
    %v6299 = vld [vmem:[#allocation12 + $0x1c] sm:$0xf]
    %v6300 = vld [vmem:[#allocation12 + $0x20] sm:$0xf]
    %v6301 = vld [vmem:[#allocation12 + $0x24] sm:$0xf]
    %v6302 = vld [vmem:[#allocation12 + $0x28] sm:$0xf]
    %v6303 = vld [vmem:[#allocation12 + $0x2c] sm:$0xf]
    %v6304 = vld [vmem:[#allocation12 + $0x30] sm:$0xf]
    %v6305 = vld [vmem:[#allocation12 + $0x34] sm:$0xf]
    %v6306 = vld [vmem:[#allocation12 + $0x38] sm:$0xf]
    %v6307 = vld [vmem:[#allocation12 + $0x3c] sm:$0xf]
    %v6308 = vld [vmem:[#allocation12 + $0x40] sm:$0xf]
    %v6309 = vld [vmem:[#allocation12 + $0x44] sm:$0xf]
    %v6310 = vld [vmem:[#allocation12 + $0x48] sm:$0xf]
    %v6311 = vld [vmem:[#allocation12 + $0x4c] sm:$0xf]
    %v6312 = vld [vmem:[#allocation12 + $0x50] sm:$0xf]
    %v6313 = vld [vmem:[#allocation12 + $0x54] sm:$0xf]
    %v6314 = vld [vmem:[#allocation12 + $0x58] sm:$0xf]
    %v6315 = vld [vmem:[#allocation12 + $0x5c] sm:$0xf]
    %v6316 = vld [vmem:[#allocation12 + $0x60] sm:$0xf]
    %v6317 = vld [vmem:[#allocation12 + $0x64] sm:$0xf]
    %v6318 = vld [vmem:[#allocation12 + $0x68] sm:$0xf]
    %v6319 = vld [vmem:[#allocation12 + $0x6c] sm:$0xf]
    %v6320 = vld [vmem:[#allocation12 + $0x70] sm:$0xf]
    %v6321 = vld [vmem:[#allocation12 + $0x74] sm:$0xf]
    %v6322 = vld [vmem:[#allocation12 + $0x78] sm:$0xf]
    %v6323 = vld [vmem:[#allocation12 + $0x7c] sm:$0xf]
    %v6324 = vld [vmem:[#allocation12 + $0x80] sm:$0xf]
    %v6325 = vld [vmem:[#allocation12 + $0x84] sm:$0xf]
    %v6326 = vld [vmem:[#allocation12 + $0x88] sm:$0xf]
    %v6327 = vld [vmem:[#allocation12 + $0x8c] sm:$0xf]
    %v6328 = vld [vmem:[#allocation12 + $0x90] sm:$0xf]
    %v6329 = vld [vmem:[#allocation12 + $0x94] sm:$0xf]
    %v6330 = vld [vmem:[#allocation12 + $0x98] sm:$0xf]
    %v6331 = vld [vmem:[#allocation12 + $0x9c] sm:$0xf]
    %v6332 = vld [vmem:[#allocation12 + $0xa0] sm:$0xf]
    %v6333 = vld [vmem:[#allocation12 + $0xa4] sm:$0xf]
    %v6334 = vld [vmem:[#allocation12 + $0xa8] sm:$0xf]
    %v6335 = vld [vmem:[#allocation12 + $0xac] sm:$0xf]
    %v6336 = vld [vmem:[#allocation12 + $0xb0] sm:$0xf]
    %v6337 = vld [vmem:[#allocation12 + $0xb4] sm:$0xf]
    %v6338 = vld [vmem:[#allocation12 + $0xb8] sm:$0xf]
    %v6339 = vld [vmem:[#allocation12 + $0xbc] sm:$0xf]
    %v6340 = vld [vmem:[#allocation13] sm:$0x1]
    %v6342 = vlaneseq
    %v6343 = vshrl.u32 %v6342, 7
    %v6344 = vsub.s32 0, %v6343
    %v6345 = vrot.slane %v6340, %v6344
    %v6395 = vunpack.c.l.b16 %v6292
    %v6396 = vunpack.c.l.b16 %v6293
    %v6397 = vunpack.c.l.b16 %v6294
    %v6398 = vunpack.c.l.b16 %v6295
    %v6399 = vunpack.c.l.b16 %v6296
    %v6400 = vunpack.c.l.b16 %v6297
    %v6401 = vunpack.c.l.b16 %v6298
    %v6402 = vunpack.c.l.b16 %v6299
    %v6403 = vunpack.c.l.b16 %v6300
    %v6404 = vunpack.c.l.b16 %v6301
    %v6405 = vunpack.c.l.b16 %v6302
    %v6406 = vunpack.c.l.b16 %v6303
    %v6407 = vunpack.c.l.b16 %v6304
    %v6408 = vunpack.c.l.b16 %v6305
    %v6409 = vunpack.c.l.b16 %v6306
    %v6410 = vunpack.c.l.b16 %v6307
    %v6411 = vunpack.c.l.b16 %v6308
    %v6412 = vunpack.c.l.b16 %v6309
    %v6413 = vunpack.c.l.b16 %v6310
    %v6414 = vunpack.c.l.b16 %v6311
    %v6415 = vunpack.c.l.b16 %v6312
    %v6416 = vunpack.c.l.b16 %v6313
    %v6417 = vunpack.c.l.b16 %v6314
    %v6418 = vunpack.c.l.b16 %v6315
    %v6419 = vunpack.c.l.b16 %v6316
    %v6420 = vunpack.c.l.b16 %v6317
    %v6421 = vunpack.c.l.b16 %v6318
    %v6422 = vunpack.c.l.b16 %v6319
    %v6423 = vunpack.c.l.b16 %v6320
    %v6424 = vunpack.c.l.b16 %v6321
    %v6425 = vunpack.c.l.b16 %v6322
    %v6426 = vunpack.c.l.b16 %v6323
    %v6427 = vunpack.c.l.b16 %v6324
    %v6428 = vunpack.c.l.b16 %v6325
    %v6429 = vunpack.c.l.b16 %v6326
    %v6430 = vunpack.c.l.b16 %v6327
    %v6431 = vunpack.c.l.b16 %v6328
    %v6432 = vunpack.c.l.b16 %v6329
    %v6433 = vunpack.c.l.b16 %v6330
    %v6434 = vunpack.c.l.b16 %v6331
    %v6435 = vunpack.c.l.b16 %v6332
    %v6436 = vunpack.c.l.b16 %v6333
    %v6437 = vunpack.c.l.b16 %v6334
    %v6438 = vunpack.c.l.b16 %v6335
    %v6439 = vunpack.c.l.b16 %v6336
    %v6440 = vunpack.c.l.b16 %v6337
    %v6441 = vunpack.c.l.b16 %v6338
    %v6442 = vunpack.c.l.b16 %v6339
    %v6443 = vpack.c.b16 %v6396, %v6395
    %v6444 = vpack.c.b16 %v6398, %v6397
    %v6445 = vpack.c.b16 %v6400, %v6399
    %v6446 = vpack.c.b16 %v6402, %v6401
    %v6447 = vpack.c.b16 %v6404, %v6403
    %v6448 = vpack.c.b16 %v6406, %v6405
    %v6449 = vpack.c.b16 %v6408, %v6407
    %v6450 = vpack.c.b16 %v6410, %v6409
    %v6451 = vpack.c.b16 %v6412, %v6411
    %v6452 = vpack.c.b16 %v6414, %v6413
    %v6453 = vpack.c.b16 %v6416, %v6415
    %v6454 = vpack.c.b16 %v6418, %v6417
    %v6455 = vpack.c.b16 %v6420, %v6419
    %v6456 = vpack.c.b16 %v6422, %v6421
    %v6457 = vpack.c.b16 %v6424, %v6423
    %v6458 = vpack.c.b16 %v6426, %v6425
    %v6459 = vpack.c.b16 %v6428, %v6427
    %v6460 = vpack.c.b16 %v6430, %v6429
    %v6461 = vpack.c.b16 %v6432, %v6431
    %v6462 = vpack.c.b16 %v6434, %v6433
    %v6463 = vpack.c.b16 %v6436, %v6435
    %v6464 = vpack.c.b16 %v6438, %v6437
    %v6465 = vpack.c.b16 %v6440, %v6439
    %v6466 = vpack.c.b16 %v6442, %v6441
    %6491 = vmatprep.subr.bf16.mxu0 0
    %6492 = vmatpush1.bf16.msra.mxu0 %v6443
    %6493 = vmatprep.subr.bf16.mxu0 0
    %6494 = vmatpush1.bf16.msra.mxu0 %v6444
    %6495 = vmatprep.subr.bf16.mxu0 0
    %6496 = vmatpush1.bf16.msra.mxu0 %v6445
    %6497 = vmatprep.subr.bf16.mxu0 0
    %6498 = vmatpush1.bf16.msra.mxu0 %v6446
    %6499 = vmatprep.subr.bf16.mxu0 0
    %6500 = vmatpush1.bf16.msra.mxu0 %v6447
    %6501 = vmatprep.subr.bf16.mxu0 0
    %6502 = vmatpush1.bf16.msra.mxu0 %v6448
    %6503 = vmatprep.subr.bf16.mxu0 0
    %6504 = vmatpush1.bf16.msra.mxu0 %v6449
    %6505 = vmatprep.subr.bf16.mxu0 0
    %6506 = vmatpush1.bf16.msra.mxu0 %v6450
    %6507 = vmatprep.subr.bf16.mxu0 0
    %6508 = vmatpush1.bf16.msra.mxu0 %v6451
    %6509 = vmatprep.subr.bf16.mxu0 0
    %6510 = vmatpush1.bf16.msra.mxu0 %v6452
    %6511 = vmatprep.subr.bf16.mxu0 0
    %6512 = vmatpush1.bf16.msra.mxu0 %v6453
    %6513 = vmatprep.subr.bf16.mxu0 0
    %6514 = vmatpush1.bf16.msra.mxu0 %v6454
    %6515 = vmatprep.subr.bf16.mxu0 0
    %6516 = vmatpush1.bf16.msra.mxu0 %v6455
    %6517 = vmatprep.subr.bf16.mxu0 0
    %6518 = vmatpush1.bf16.msra.mxu0 %v6456
    %6519 = vmatprep.subr.bf16.mxu0 0
    %6520 = vmatpush1.bf16.msra.mxu0 %v6457
    %6521 = vmatprep.subr.bf16.mxu0 0
    %6522 = vmatpush1.bf16.msra.mxu0 %v6458
    %6523 = vmatprep.mubr.bf16.mxu0 %v6290
    %6524 = vmatmul.mubr.bf16.gmra.mrb[0].mxu0 %v6289
    %v6525 = vpop.f32.mrb[0].mxu0
    %v6526 = vadd.f32 %v6345, %v6525
    %v6527 = vpop.f32.mrb[0].mxu0
    %v6528 = vpop.f32.mrb[0].mxu0
    %v6529 = vadd.f32 %v6345, %v6528
    %v6530 = vpop.f32.mrb[0].mxu0
    %6531 = vdwg.mxu0
    %6532 = vmatprep.subr.bf16.mxu0 0
    %6533 = vmatpush1.bf16.msra.mxu0 %v6459
    %6534 = vmatprep.subr.bf16.mxu0 0
    %6535 = vmatpush1.bf16.msra.mxu0 %v6460
    %6536 = vmatprep.subr.bf16.mxu0 0
    %6537 = vmatpush1.bf16.msra.mxu0 %v6461
    %6538 = vmatprep.subr.bf16.mxu0 0
    %6539 = vmatpush1.bf16.msra.mxu0 %v6462
    %6540 = vmatprep.subr.bf16.mxu0 0
    %6541 = vmatpush1.bf16.msra.mxu0 %v6463
    %6542 = vmatprep.subr.bf16.mxu0 0
    %6543 = vmatpush1.bf16.msra.mxu0 %v6464
    %6544 = vmatprep.subr.bf16.mxu0 0
    %6545 = vmatpush1.bf16.msra.mxu0 %v6465
    %6546 = vmatprep.subr.bf16.mxu0 0
    %6547 = vmatpush1.bf16.msra.mxu0 %v6466
    %6548 = vmatprep.subr.bf16.mxu0 0
    %6549 = vmatpush1.bf16.msra.mxu0 0
    %6550 = vmatprep.subr.bf16.mxu0 0
    %6551 = vmatpush1.bf16.msra.mxu0 0
    %6552 = vmatprep.subr.bf16.mxu0 0
    %6553 = vmatpush1.bf16.msra.mxu0 0
    %6554 = vmatprep.subr.bf16.mxu0 0
    %6555 = vmatpush1.bf16.msra.mxu0 0
    %6556 = vmatprep.subr.bf16.mxu0 0
    %6557 = vmatpush1.bf16.msra.mxu0 0
    %6558 = vmatprep.subr.bf16.mxu0 0
    %6559 = vmatpush1.bf16.msra.mxu0 0
    %6560 = vmatprep.subr.bf16.mxu0 0
    %6561 = vmatpush1.bf16.msra.mxu0 0
    %6562 = vmatprep.subr.bf16.mxu0 0
    %6563 = vmatpush1.bf16.msra.mxu0 0
    %6564 = vmatprep.mubr.bf16.mxu0 0
    %6565 = vmatmul.mubr.bf16.gmra.mrb[0].mxu0 %v6291
    %v6566 = vpop.f32.mrb[0].mxu0
    %v6567 = vadd.f32 %v6526, %v6566
    %v6568 = vpop.f32.mrb[0].mxu0
    %v6569 = vpop.f32.mrb[0].mxu0
    %v6570 = vadd.f32 %v6529, %v6569
    %v6571 = vpop.f32.mrb[0].mxu0
    %6572 = vdwg.mxu0
    %v6573 = vmax.f32 %v6567, 0.0
    %v6574 = vmax.f32 %v6570, 0.0
    %6575 = vst [vmem:[%s9] sm:$0xff] %v6573
    %6576 = vst [vmem:[%s9 + $0x8] sm:$0xff] %v6574
    // Predicated region
    $region70: #{rubiks_forward.1} parent=1 // pred_check
      _
    $region71: #{rubiks_forward.1} parent=1 // pred_check_branch
      %6578 = sbr.rel (0) target = $region73
    $region72: #{rubiks_forward.1} parent=1 // pred_region
      _
    $region73: #{rubiks_forward.1} parent=1 // pred_fallthru
      _
    // Predicated region
    $region74: #{rubiks_forward.1} parent=1 // pred_check
      _
    $region75: #{rubiks_forward.1} parent=1 // pred_check_branch
      %6580 = sbr.rel (0) target = $region77
    $region76: #{rubiks_forward.1} parent=1 // pred_region
      _
    $region77: #{rubiks_forward.1} parent=1 // pred_fallthru
      _
    %6581 = vsyncpa [#allocation3], 1
    %6582 = vsyncpa [#allocation5], 1
    %6583 = vsyncpa [#allocation8], 1
    %6584 = vsyncpa [#allocation11], 1
    %6585 = vsyncpa [#allocation14], 1

</llo_original>
